<compile_context>
chip_gen: v5e
topology: v5e:2x2
jax: 0.10.0
libtpu: 0.0.40
codegen_flags: <defaults>
</compile_context>

<pallas_src>
import math
import functools

import jax
import jax.numpy as jnp
from jax.experimental import pallas as pl
from jax.experimental.pallas import tpu as pltpu


_N_STATS = 6          # [sum(diff^2), sum(xn^2), sparsity_sum, preact_sum, l0_sum, l1_sum]
_STATS_LANES = 128    # stats packed into lanes 0.._N_STATS-1 of an (8,128) slab


def _sae_kernel(c, b_valid,
                x_ref, w_enc_ref, w_dec_ref, b_enc_ref, b_dec_ref,
                thr_ref, wdec_sq_ref,
                recon_ref, acts_ref, stats_ref,
                encin_ref, sp_acc, pa_acc, l0_acc, l1_acc):
    i = pl.program_id(0)          # batch tile (parallel)
    j = pl.program_id(1)          # d_hidden tile (arbitrary / reduction for recon)
    nj = pl.num_programs(1)
    tb, d_mlp = x_ref.shape

    # rows of this batch tile that correspond to real (unpadded) samples
    row_ids = i * tb + jax.lax.broadcasted_iota(jnp.int32, (tb, 1), 0)
    valid = row_ids < b_valid                                   # (tb, 1) bool

    # ---- per-batch-tile init (first hidden tile) ----
    @pl.when(j == 0)
    def _init():
        x = x_ref[...].astype(jnp.float32)
        mean = jnp.sum(x, axis=1, keepdims=True) / d_mlp
        xc = x - mean
        var = jnp.sum(xc * xc, axis=1, keepdims=True) / (d_mlp - 1)   # torch std: ddof=1
        xn = xc / (jnp.sqrt(var) + 1e-5)
        encin_ref[...] = (xn - b_dec_ref[...]).astype(encin_ref.dtype)  # bf16 MXU input
        recon_ref[...] = jnp.zeros_like(recon_ref)                      # acc in output block
        sp_acc[...] = jnp.zeros_like(sp_acc)
        pa_acc[...] = jnp.zeros_like(pa_acc)
        l0_acc[...] = jnp.zeros_like(l0_acc)
        l1_acc[...] = jnp.zeros_like(l1_acc)

    # ---- encoder tile: pre_acts = b_enc + (xn - b_dec) @ W_enc[:, j] ----
    pre = jnp.dot(encin_ref[...], w_enc_ref[...],
                  preferred_element_type=jnp.float32) + b_enc_ref[...]   # (tb, th) f32
    thr = thr_ref[...]                                                   # (1, th), exp precomputed
    keep = (pre > thr) & valid                                           # JumpReLU & row mask fused
    acts = jnp.where(keep, pre, 0.0)                                     # f32, zero on padded rows
    acts_bf = acts.astype(acts_ref.dtype)                                # bf16 store + decoder input
    acts_ref[...] = acts_bf

    # ---- decoder partial: recon += acts @ W_dec[j, :]  (f32 accumulation in output block) ----
    recon_ref[...] += jnp.dot(acts_bf, w_dec_ref[...],
                              preferred_element_type=jnp.float32)

    # ---- loss partials: accumulate (1, th) lane vectors (sublane reduce only) ----
    wsq = wdec_sq_ref[...]                                               # (1, th) = ||W_dec_row||^2
    sp_acc[...] += jnp.sum(jnp.tanh(c * acts * wsq), axis=0, keepdims=True)  # acts >= 0 so |acts| == acts
    pa_acc[...] += jnp.sum(jnp.where(valid, jnp.maximum(thr - pre, 0.0), 0.0),
                           axis=0, keepdims=True) * wsq
    l0_acc[...] += jnp.sum(keep.astype(jnp.float32), axis=0, keepdims=True)
    l1_acc[...] += jnp.sum(acts, axis=0, keepdims=True)

    # ---- per-batch-tile finalize (last hidden tile) ----
    @pl.when(j == nj - 1)
    def _finalize():
        recon = recon_ref[...] + b_dec_ref[...]
        recon_ref[...] = recon
        # recompute normalization from the still-resident x tile (xn scratch dropped)
        x = x_ref[...].astype(jnp.float32)
        mean = jnp.sum(x, axis=1, keepdims=True) / d_mlp
        xc = x - mean
        var = jnp.sum(xc * xc, axis=1, keepdims=True) / (d_mlp - 1)
        xn = xc / (jnp.sqrt(var) + 1e-5)
        vf = valid.astype(jnp.float32)
        diff = (recon - xn) * vf
        sum_diff_sq = jnp.sum(diff * diff)
        xnm = xn * vf
        sum_xn_sq = jnp.sum(xnm * xnm)

        lane = jax.lax.broadcasted_iota(jnp.int32, (8, _STATS_LANES), 1)
        vals = (sum_diff_sq, sum_xn_sq,
                jnp.sum(sp_acc[...]), jnp.sum(pa_acc[...]),
                jnp.sum(l0_acc[...]), jnp.sum(l1_acc[...]))
        row = jnp.zeros((8, _STATS_LANES), jnp.float32)
        for k, v in enumerate(vals):
            row = jnp.where(lane == k, v, row)
        stats_ref[0] = row
    # TODO(synk): feature_activation_count / total_samples_seen buffer updates are
    # stateful training-side statistics (registered buffers), not returned values.


def _round_up(a, m):
    return ((a + m - 1) // m) * m


def _device_defaults():
    """Generation-aware tiling / VMEM defaults (v5e / v6e / v7x)."""
    kind = ""
    try:
        kind = jax.devices()[0].device_kind.lower()
    except Exception:
        pass
    mib = 1024 * 1024
    if "v5 lite" in kind or "v5e" in kind or "v5lite" in kind:
        # v5e ridge ~240 FLOP/B: tb=256 is already at/near compute bound.
        return dict(tb_max=256, th_max=1024, vmem_limit_bytes=100 * mib, min_batch_tiles=1)
    if "v6" in kind or "trillium" in kind:
        # 128 MiB VMEM: spend it on a larger batch tile (weight-streaming roofline).
        return dict(tb_max=512, th_max=2048, vmem_limit_bytes=100 * mib, min_batch_tiles=1)
    if "v7" in kind:
        # 64 MiB VMEM per TC: smaller hidden tile, leave compiler headroom,
        # make sure both TensorCores get a batch tile.
        return dict(tb_max=512, th_max=1024, vmem_limit_bytes=48 * mib, min_batch_tiles=2)
    # unknown generation / interpret: conservative but correct everywhere.
    return dict(tb_max=256, th_max=1024, vmem_limit_bytes=48 * mib, min_batch_tiles=1)


def sae_forward(x, W_enc, W_dec, b_enc, b_dec, log_threshold,
                sparsity_coeff=1.0, preact_coeff=3e-6, c=4.0,
                tb_max=None, th_max=None, vmem_limit_bytes=None,
                weights_dtype=jnp.bfloat16, acts_dtype=jnp.bfloat16):
    """JumpReLU SAE forward. Returns (loss, recon, acts, l2, nmse, l1, l0).

    Note: acts are returned in `acts_dtype` (bfloat16 by default) -- they are
    produced by a bf16 MXU matmul, and halving the acts HBM stream is one of
    the main bandwidth savings at production SAE sizes.
    """
    B, d_mlp = x.shape
    d_hidden = W_enc.shape[1]

    cfg = _device_defaults()
    if tb_max is None:
        tb_max = cfg["tb_max"]
    if th_max is None:
        th_max = cfg["th_max"]
    if vmem_limit_bytes is None:
        vmem_limit_bytes = cfg["vmem_limit_bytes"]
    min_batch_tiles = cfg["min_batch_tiles"]

    # --- batch tiling (parallel axis).  Ensure >=2 tiles on megacore parts. ---
    tb = min(tb_max, _round_up(B, 8))
    if min_batch_tiles > 1 and _round_up(B, tb) // tb < min_batch_tiles and B > 8:
        tb = max(8, _round_up((B + min_batch_tiles - 1) // min_batch_tiles, 8))
    b_pad = _round_up(B, tb)

    # --- hidden tiling (reduction axis).  Pad d_hidden to a tile multiple; the
    #     tail is masked (threshold=+big, wsq=0, zero weight columns/rows). ---
    th = min((max(th_max, 128) // 128) * 128, _round_up(d_hidden, 128))
    dh_pad = _round_up(d_hidden, th)

    grid = (b_pad // tb, dh_pad // th)

    xf = x.astype(jnp.float32)
    if b_pad != B:
        xf = jnp.pad(xf, ((0, b_pad - B), (0, 0)))

    # bf16 weights for the MXU (autocast-style); f32 accumulation inside the kernel.
    w_enc = W_enc.astype(weights_dtype)
    w_dec = W_dec.astype(weights_dtype)
    # precompute once, outside the kernel: ||W_dec||_row^2 and exp(log_threshold)
    wdec_sq = jnp.sum(W_dec.astype(jnp.float32) ** 2, axis=1).reshape(1, d_hidden)
    threshold = jnp.exp(log_threshold.astype(jnp.float32)).reshape(1, d_hidden)
    b_enc2 = b_enc.astype(jnp.float32).reshape(1, d_hidden)
    b_dec2 = b_dec.astype(jnp.float32).reshape(1, d_mlp)

    if dh_pad != d_hidden:
        ph = dh_pad - d_hidden
        w_enc = jnp.pad(w_enc, ((0, 0), (0, ph)))
        w_dec = jnp.pad(w_dec, ((0, ph), (0, 0)))
        b_enc2 = jnp.pad(b_enc2, ((0, 0), (0, ph)))
        wdec_sq = jnp.pad(wdec_sq, ((0, 0), (0, ph)))
        threshold = jnp.pad(threshold, ((0, 0), (0, ph)), constant_values=1e30)

    kernel = functools.partial(_sae_kernel, float(c), int(B))

    # NOTE: x / recon blocks are j-invariant; if Pallas does not elide their
    # second pipeline buffer, pipeline_mode=pl.Buffered(1) on those specs would
    # recover more VMEM (left out here to keep the build conservative).
    recon, acts, stats = pl.pallas_call(
        kernel,
        grid=grid,
        in_specs=[
            pl.BlockSpec((tb, d_mlp), lambda i, j: (i, 0)),              # x
            pl.BlockSpec((d_mlp, th), lambda i, j: (0, j)),              # W_enc (bf16)
            pl.BlockSpec((th, d_mlp), lambda i, j: (j, 0)),              # W_dec (bf16)
            pl.BlockSpec((1, th), lambda i, j: (0, j)),                  # b_enc
            pl.BlockSpec((1, d_mlp), lambda i, j: (0, 0)),               # b_dec
            pl.BlockSpec((1, th), lambda i, j: (0, j)),                  # threshold = exp(log_thr)
            pl.BlockSpec((1, th), lambda i, j: (0, j)),                  # ||W_dec||^2
        ],
        out_specs=(
            pl.BlockSpec((tb, d_mlp), lambda i, j: (i, 0)),              # recon (resident over j)
            pl.BlockSpec((tb, th), lambda i, j: (i, j)),                 # acts (bf16)
            pl.BlockSpec((1, 8, _STATS_LANES), lambda i, j: (i, 0, 0)),  # per-batch-tile stats
        ),
        out_shape=(
            jax.ShapeDtypeStruct((b_pad, d_mlp), jnp.float32),
            jax.ShapeDtypeStruct((b_pad, dh_pad), acts_dtype),
            jax.ShapeDtypeStruct((grid[0], 8, _STATS_LANES), jnp.float32),
        ),
        scratch_shapes=[
            pltpu.VMEM((tb, d_mlp), weights_dtype),    # (xn - b_dec) in matmul dtype
            pltpu.VMEM((1, th), jnp.float32),          # sparsity lane-partials
            pltpu.VMEM((1, th), jnp.float32),          # preact   lane-partials
            pltpu.VMEM((1, th), jnp.float32),          # l0       lane-partials
            pltpu.VMEM((1, th), jnp.float32),          # l1       lane-partials
        ],
        compiler_params=pltpu.CompilerParams(
            dimension_semantics=("parallel", "arbitrary"),
            vmem_limit_bytes=int(vmem_limit_bytes)),
    )(xf, w_enc, w_dec, b_enc2, b_dec2, threshold, wdec_sq)

    # ---- cheap scalar epilogue in plain JAX (keeps batch grid axis fully parallel) ----
    per_tile = stats[:, 0, :]                          # (num_batch_tiles, 128)
    totals = jnp.sum(per_tile, axis=0)
    sum_diff_sq, sum_xn_sq = totals[0], totals[1]
    sp_sum, pa_sum, l0_sum, l1_sum = totals[2], totals[3], totals[4], totals[5]

    inv_b = 1.0 / B
    l2_loss = sum_diff_sq * inv_b
    nmse = jnp.sqrt(sum_diff_sq) / jnp.sqrt(sum_xn_sq)
    sparsity_loss = sp_sum * inv_b
    preact_loss = pa_sum * inv_b
    true_l0 = l0_sum * inv_b
    l1_loss = l1_sum * inv_b
    loss = l2_loss + sparsity_coeff * sparsity_loss + preact_coeff * preact_loss

    return (loss, recon[:B], acts[:B, :d_hidden], l2_loss, nmse, l1_loss, true_l0)


def sae_forward_ref(x, W_enc, W_dec, b_enc, b_dec, log_threshold,
                    sparsity_coeff=1.0, preact_coeff=3e-6, c=4.0,
                    weights_dtype=jnp.bfloat16):
    """Pure-JAX reference mirroring the PyTorch forward (autocast-style bf16 matmuls)."""
    x = x.astype(jnp.float32)
    mean = jnp.mean(x, axis=1, keepdims=True)
    std = jnp.std(x, axis=1, keepdims=True, ddof=1)
    xn = (x - mean) / (std + 1e-5)
    we = W_enc.astype(weights_dtype)
    wd = W_dec.astype(weights_dtype)
    pre_acts = jnp.dot((xn - b_dec).astype(weights_dtype), we,
                       preferred_element_type=jnp.float32) + b_enc
    threshold = jnp.exp(log_threshold)
    acts = jnp.where(pre_acts > threshold, pre_acts, 0.0)
    recon = jnp.dot(acts.astype(weights_dtype), wd,
                    preferred_element_type=jnp.float32) + b_dec
    diff = recon - xn
    l2_loss = jnp.mean(jnp.sum(diff ** 2, axis=1))
    nmse = jnp.linalg.norm(diff) / jnp.linalg.norm(xn)
    wdec_sq = jnp.sum(W_dec.astype(jnp.float32) ** 2, axis=1)
    sparsity_loss = jnp.mean(jnp.sum(jnp.tanh(c * jnp.abs(acts) * wdec_sq), axis=1))
    preact_loss = jnp.mean(jnp.sum(jax.nn.relu(threshold - pre_acts) * wdec_sq, axis=1))
    true_l0 = jnp.mean(jnp.sum((acts > 0).astype(jnp.float32), axis=1))
    l1_loss = jnp.mean(jnp.sum(jnp.abs(acts), axis=1))
    loss = l2_loss + sparsity_coeff * sparsity_loss + preact_coeff * preact_loss
    return (loss, recon, acts, l2_loss, nmse, l1_loss, true_l0)


if __name__ == "__main__":
    # cfg: d_mlp=128, dict_mult=4 -> d_hidden=512. Small, but with tb_max=128 /
    # th_max=256 it exercises a 2x2 (batch, d_hidden) grid, batch padding/masking,
    # the in-place recon accumulation and the per-tile stats finalize.
    B, d_mlp, dict_mult = 200, 128, 4
    d_hidden = d_mlp * dict_mult
    initial_threshold = 0.02

    key = jax.random.PRNGKey(0)
    kx, kw, kbe, kbd, kt = jax.random.split(key, 5)

    W_dec = jax.random.uniform(kw, (d_hidden, d_mlp), jnp.float32,
                               minval=-1.0 / d_mlp, maxval=1.0 / d_mlp)
    W_enc = (d_mlp / d_hidden) * W_dec.T
    b_dec = 0.02 * jax.random.normal(kbd, (d_mlp,), jnp.float32)
    b_enc = 0.02 * jax.random.normal(kbe, (d_hidden,), jnp.float32)
    log_threshold = (jnp.full((d_hidden,), math.log(initial_threshold), jnp.float32)
                     + 0.1 * jax.random.normal(kt, (d_hidden,), jnp.float32))

    x = jax.random.normal(kx, (B, d_mlp), jnp.float32)

    outs = sae_forward(x, W_enc, W_dec, b_enc, b_dec, log_threshold,
                       tb_max=128, th_max=256)
    outs = jax.block_until_ready(outs)

    refs = sae_forward_ref(x, W_enc, W_dec, b_enc, b_dec, log_threshold)
    names = ("loss", "recon", "acts", "l2", "nmse", "l1", "l0")
    for name, o, r in zip(names, outs, refs):
        if name == "acts":
            # kernel returns bf16 acts; allow bf16 rounding + rare JumpReLU
            # boundary flips (|pre - thr| ~ ulp, value ~ threshold ~ 0.02).
            ok = jnp.allclose(o.astype(jnp.float32), r, rtol=2e-2, atol=3e-2)
        elif name == "l0":
            ok = jnp.allclose(o, r, rtol=2e-3, atol=2e-2)
        else:
            ok = jnp.allclose(o, r, rtol=3e-3, atol=3e-3)
        assert ok, (name, o, r)

    print("KERNEL_OK")
</pallas_src>

<mosaic_0001>
module attributes {stable_mosaic.version = 11 : i64} {
  func.func @_sae_kernel(%arg0: i32, %arg1: i32, %arg2: memref<128x128xf32, #tpu.memory_space<vmem>>, %arg3: memref<128x256xbf16, #tpu.memory_space<vmem>>, %arg4: memref<256x128xbf16, #tpu.memory_space<vmem>>, %arg5: memref<1x256xf32, #tpu.memory_space<vmem>>, %arg6: memref<1x128xf32, #tpu.memory_space<vmem>>, %arg7: memref<1x256xf32, #tpu.memory_space<vmem>>, %arg8: memref<1x256xf32, #tpu.memory_space<vmem>>, %arg9: memref<128x128xf32, #tpu.memory_space<vmem>>, %arg10: memref<128x256xbf16, #tpu.memory_space<vmem>>, %arg11: memref<1x8x128xf32, #tpu.memory_space<vmem>>, %arg12: memref<128x128xbf16, #tpu.memory_space<vmem>>, %arg13: memref<1x256xf32, #tpu.memory_space<vmem>>, %arg14: memref<1x256xf32, #tpu.memory_space<vmem>>, %arg15: memref<1x256xf32, #tpu.memory_space<vmem>>, %arg16: memref<1x256xf32, #tpu.memory_space<vmem>>) attributes {dimension_semantics = [#tpu.dimension_semantics<parallel>, #tpu.dimension_semantics<arbitrary>], iteration_bounds = array<i64: 2, 2>, scalar_prefetch = 0 : i64, scratch_operands = 5 : i64, tpu.core_type = #tpu.core_type<tc>, window_params = [{transform_indices = @transform_0, window_bounds = array<i64: 128, 128>}, {transform_indices = @transform_1, window_bounds = array<i64: 128, 256>}, {transform_indices = @transform_2, window_bounds = array<i64: 256, 128>}, {transform_indices = @transform_3, window_bounds = array<i64: 1, 256>}, {pipeline_mode = #tpu.pipeline_mode<synchronous>, transform_indices = @transform_4, window_bounds = array<i64: 1, 128>}, {transform_indices = @transform_5, window_bounds = array<i64: 1, 256>}, {transform_indices = @transform_6, window_bounds = array<i64: 1, 256>}, {transform_indices = @transform_7, window_bounds = array<i64: 128, 128>}, {transform_indices = @transform_8, window_bounds = array<i64: 128, 256>}, {transform_indices = @transform_9, window_bounds = array<i64: 1, 8, 128>}]} {
    %c128_i32 = arith.constant 128 : i32
    %0 = arith.muli %arg0, %c128_i32 : i32
    %1 = tpu.iota {dimensions = array<i32: 0>} : vector<128x1xi32>
    %2 = vector.broadcast %0 : i32 to vector<128x1xi32>
    %3 = arith.addi %2, %1 : vector<128x1xi32>
    %c200_i32 = arith.constant 200 : i32
    %4 = vector.broadcast %c200_i32 : i32 to vector<128x1xi32>
    %5 = arith.cmpi slt, %3, %4 : vector<128x1xi32>
    %c0_i32 = arith.constant 0 : i32
    %6 = arith.cmpi eq, %arg1, %c0_i32 : i32
    %7 = arith.extui %6 : i1 to i32
    %c0_i32_0 = arith.constant 0 : i32
    %8 = arith.cmpi ne, %7, %c0_i32_0 : i32
    scf.if %8 {
      %c0_44 = arith.constant 0 : index
      %c0_45 = arith.constant 0 : index
      %69 = vector.load %arg2[%c0_44, %c0_45] : memref<128x128xf32, #tpu.memory_space<vmem>>, vector<128x128xf32>
      %cst_46 = arith.constant dense<0.000000e+00> : vector<128xf32>
      %70 = vector.multi_reduction <add>, %69, %cst_46 [1] : vector<128x128xf32> to vector<128xf32>
      %71 = vector.shape_cast %70 : vector<128xf32> to vector<128x1xf32>
      %cst_47 = arith.constant 1.280000e+02 : f32
      %72 = vector.broadcast %cst_47 : f32 to vector<128x1xf32>
      %73 = arith.divf %71, %72 : vector<128x1xf32>
      %74 = vector.broadcast %73 : vector<128x1xf32> to vector<128x128xf32>
      %75 = arith.subf %69, %74 : vector<128x128xf32>
      %76 = arith.mulf %75, %75 : vector<128x128xf32>
      %cst_48 = arith.constant dense<0.000000e+00> : vector<128xf32>
      %77 = vector.multi_reduction <add>, %76, %cst_48 [1] : vector<128x128xf32> to vector<128xf32>
      %78 = vector.shape_cast %77 : vector<128xf32> to vector<128x1xf32>
      %cst_49 = arith.constant 1.270000e+02 : f32
      %79 = vector.broadcast %cst_49 : f32 to vector<128x1xf32>
      %80 = arith.divf %78, %79 : vector<128x1xf32>
      %81 = math.sqrt %80 : vector<128x1xf32>
      %cst_50 = arith.constant 9.99999974E-6 : f32
      %82 = vector.broadcast %cst_50 : f32 to vector<128x1xf32>
      %83 = arith.addf %81, %82 : vector<128x1xf32>
      %84 = vector.broadcast %83 : vector<128x1xf32> to vector<128x128xf32>
      %85 = arith.divf %75, %84 : vector<128x128xf32>
      %c0_51 = arith.constant 0 : index
      %c0_52 = arith.constant 0 : index
      %86 = vector.load %arg6[%c0_51, %c0_52] : memref<1x128xf32, #tpu.memory_space<vmem>>, vector<1x128xf32>
      %87 = vector.broadcast %86 : vector<1x128xf32> to vector<128x128xf32>
      %88 = arith.subf %85, %87 : vector<128x128xf32>
      %89 = arith.truncf %88 : vector<128x128xf32> to vector<128x128xbf16>
      %c0_53 = arith.constant 0 : index
      %c0_54 = arith.constant 0 : index
      %90 = vector.load %arg12[%c0_53, %c0_54] : memref<128x128xbf16, #tpu.memory_space<vmem>>, vector<128x128xbf16>
      tpu.vector_store %arg12[%c0_53, %c0_54], %89 {strides = array<i32>} : memref<128x128xbf16, #tpu.memory_space<vmem>>, vector<128x128xbf16>,
      %cst_55 = arith.constant 0.000000e+00 : f32
      %91 = vector.broadcast %cst_55 : f32 to vector<128x128xf32>
      %c0_56 = arith.constant 0 : index
      %c0_57 = arith.constant 0 : index
      %92 = vector.load %arg9[%c0_56, %c0_57] : memref<128x128xf32, #tpu.memory_space<vmem>>, vector<128x128xf32>
      tpu.vector_store %arg9[%c0_56, %c0_57], %91 {strides = array<i32>} : memref<128x128xf32, #tpu.memory_space<vmem>>, vector<128x128xf32>,
      %cst_58 = arith.constant 0.000000e+00 : f32
      %93 = vector.broadcast %cst_58 : f32 to vector<1x256xf32>
      %c0_59 = arith.constant 0 : index
      %c0_60 = arith.constant 0 : index
      %94 = vector.load %arg13[%c0_59, %c0_60] : memref<1x256xf32, #tpu.memory_space<vmem>>, vector<1x256xf32>
      tpu.vector_store %arg13[%c0_59, %c0_60], %93 {strides = array<i32>} : memref<1x256xf32, #tpu.memory_space<vmem>>, vector<1x256xf32>,
      %cst_61 = arith.constant 0.000000e+00 : f32
      %95 = vector.broadcast %cst_61 : f32 to vector<1x256xf32>
      %c0_62 = arith.constant 0 : index
      %c0_63 = arith.constant 0 : index
      %96 = vector.load %arg14[%c0_62, %c0_63] : memref<1x256xf32, #tpu.memory_space<vmem>>, vector<1x256xf32>
      tpu.vector_store %arg14[%c0_62, %c0_63], %95 {strides = array<i32>} : memref<1x256xf32, #tpu.memory_space<vmem>>, vector<1x256xf32>,
      %cst_64 = arith.constant 0.000000e+00 : f32
      %97 = vector.broadcast %cst_64 : f32 to vector<1x256xf32>
      %c0_65 = arith.constant 0 : index
      %c0_66 = arith.constant 0 : index
      %98 = vector.load %arg15[%c0_65, %c0_66] : memref<1x256xf32, #tpu.memory_space<vmem>>, vector<1x256xf32>
      tpu.vector_store %arg15[%c0_65, %c0_66], %97 {strides = array<i32>} : memref<1x256xf32, #tpu.memory_space<vmem>>, vector<1x256xf32>,
      %cst_67 = arith.constant 0.000000e+00 : f32
      %99 = vector.broadcast %cst_67 : f32 to vector<1x256xf32>
      %c0_68 = arith.constant 0 : index
      %c0_69 = arith.constant 0 : index
      %100 = vector.load %arg16[%c0_68, %c0_69] : memref<1x256xf32, #tpu.memory_space<vmem>>, vector<1x256xf32>
      tpu.vector_store %arg16[%c0_68, %c0_69], %99 {strides = array<i32>} : memref<1x256xf32, #tpu.memory_space<vmem>>, vector<1x256xf32>,
    } else {
    }
    %c0 = arith.constant 0 : index
    %c0_1 = arith.constant 0 : index
    %9 = vector.load %arg12[%c0, %c0_1] : memref<128x128xbf16, #tpu.memory_space<vmem>>, vector<128x128xbf16>
    %c0_2 = arith.constant 0 : index
    %c0_3 = arith.constant 0 : index
    %10 = vector.load %arg3[%c0_2, %c0_3] : memref<128x256xbf16, #tpu.memory_space<vmem>>, vector<128x256xbf16>
    %cst = arith.constant dense<0.000000e+00> : vector<128x256xf32>
    %11 = tpu.matmul %9, %10, %cst {dimension_numbers = #tpu.dot_dimension_numbers<[1], [0], [0], [1], [0, 0, 1, 1], [], []>} : vector<128x128xbf16>, vector<128x256xbf16>, vector<128x256xf32> -> vector<128x256xf32>
    %c0_4 = arith.constant 0 : index
    %c0_5 = arith.constant 0 : index
    %12 = vector.load %arg5[%c0_4, %c0_5] : memref<1x256xf32, #tpu.memory_space<vmem>>, vector<1x256xf32>
    %13 = vector.broadcast %12 : vector<1x256xf32> to vector<128x256xf32>
    %14 = arith.addf %11, %13 : vector<128x256xf32>
    %c0_6 = arith.constant 0 : index
    %c0_7 = arith.constant 0 : index
    %15 = vector.load %arg7[%c0_6, %c0_7] : memref<1x256xf32, #tpu.memory_space<vmem>>, vector<1x256xf32>
    %16 = vector.broadcast %15 : vector<1x256xf32> to vector<128x256xf32>
    %17 = arith.cmpf ogt, %14, %16 : vector<128x256xf32>
    %18 = vector.broadcast %5 : vector<128x1xi1> to vector<128x256xi1>
    %19 = arith.andi %17, %18 : vector<128x256xi1>
    %cst_8 = arith.constant 0.000000e+00 : f32
    %20 = vector.broadcast %cst_8 : f32 to vector<128x256xf32>
    %21 = arith.select %19, %14, %20 : vector<128x256xi1>, vector<128x256xf32>
    %22 = arith.truncf %21 : vector<128x256xf32> to vector<128x256xbf16>
    %c0_9 = arith.constant 0 : index
    %c0_10 = arith.constant 0 : index
    %23 = vector.load %arg10[%c0_9, %c0_10] : memref<128x256xbf16, #tpu.memory_space<vmem>>, vector<128x256xbf16>
    tpu.vector_store %arg10[%c0_9, %c0_10], %22 {strides = array<i32>} : memref<128x256xbf16, #tpu.memory_space<vmem>>, vector<128x256xbf16>,
    %c0_11 = arith.constant 0 : index
    %c0_12 = arith.constant 0 : index
    %24 = vector.load %arg9[%c0_11, %c0_12] : memref<128x128xf32, #tpu.memory_space<vmem>>, vector<128x128xf32>
    %c0_13 = arith.constant 0 : index
    %c0_14 = arith.constant 0 : index
    %25 = vector.load %arg4[%c0_13, %c0_14] : memref<256x128xbf16, #tpu.memory_space<vmem>>, vector<256x128xbf16>
    %cst_15 = arith.constant dense<0.000000e+00> : vector<128x128xf32>
    %26 = tpu.matmul %22, %25, %cst_15 {dimension_numbers = #tpu.dot_dimension_numbers<[1], [0], [0], [1], [0, 0, 1, 1], [], []>} : vector<128x256xbf16>, vector<256x128xbf16>, vector<128x128xf32> -> vector<128x128xf32>
    %27 = arith.addf %24, %26 : vector<128x128xf32>
    %c0_16 = arith.constant 0 : index
    %c0_17 = arith.constant 0 : index
    %28 = vector.load %arg9[%c0_16, %c0_17] : memref<128x128xf32, #tpu.memory_space<vmem>>, vector<128x128xf32>
    tpu.vector_store %arg9[%c0_16, %c0_17], %27 {strides = array<i32>} : memref<128x128xf32, #tpu.memory_space<vmem>>, vector<128x128xf32>,
    %c0_18 = arith.constant 0 : index
    %c0_19 = arith.constant 0 : index
    %29 = vector.load %arg8[%c0_18, %c0_19] : memref<1x256xf32, #tpu.memory_space<vmem>>, vector<1x256xf32>
    %c0_20 = arith.constant 0 : index
    %c0_21 = arith.constant 0 : index
    %30 = vector.load %arg13[%c0_20, %c0_21] : memref<1x256xf32, #tpu.memory_space<vmem>>, vector<1x256xf32>
    %cst_22 = arith.constant 4.000000e+00 : f32
    %31 = vector.broadcast %cst_22 : f32 to vector<128x256xf32>
    %32 = arith.mulf %31, %21 : vector<128x256xf32>
    %33 = vector.broadcast %29 : vector<1x256xf32> to vector<128x256xf32>
    %34 = arith.mulf %32, %33 : vector<128x256xf32>
    %35 = math.tanh %34 : vector<128x256xf32>
    %cst_23 = arith.constant dense<0.000000e+00> : vector<256xf32>
    %36 = vector.multi_reduction <add>, %35, %cst_23 [0] : vector<128x256xf32> to vector<256xf32>
    %37 = vector.shape_cast %36 : vector<256xf32> to vector<1x256xf32>
    %38 = arith.addf %30, %37 : vector<1x256xf32>
    %c0_24 = arith.constant 0 : index
    %c0_25 = arith.constant 0 : index
    %39 = vector.load %arg13[%c0_24, %c0_25] : memref<1x256xf32, #tpu.memory_space<vmem>>, vector<1x256xf32>
    tpu.vector_store %arg13[%c0_24, %c0_25], %38 {strides = array<i32>} : memref<1x256xf32, #tpu.memory_space<vmem>>, vector<1x256xf32>,
    %c0_26 = arith.constant 0 : index
    %c0_27 = arith.constant 0 : index
    %40 = vector.load %arg14[%c0_26, %c0_27] : memref<1x256xf32, #tpu.memory_space<vmem>>, vector<1x256xf32>
    %41 = vector.broadcast %15 : vector<1x256xf32> to vector<128x256xf32>
    %42 = arith.subf %41, %14 : vector<128x256xf32>
    %cst_28 = arith.constant 0.000000e+00 : f32
    %43 = vector.broadcast %cst_28 : f32 to vector<128x256xf32>
    %44 = arith.maximumf %42, %43 : vector<128x256xf32>
    %cst_29 = arith.constant 0.000000e+00 : f32
    %45 = vector.shape_cast %5 : vector<128x1xi1> to vector<128x1xi1>
    %46 = vector.broadcast %45 : vector<128x1xi1> to vector<128x256xi1>
    %47 = vector.broadcast %cst_29 : f32 to vector<128x256xf32>
    %48 = arith.select %46, %44, %47 : vector<128x256xi1>, vector<128x256xf32>
    %cst_30 = arith.constant dense<0.000000e+00> : vector<256xf32>
    %49 = vector.multi_reduction <add>, %48, %cst_30 [0] : vector<128x256xf32> to vector<256xf32>
    %50 = vector.shape_cast %49 : vector<256xf32> to vector<1x256xf32>
    %51 = arith.mulf %50, %29 : vector<1x256xf32>
    %52 = arith.addf %40, %51 : vector<1x256xf32>
    %c0_31 = arith.constant 0 : index
    %c0_32 = arith.constant 0 : index
    %53 = vector.load %arg14[%c0_31, %c0_32] : memref<1x256xf32, #tpu.memory_space<vmem>>, vector<1x256xf32>
    tpu.vector_store %arg14[%c0_31, %c0_32], %52 {strides = array<i32>} : memref<1x256xf32, #tpu.memory_space<vmem>>, vector<1x256xf32>,
    %c0_33 = arith.constant 0 : index
    %c0_34 = arith.constant 0 : index
    %54 = vector.load %arg15[%c0_33, %c0_34] : memref<1x256xf32, #tpu.memory_space<vmem>>, vector<1x256xf32>
    %55 = arith.extui %19 : vector<128x256xi1> to vector<128x256xi32>
    %56 = arith.sitofp %55 : vector<128x256xi32> to vector<128x256xf32>
    %cst_35 = arith.constant dense<0.000000e+00> : vector<256xf32>
    %57 = vector.multi_reduction <add>, %56, %cst_35 [0] : vector<128x256xf32> to vector<256xf32>
    %58 = vector.shape_cast %57 : vector<256xf32> to vector<1x256xf32>
    %59 = arith.addf %54, %58 : vector<1x256xf32>
    %c0_36 = arith.constant 0 : index
    %c0_37 = arith.constant 0 : index
    %60 = vector.load %arg15[%c0_36, %c0_37] : memref<1x256xf32, #tpu.memory_space<vmem>>, vector<1x256xf32>
    tpu.vector_store %arg15[%c0_36, %c0_37], %59 {strides = array<i32>} : memref<1x256xf32, #tpu.memory_space<vmem>>, vector<1x256xf32>,
    %c0_38 = arith.constant 0 : index
    %c0_39 = arith.constant 0 : index
    %61 = vector.load %arg16[%c0_38, %c0_39] : memref<1x256xf32, #tpu.memory_space<vmem>>, vector<1x256xf32>
    %cst_40 = arith.constant dense<0.000000e+00> : vector<256xf32>
    %62 = vector.multi_reduction <add>, %21, %cst_40 [0] : vector<128x256xf32> to vector<256xf32>
    %63 = vector.shape_cast %62 : vector<256xf32> to vector<1x256xf32>
    %64 = arith.addf %61, %63 : vector<1x256xf32>
    %c0_41 = arith.constant 0 : index
    %c0_42 = arith.constant 0 : index
    %65 = vector.load %arg16[%c0_41, %c0_42] : memref<1x256xf32, #tpu.memory_space<vmem>>, vector<1x256xf32>
    tpu.vector_store %arg16[%c0_41, %c0_42], %64 {strides = array<i32>} : memref<1x256xf32, #tpu.memory_space<vmem>>, vector<1x256xf32>,
    %c1_i32 = arith.constant 1 : i32
    %66 = arith.cmpi eq, %arg1, %c1_i32 : i32
    %67 = arith.extui %66 : i1 to i32
    %c0_i32_43 = arith.constant 0 : i32
    %68 = arith.cmpi ne, %67, %c0_i32_43 : i32
    scf.if %68 {
      %c0_44 = arith.constant 0 : index
      %c0_45 = arith.constant 0 : index
      %69 = vector.load %arg9[%c0_44, %c0_45] : memref<128x128xf32, #tpu.memory_space<vmem>>, vector<128x128xf32>
      %c0_46 = arith.constant 0 : index
      %c0_47 = arith.constant 0 : index
      %70 = vector.load %arg6[%c0_46, %c0_47] : memref<1x128xf32, #tpu.memory_space<vmem>>, vector<1x128xf32>
      %71 = vector.broadcast %70 : vector<1x128xf32> to vector<128x128xf32>
      %72 = arith.addf %69, %71 : vector<128x128xf32>
      %c0_48 = arith.constant 0 : index
      %c0_49 = arith.constant 0 : index
      %73 = vector.load %arg9[%c0_48, %c0_49] : memref<128x128xf32, #tpu.memory_space<vmem>>, vector<128x128xf32>
      tpu.vector_store %arg9[%c0_48, %c0_49], %72 {strides = array<i32>} : memref<128x128xf32, #tpu.memory_space<vmem>>, vector<128x128xf32>,
      %c0_50 = arith.constant 0 : index
      %c0_51 = arith.constant 0 : index
      %74 = vector.load %arg2[%c0_50, %c0_51] : memref<128x128xf32, #tpu.memory_space<vmem>>, vector<128x128xf32>
      %cst_52 = arith.constant dense<0.000000e+00> : vector<128xf32>
      %75 = vector.multi_reduction <add>, %74, %cst_52 [1] : vector<128x128xf32> to vector<128xf32>
      %76 = vector.shape_cast %75 : vector<128xf32> to vector<128x1xf32>
      %cst_53 = arith.constant 1.280000e+02 : f32
      %77 = vector.broadcast %cst_53 : f32 to vector<128x1xf32>
      %78 = arith.divf %76, %77 : vector<128x1xf32>
      %79 = vector.broadcast %78 : vector<128x1xf32> to vector<128x128xf32>
      %80 = arith.subf %74, %79 : vector<128x128xf32>
      %81 = arith.mulf %80, %80 : vector<128x128xf32>
      %cst_54 = arith.constant dense<0.000000e+00> : vector<128xf32>
      %82 = vector.multi_reduction <add>, %81, %cst_54 [1] : vector<128x128xf32> to vector<128xf32>
      %83 = vector.shape_cast %82 : vector<128xf32> to vector<128x1xf32>
      %cst_55 = arith.constant 1.270000e+02 : f32
      %84 = vector.broadcast %cst_55 : f32 to vector<128x1xf32>
      %85 = arith.divf %83, %84 : vector<128x1xf32>
      %86 = math.sqrt %85 : vector<128x1xf32>
      %cst_56 = arith.constant 9.99999974E-6 : f32
      %87 = vector.broadcast %cst_56 : f32 to vector<128x1xf32>
      %88 = arith.addf %86, %87 : vector<128x1xf32>
      %89 = vector.broadcast %88 : vector<128x1xf32> to vector<128x128xf32>
      %90 = arith.divf %80, %89 : vector<128x128xf32>
      %91 = arith.extui %5 : vector<128x1xi1> to vector<128x1xi32>
      %92 = arith.sitofp %91 : vector<128x1xi32> to vector<128x1xf32>
      %93 = arith.subf %72, %90 : vector<128x128xf32>
      %94 = vector.broadcast %92 : vector<128x1xf32> to vector<128x128xf32>
      %95 = arith.mulf %93, %94 : vector<128x128xf32>
      %96 = arith.mulf %95, %95 : vector<128x128xf32>
      %97 = vector.shape_cast %96 : vector<128x128xf32> to vector<1x128x128xf32>
      %cst_57 = arith.constant dense<0.000000e+00> : vector<1xf32>
      %98 = vector.multi_reduction <add>, %97, %cst_57 [1, 2] : vector<1x128x128xf32> to vector<1xf32>
      %99 = vector.shape_cast %98 : vector<1xf32> to vector<1x1x1xf32>
      %100 = vector.extract %99[0, 0, 0] : f32 from vector<1x1x1xf32>
      %101 = vector.broadcast %92 : vector<128x1xf32> to vector<128x128xf32>
      %102 = arith.mulf %90, %101 : vector<128x128xf32>
      %103 = arith.mulf %102, %102 : vector<128x128xf32>
      %104 = vector.shape_cast %103 : vector<128x128xf32> to vector<1x128x128xf32>
      %cst_58 = arith.constant dense<0.000000e+00> : vector<1xf32>
      %105 = vector.multi_reduction <add>, %104, %cst_58 [1, 2] : vector<1x128x128xf32> to vector<1xf32>
      %106 = vector.shape_cast %105 : vector<1xf32> to vector<1x1x1xf32>
      %107 = vector.extract %106[0, 0, 0] : f32 from vector<1x1x1xf32>
      %108 = tpu.iota {dimensions = array<i32: 1>} : vector<8x128xi32>
      %c0_59 = arith.constant 0 : index
      %c0_60 = arith.constant 0 : index
      %109 = vector.load %arg13[%c0_59, %c0_60] : memref<1x256xf32, #tpu.memory_space<vmem>>, vector<1x256xf32>
      %110 = vector.shape_cast %109 : vector<1x256xf32> to vector<1x1x256xf32>
      %cst_61 = arith.constant dense<0.000000e+00> : vector<1xf32>
      %111 = vector.multi_reduction <add>, %110, %cst_61 [1, 2] : vector<1x1x256xf32> to vector<1xf32>
      %112 = vector.shape_cast %111 : vector<1xf32> to vector<1x1x1xf32>
      %113 = vector.extract %112[0, 0, 0] : f32 from vector<1x1x1xf32>
      %c0_62 = arith.constant 0 : index
      %c0_63 = arith.constant 0 : index
      %114 = vector.load %arg14[%c0_62, %c0_63] : memref<1x256xf32, #tpu.memory_space<vmem>>, vector<1x256xf32>
      %115 = vector.shape_cast %114 : vector<1x256xf32> to vector<1x1x256xf32>
      %cst_64 = arith.constant dense<0.000000e+00> : vector<1xf32>
      %116 = vector.multi_reduction <add>, %115, %cst_64 [1, 2] : vector<1x1x256xf32> to vector<1xf32>
      %117 = vector.shape_cast %116 : vector<1xf32> to vector<1x1x1xf32>
      %118 = vector.extract %117[0, 0, 0] : f32 from vector<1x1x1xf32>
      %c0_65 = arith.constant 0 : index
      %c0_66 = arith.constant 0 : index
      %119 = vector.load %arg15[%c0_65, %c0_66] : memref<1x256xf32, #tpu.memory_space<vmem>>, vector<1x256xf32>
      %120 = vector.shape_cast %119 : vector<1x256xf32> to vector<1x1x256xf32>
      %cst_67 = arith.constant dense<0.000000e+00> : vector<1xf32>
      %121 = vector.multi_reduction <add>, %120, %cst_67 [1, 2] : vector<1x1x256xf32> to vector<1xf32>
      %122 = vector.shape_cast %121 : vector<1xf32> to vector<1x1x1xf32>
      %123 = vector.extract %122[0, 0, 0] : f32 from vector<1x1x1xf32>
      %c0_68 = arith.constant 0 : index
      %c0_69 = arith.constant 0 : index
      %124 = vector.load %arg16[%c0_68, %c0_69] : memref<1x256xf32, #tpu.memory_space<vmem>>, vector<1x256xf32>
      %125 = vector.shape_cast %124 : vector<1x256xf32> to vector<1x1x256xf32>
      %cst_70 = arith.constant dense<0.000000e+00> : vector<1xf32>
      %126 = vector.multi_reduction <add>, %125, %cst_70 [1, 2] : vector<1x1x256xf32> to vector<1xf32>
      %127 = vector.shape_cast %126 : vector<1xf32> to vector<1x1x1xf32>
      %128 = vector.extract %127[0, 0, 0] : f32 from vector<1x1x1xf32>
      %cst_71 = arith.constant 0.000000e+00 : f32
      %129 = vector.broadcast %cst_71 : f32 to vector<8x128xf32>
      %c0_i32_72 = arith.constant 0 : i32
      %130 = vector.broadcast %c0_i32_72 : i32 to vector<8x128xi32>
      %131 = arith.cmpi eq, %108, %130 : vector<8x128xi32>
      %132 = vector.broadcast %100 : f32 to vector<8x128xf32>
      %133 = arith.select %131, %132, %129 : vector<8x128xi1>, vector<8x128xf32>
      %c1_i32_73 = arith.constant 1 : i32
      %134 = vector.broadcast %c1_i32_73 : i32 to vector<8x128xi32>
      %135 = arith.cmpi eq, %108, %134 : vector<8x128xi32>
      %136 = vector.broadcast %107 : f32 to vector<8x128xf32>
      %137 = arith.select %135, %136, %133 : vector<8x128xi1>, vector<8x128xf32>
      %c2_i32 = arith.constant 2 : i32
      %138 = vector.broadcast %c2_i32 : i32 to vector<8x128xi32>
      %139 = arith.cmpi eq, %108, %138 : vector<8x128xi32>
      %140 = vector.broadcast %113 : f32 to vector<8x128xf32>
      %141 = arith.select %139, %140, %137 : vector<8x128xi1>, vector<8x128xf32>
      %c3_i32 = arith.constant 3 : i32
      %142 = vector.broadcast %c3_i32 : i32 to vector<8x128xi32>
      %143 = arith.cmpi eq, %108, %142 : vector<8x128xi32>
      %144 = vector.broadcast %118 : f32 to vector<8x128xf32>
      %145 = arith.select %143, %144, %141 : vector<8x128xi1>, vector<8x128xf32>
      %c4_i32 = arith.constant 4 : i32
      %146 = vector.broadcast %c4_i32 : i32 to vector<8x128xi32>
      %147 = arith.cmpi eq, %108, %146 : vector<8x128xi32>
      %148 = vector.broadcast %123 : f32 to vector<8x128xf32>
      %149 = arith.select %147, %148, %145 : vector<8x128xi1>, vector<8x128xf32>
      %c5_i32 = arith.constant 5 : i32
      %150 = vector.broadcast %c5_i32 : i32 to vector<8x128xi32>
      %151 = arith.cmpi eq, %108, %150 : vector<8x128xi32>
      %152 = vector.broadcast %128 : f32 to vector<8x128xf32>
      %153 = arith.select %151, %152, %149 : vector<8x128xi1>, vector<8x128xf32>
      %c0_74 = arith.constant 0 : index
      %c0_75 = arith.constant 0 : index
      %c0_76 = arith.constant 0 : index
      %154 = vector.load %arg11[%c0_74, %c0_75, %c0_76] : memref<1x8x128xf32, #tpu.memory_space<vmem>>, vector<1x8x128xf32>
      %155 = vector.shape_cast %154 : vector<1x8x128xf32> to vector<8x128xf32>
      %156 = vector.shape_cast %153 : vector<8x128xf32> to vector<1x8x128xf32>
      tpu.vector_store %arg11[%c0_74, %c0_75, %c0_76], %156 {strides = array<i32>} : memref<1x8x128xf32, #tpu.memory_space<vmem>>, vector<1x8x128xf32>,
    } else {
    }
    return
  }
  func.func @transform_0(%arg0: i32, %arg1: i32) -> (i32, i32) {
    %c0_i32 = arith.constant 0 : i32
    %c0_i32_0 = arith.constant 0 : i32
    return %arg0, %c0_i32 : i32, i32
  }
  func.func @transform_1(%arg0: i32, %arg1: i32) -> (i32, i32) {
    %c0_i32 = arith.constant 0 : i32
    %c0_i32_0 = arith.constant 0 : i32
    return %c0_i32, %arg1 : i32, i32
  }
  func.func @transform_2(%arg0: i32, %arg1: i32) -> (i32, i32) {
    %c0_i32 = arith.constant 0 : i32
    %c0_i32_0 = arith.constant 0 : i32
    return %arg1, %c0_i32 : i32, i32
  }
  func.func @transform_3(%arg0: i32, %arg1: i32) -> (i32, i32) {
    %c0_i32 = arith.constant 0 : i32
    %c0_i32_0 = arith.constant 0 : i32
    return %c0_i32, %arg1 : i32, i32
  }
  func.func @transform_4(%arg0: i32, %arg1: i32) -> (i32, i32) {
    %c0_i32 = arith.constant 0 : i32
    %c0_i32_0 = arith.constant 0 : i32
    %c0_i32_1 = arith.constant 0 : i32
    return %c0_i32, %c0_i32_0 : i32, i32
  }
  func.func @transform_5(%arg0: i32, %arg1: i32) -> (i32, i32) {
    %c0_i32 = arith.constant 0 : i32
    %c0_i32_0 = arith.constant 0 : i32
    return %c0_i32, %arg1 : i32, i32
  }
  func.func @transform_6(%arg0: i32, %arg1: i32) -> (i32, i32) {
    %c0_i32 = arith.constant 0 : i32
    %c0_i32_0 = arith.constant 0 : i32
    return %c0_i32, %arg1 : i32, i32
  }
  func.func @transform_7(%arg0: i32, %arg1: i32) -> (i32, i32) {
    %c0_i32 = arith.constant 0 : i32
    %c0_i32_0 = arith.constant 0 : i32
    return %arg0, %c0_i32 : i32, i32
  }
  func.func @transform_8(%arg0: i32, %arg1: i32) -> (i32, i32) {
    %c0_i32 = arith.constant 0 : i32
    return %arg0, %arg1 : i32, i32
  }
  func.func @transform_9(%arg0: i32, %arg1: i32) -> (i32, i32, i32) {
    %c0_i32 = arith.constant 0 : i32
    %c0_i32_0 = arith.constant 0 : i32
    %c0_i32_1 = arith.constant 0 : i32
    return %arg0, %c0_i32, %c0_i32_0 : i32, i32, i32
  }
}

</mosaic_0001>

<llo_original>
// kernel: tpu_custom_call.1
$region0: #{tpu_custom_call.1}
  #allocation0 [shape = 'u32[]', space=smem, size = 0x4, offset = 0x4, fixed_abs, tag = 'smem constant byte address 0x4 - core index']
  #allocation1 [shape = 'u32[72,128]{1,0:T(1,128)}', space=vmem, size = 0x9000, scoped, tag = 'internal scratch']
  #allocation2 [shape = 'bf16[128,128]{1,0:T(8,128)(2,1)}', space=vmem, size = 0x8000, scoped, tag = 'scratch operand']
  #allocation3 [shape = 'f32[1,256]{1,0:T(1,128)}', space=vmem, size = 0x400, scoped, tag = 'scratch operand']
  #allocation4 [shape = 'f32[1,256]{1,0:T(1,128)}', space=vmem, size = 0x400, scoped, tag = 'scratch operand']
  #allocation5 [shape = 'f32[1,256]{1,0:T(1,128)}', space=vmem, size = 0x400, scoped, tag = 'scratch operand']
  #allocation6 [shape = 'f32[1,256]{1,0:T(1,128)}', space=vmem, size = 0x400, scoped, tag = 'scratch operand']
  %s0 = inlined_call_operand.hbm [shape: f32[256,128], index: 0, kind: input, shape index: {}]
  %s1 = inlined_call_operand.hbm [shape: bf16[128,512], index: 1, kind: input, shape index: {}]
  %s2 = inlined_call_operand.hbm [shape: bf16[512,128], index: 2, kind: input, shape index: {}]
  %s3 = inlined_call_operand.hbm [shape: f32[1,512], index: 3, kind: input, shape index: {}]
  %s4 = inlined_call_operand.hbm [shape: f32[1,128], index: 4, kind: input, shape index: {}]
  %s5 = inlined_call_operand.vmem [shape: f32[1,512], index: 5, kind: input, shape index: {}]
  %s6 = inlined_call_operand.hbm [shape: f32[1,512], index: 6, kind: input, shape index: {}]
  %s7 = inlined_call_operand.hbm [shape: f32[256,128], index: 7, kind: output, shape index: {0}]
  %s8 = inlined_call_operand.hbm [shape: bf16[256,512], index: 8, kind: output, shape index: {1}]
  %s9 = inlined_call_operand.hbm [shape: f32[2,8,128], index: 9, kind: output, shape index: {2}]
  %10 = xla_tuple %s7, %s8, %s9
  %s11 = sld [smem:[#allocation0]]
  $region109: #{tpu_custom_call.1} parent=0
    _
  %s13 = ssub.s32 1, %s11
  %s14 = scalar_select 0, %s13, %s11
  $region1: #{tpu_custom_call.1} parent=0
    #allocation7 [shape = 'u8[131072]{0}', space=vmem, size = 0x20000, scoped, tag = 'input window, operand 0']
    #allocation8 [shape = 's32[2]{0}', space=sflag, size = 0x8, scoped, tag = 'scoped memory for tpu_custom_call.1']
    #allocation9 [shape = 's32[2]{0}', space=sflag, size = 0x8, scoped, tag = 'scoped memory for tpu_custom_call.1']
    #allocation10 [shape = 'u8[131072]{0}', space=vmem, size = 0x20000, scoped, tag = 'input window, operand 1']
    #allocation11 [shape = 's32[2]{0}', space=sflag, size = 0x8, scoped, tag = 'scoped memory for tpu_custom_call.1']
    #allocation12 [shape = 'u8[131072]{0}', space=vmem, size = 0x20000, scoped, tag = 'input window, operand 2']
    #allocation13 [shape = 'u8[2048]{0}', space=vmem, size = 0x800, scoped, tag = 'input window, operand 3']
    #allocation14 [shape = 's32[2]{0}', space=sflag, size = 0x8, scoped, tag = 'scoped memory for tpu_custom_call.1']
    #allocation15 [shape = 'u8[512]{0}', space=vmem, size = 0x400, scoped, tag = 'input window, operand 4, single buffered']
    #allocation16 [shape = 'u8[2048]{0}', space=vmem, size = 0x800, scoped, tag = 'input window, operand 6']
    #allocation17 [shape = 's32[2]{0}', space=sflag, size = 0x8, scoped, tag = 'scoped memory for tpu_custom_call.1']
    #allocation18 [shape = 'u8[131072]{0}', space=vmem, size = 0x20000, scoped, tag = 'output window, operand 0']
    #allocation19 [shape = 'u8[131072]{0}', space=vmem, size = 0x20000, scoped, tag = 'output window, operand 1']
    #allocation20 [shape = 's32[2]{0}', space=sflag, size = 0x8, scoped, tag = 'scoped memory for tpu_custom_call.1']
    #allocation21 [shape = 'u8[8192]{0}', space=vmem, size = 0x2000, scoped, tag = 'output window, operand 2']
    %15 = vsyncpa [#allocation8], 0
    %s16 = scalar_lea.sflag [#allocation8], 1
    %17 = vsyncpa %s16, 0
    %18 = vsyncpa [#allocation11], 0
    %s19 = scalar_lea.sflag [#allocation11], 1
    %20 = vsyncpa %s19, 0
    %21 = vsyncpa [#allocation14], 0
    %s22 = scalar_lea.sflag [#allocation14], 1
    %23 = vsyncpa %s22, 0
    %24 = vsyncpa [#allocation17], 0
    %s25 = scalar_lea.sflag [#allocation17], 1
    %26 = vsyncpa %s25, 0
    %27 = vsyncpa [#allocation9], 0
    %s28 = scalar_lea.sflag [#allocation9], 1
    %29 = vsyncpa %s28, 0
    %30 = vsyncpa [#allocation20], 0
    %s31 = scalar_lea.sflag [#allocation20], 1
    %32 = vsyncpa %s31, 0
    loop: start=0, step=1, limit=6
    $region2: #{tpu_custom_call.1} parent=1 // loop_pre_header
      _
    $region3: #{tpu_custom_call.1} parent=1 // loop_header
      %s34 = sphi 0, %s38
      %p35 = scmp.ge.s32.totalorder %s34, 6
      %s41 = sphi 0, %s53
      %s42 = sphi 0, %s49
      %s43 = sphi 0, %s41
      %s44 = sphi 0, %s42
      %s45 = sphi 0, %s43
      %s46 = sphi 0, %s44
      %s56 = sphi 0, %s58
      %s59 = sphi 0, %s56
      %s60 = sphi 0, %s59
      %s76 = sphi 0, %s60
      %s82 = sphi 0, %s84
      %s85 = sphi 0, %s82
      %s86 = sphi 0, %s85
      %s102 = sphi 0, %s86
      %s108 = sphi 0, %s110
      %s111 = sphi 0, %s108
      %s112 = sphi 0, %s111
      %s128 = sphi 0, %s112
      %s134 = sphi 0, %s136
      %s137 = sphi 0, %s134
      %s138 = sphi 0, %s137
      %s154 = sphi 0, %s138
      %s158 = sphi 0, %s158
      %s160 = sphi 0, %s158
      %s161 = sphi 0, %s160
      %s175 = sphi 0, %s161
      %s181 = sphi 0, %s183
      %s184 = sphi 0, %s181
      %s185 = sphi 0, %s184
      %s201 = sphi 0, %s185
      %s207 = sphi 0, %s209
      %s210 = sphi 0, %s207
      %s211 = sphi 0, %s210
      %s227 = sphi 0, %s211
      %s233 = sphi 0, %s235
      %s236 = sphi 0, %s233
      %s237 = sphi 0, %s236
      %s253 = sphi 0, %s237
      %s261 = sphi 0, %s263
      %s264 = sphi 0, %s261
      %s265 = sphi 0, %s264
      %s281 = sphi 0, %s265
      %s287 = sphi 0, %s289
      %s290 = sphi 0, %s287
      %s291 = sphi 0, %s290
      %s307 = sphi 0, %s291
    $region4: #{tpu_custom_call.1} parent=1 // loop_header_branch
      %37 = sbr.rel (%p35) target = $region8
    $region5: #{tpu_custom_call.1} parent=1 // loop_body
      %s39 = ssub.s32 %s34, 1
      %s40 = ssub.s32 %s34, 2
      %s47 = sadd.s32 1, %s42
      %p48 = scmp.ge.s32.totalorder %s47, 2
      %s49 = scalar_select %p48, 0, %s47
      %s50 = sadd.s32 1, %s41
      %s51 = scalar_select %p48, %s50, %s41
      %p52 = scmp.ge.s32.totalorder %s51, 2
      %s53 = scalar_select %p52, 0, %s51
      %s54 = ssub.s32 %s41, %s53
      %p55 = scmp.eq.s32.totalorder %s54, 0
      %s57 = sadd.s32 %s56, 1
      %s58 = scalar_select %p55, %s56, %s57
      %p61 = pneg %p55
      %p62 = scmp.eq.s32.totalorder %s34, 3
      %p63 = por %p61, %p62
      %p64 = scmp.ne.s32.totalorder %s56, %s59
      %p65 = scmp.eq.s32.totalorder %s34, 0
      %p66 = por %p64, %p65
      %p67 = scmp.ne.s32.totalorder %s56, %s59
      %p68 = scmp.eq.s32.totalorder %s39, 3
      %p69 = por %p67, %p68
      %p70 = scmp.ne.s32.totalorder %s59, %s60
      %p71 = scmp.eq.s32.totalorder %s39, 0
      %p72 = por %p70, %p71
      %p73 = scmp.ne.s32.totalorder %s59, %s60
      %p74 = scmp.eq.s32.totalorder %s40, 3
      %p75 = por %p73, %p74
      %p77 = scmp.ne.s32.totalorder %s60, %s76
      %p78 = scmp.eq.s32.totalorder %s40, 0
      %p79 = por %p77, %p78
      %s80 = ssub.s32 %s42, %s49
      %p81 = scmp.eq.s32.totalorder %s80, 0
      %s83 = sadd.s32 %s82, 1
      %s84 = scalar_select %p81, %s82, %s83
      %p87 = pneg %p81
      %p88 = scmp.eq.s32.totalorder %s34, 3
      %p89 = por %p87, %p88
      %p90 = scmp.ne.s32.totalorder %s82, %s85
      %p91 = scmp.eq.s32.totalorder %s34, 0
      %p92 = por %p90, %p91
      %p93 = scmp.ne.s32.totalorder %s82, %s85
      %p94 = scmp.eq.s32.totalorder %s39, 3
      %p95 = por %p93, %p94
      %p96 = scmp.ne.s32.totalorder %s85, %s86
      %p97 = scmp.eq.s32.totalorder %s39, 0
      %p98 = por %p96, %p97
      %p99 = scmp.ne.s32.totalorder %s85, %s86
      %p100 = scmp.eq.s32.totalorder %s40, 3
      %p101 = por %p99, %p100
      %p103 = scmp.ne.s32.totalorder %s86, %s102
      %p104 = scmp.eq.s32.totalorder %s40, 0
      %p105 = por %p103, %p104
      %s106 = ssub.s32 %s42, %s49
      %p107 = scmp.eq.s32.totalorder %s106, 0
      %s109 = sadd.s32 %s108, 1
      %s110 = scalar_select %p107, %s108, %s109
      %p113 = pneg %p107
      %p114 = scmp.eq.s32.totalorder %s34, 3
      %p115 = por %p113, %p114
      %p116 = scmp.ne.s32.totalorder %s108, %s111
      %p117 = scmp.eq.s32.totalorder %s34, 0
      %p118 = por %p116, %p117
      %p119 = scmp.ne.s32.totalorder %s108, %s111
      %p120 = scmp.eq.s32.totalorder %s39, 3
      %p121 = por %p119, %p120
      %p122 = scmp.ne.s32.totalorder %s111, %s112
      %p123 = scmp.eq.s32.totalorder %s39, 0
      %p124 = por %p122, %p123
      %p125 = scmp.ne.s32.totalorder %s111, %s112
      %p126 = scmp.eq.s32.totalorder %s40, 3
      %p127 = por %p125, %p126
      %p129 = scmp.ne.s32.totalorder %s112, %s128
      %p130 = scmp.eq.s32.totalorder %s40, 0
      %p131 = por %p129, %p130
      %s132 = ssub.s32 %s42, %s49
      %p133 = scmp.eq.s32.totalorder %s132, 0
      %s135 = sadd.s32 %s134, 1
      %s136 = scalar_select %p133, %s134, %s135
      %p139 = pneg %p133
      %p140 = scmp.eq.s32.totalorder %s34, 3
      %p141 = por %p139, %p140
      %p142 = scmp.ne.s32.totalorder %s134, %s137
      %p143 = scmp.eq.s32.totalorder %s34, 0
      %p144 = por %p142, %p143
      %p145 = scmp.ne.s32.totalorder %s134, %s137
      %p146 = scmp.eq.s32.totalorder %s39, 3
      %p147 = por %p145, %p146
      %p148 = scmp.ne.s32.totalorder %s137, %s138
      %p149 = scmp.eq.s32.totalorder %s39, 0
      %p150 = por %p148, %p149
      %p151 = scmp.ne.s32.totalorder %s137, %s138
      %p152 = scmp.eq.s32.totalorder %s40, 3
      %p153 = por %p151, %p152
      %p155 = scmp.ne.s32.totalorder %s138, %s154
      %p156 = scmp.eq.s32.totalorder %s40, 0
      %p157 = por %p155, %p156
      %s159 = sadd.s32 %s158, 1
      %p162 = scmp.eq.s32.totalorder %s34, 3
      %p163 = scmp.ne.s32.totalorder %s158, %s160
      %p164 = scmp.eq.s32.totalorder %s34, 0
      %p165 = por %p163, %p164
      %p166 = scmp.ne.s32.totalorder %s158, %s160
      %p167 = scmp.eq.s32.totalorder %s39, 3
      %p168 = por %p166, %p167
      %p169 = scmp.ne.s32.totalorder %s160, %s161
      %p170 = scmp.eq.s32.totalorder %s39, 0
      %p171 = por %p169, %p170
      %p172 = scmp.ne.s32.totalorder %s160, %s161
      %p173 = scmp.eq.s32.totalorder %s40, 3
      %p174 = por %p172, %p173
      %p176 = scmp.ne.s32.totalorder %s161, %s175
      %p177 = scmp.eq.s32.totalorder %s40, 0
      %p178 = por %p176, %p177
      %s179 = ssub.s32 %s42, %s49
      %p180 = scmp.eq.s32.totalorder %s179, 0
      %s182 = sadd.s32 %s181, 1
      %s183 = scalar_select %p180, %s181, %s182
      %p186 = pneg %p180
      %p187 = scmp.eq.s32.totalorder %s34, 3
      %p188 = por %p186, %p187
      %p189 = scmp.ne.s32.totalorder %s181, %s184
      %p190 = scmp.eq.s32.totalorder %s34, 0
      %p191 = por %p189, %p190
      %p192 = scmp.ne.s32.totalorder %s181, %s184
      %p193 = scmp.eq.s32.totalorder %s39, 3
      %p194 = por %p192, %p193
      %p195 = scmp.ne.s32.totalorder %s184, %s185
      %p196 = scmp.eq.s32.totalorder %s39, 0
      %p197 = por %p195, %p196
      %p198 = scmp.ne.s32.totalorder %s184, %s185
      %p199 = scmp.eq.s32.totalorder %s40, 3
      %p200 = por %p198, %p199
      %p202 = scmp.ne.s32.totalorder %s185, %s201
      %p203 = scmp.eq.s32.totalorder %s40, 0
      %p204 = por %p202, %p203
      %s205 = ssub.s32 %s42, %s49
      %p206 = scmp.eq.s32.totalorder %s205, 0
      %s208 = sadd.s32 %s207, 1
      %s209 = scalar_select %p206, %s207, %s208
      %p212 = pneg %p206
      %p213 = scmp.eq.s32.totalorder %s34, 3
      %p214 = por %p212, %p213
      %p215 = scmp.ne.s32.totalorder %s207, %s210
      %p216 = scmp.eq.s32.totalorder %s34, 0
      %p217 = por %p215, %p216
      %p218 = scmp.ne.s32.totalorder %s207, %s210
      %p219 = scmp.eq.s32.totalorder %s39, 3
      %p220 = por %p218, %p219
      %p221 = scmp.ne.s32.totalorder %s210, %s211
      %p222 = scmp.eq.s32.totalorder %s39, 0
      %p223 = por %p221, %p222
      %p224 = scmp.ne.s32.totalorder %s210, %s211
      %p225 = scmp.eq.s32.totalorder %s40, 3
      %p226 = por %p224, %p225
      %p228 = scmp.ne.s32.totalorder %s211, %s227
      %p229 = scmp.eq.s32.totalorder %s40, 0
      %p230 = por %p228, %p229
      %s231 = ssub.s32 %s41, %s53
      %p232 = scmp.eq.s32.totalorder %s231, 0
      %s234 = sadd.s32 %s233, 1
      %s235 = scalar_select %p232, %s233, %s234
      %p238 = pneg %p232
      %p239 = scmp.eq.s32.totalorder %s34, 3
      %p240 = por %p238, %p239
      %p241 = scmp.ne.s32.totalorder %s233, %s236
      %p242 = scmp.eq.s32.totalorder %s34, 0
      %p243 = por %p241, %p242
      %p244 = scmp.ne.s32.totalorder %s233, %s236
      %p245 = scmp.eq.s32.totalorder %s39, 3
      %p246 = por %p244, %p245
      %p247 = scmp.ne.s32.totalorder %s236, %s237
      %p248 = scmp.eq.s32.totalorder %s39, 0
      %p249 = por %p247, %p248
      %p250 = scmp.ne.s32.totalorder %s236, %s237
      %p251 = scmp.eq.s32.totalorder %s40, 3
      %p252 = por %p250, %p251
      %p254 = scmp.ne.s32.totalorder %s237, %s253
      %p255 = scmp.eq.s32.totalorder %s40, 0
      %p256 = por %p254, %p255
      %s257 = ssub.s32 %s41, %s53
      %s258 = ssub.s32 %s42, %s49
      %s259 = sor.u32 %s257, %s258
      %p260 = scmp.eq.s32.totalorder %s259, 0
      %s262 = sadd.s32 %s261, 1
      %s263 = scalar_select %p260, %s261, %s262
      %p266 = pneg %p260
      %p267 = scmp.eq.s32.totalorder %s34, 3
      %p268 = por %p266, %p267
      %p269 = scmp.ne.s32.totalorder %s261, %s264
      %p270 = scmp.eq.s32.totalorder %s34, 0
      %p271 = por %p269, %p270
      %p272 = scmp.ne.s32.totalorder %s261, %s264
      %p273 = scmp.eq.s32.totalorder %s39, 3
      %p274 = por %p272, %p273
      %p275 = scmp.ne.s32.totalorder %s264, %s265
      %p276 = scmp.eq.s32.totalorder %s39, 0
      %p277 = por %p275, %p276
      %p278 = scmp.ne.s32.totalorder %s264, %s265
      %p279 = scmp.eq.s32.totalorder %s40, 3
      %p280 = por %p278, %p279
      %p282 = scmp.ne.s32.totalorder %s265, %s281
      %p283 = scmp.eq.s32.totalorder %s40, 0
      %p284 = por %p282, %p283
      %s285 = ssub.s32 %s41, %s53
      %p286 = scmp.eq.s32.totalorder %s285, 0
      %s288 = sadd.s32 %s287, 1
      %s289 = scalar_select %p286, %s287, %s288
      %p292 = pneg %p286
      %p293 = scmp.eq.s32.totalorder %s34, 3
      %p294 = por %p292, %p293
      %p295 = scmp.ne.s32.totalorder %s287, %s290
      %p296 = scmp.eq.s32.totalorder %s34, 0
      %p297 = por %p295, %p296
      %p298 = scmp.ne.s32.totalorder %s287, %s290
      %p299 = scmp.eq.s32.totalorder %s39, 3
      %p300 = por %p298, %p299
      %p301 = scmp.ne.s32.totalorder %s290, %s291
      %p302 = scmp.eq.s32.totalorder %s39, 0
      %p303 = por %p301, %p302
      %p304 = scmp.ne.s32.totalorder %s290, %s291
      %p305 = scmp.eq.s32.totalorder %s40, 3
      %p306 = por %p304, %p305
      %p308 = scmp.ne.s32.totalorder %s291, %s307
      %p309 = scmp.eq.s32.totalorder %s40, 0
      %p310 = por %p308, %p309
      %p311 = scmp.le.s32.totalorder 1, %s34
      %p312 = scmp.lt.s32.totalorder %s34, 5
      %p313 = pnand %p311, %p312
      %p314 = pneg %p313
      // Predicated region
      $region9: #{tpu_custom_call.1} parent=5 // pred_check
        _
      $region10: #{tpu_custom_call.1} parent=5 // pred_check_branch
        %316 = sbr.rel (%p313) target = $region12
      $region11: #{tpu_custom_call.1} parent=5 // pred_region
        %s317 = ssub.s32 %s34, 1
        // Predicated region
        $region13: #{tpu_custom_call.1} parent=11 // pred_check
          %p318 = pneg %p171
        $region14: #{tpu_custom_call.1} parent=11 // pred_check_branch
          %320 = sbr.rel (%p318) target = $region16
        $region15: #{tpu_custom_call.1} parent=11 // pred_region
          %322 = vsyncadd [#allocation14], 0
          %s324 = sshll.u32 %s4, 4
          %s325 = int_to_ptr.hbm [resolvable:$true] %s324
          %s326 = sshll.u32 [#allocation15], 4
          %s327 = int_to_ptr.vmem [resolvable:$true] %s326
          %329 = dma.hbm_to_vmem [thread:$0]  %s325, 16, %s327, [#allocation14]
        $region16: #{tpu_custom_call.1} parent=11 // pred_fallthru
          _
      $region12: #{tpu_custom_call.1} parent=5 // pred_fallthru
        _
      %p330 = scmp.lt.s32.totalorder %s34, 4
      // Predicated region
      $region17: #{tpu_custom_call.1} parent=5 // pred_check
        %p331 = pneg %p330
      $region18: #{tpu_custom_call.1} parent=5 // pred_check_branch
        %333 = sbr.rel (%p331) target = $region20
      $region19: #{tpu_custom_call.1} parent=5 // pred_region
        // Predicated region
        $region21: #{tpu_custom_call.1} parent=19 // pred_check
          %p334 = pneg %p66
        $region22: #{tpu_custom_call.1} parent=19 // pred_check_branch
          %336 = sbr.rel (%p334) target = $region24
        $region23: #{tpu_custom_call.1} parent=19 // pred_region
          %s337 = sand.u32 %s56, 1
          %s338 = scalar_lea.sflag [#allocation8], %s337
          %s339 = sand.u32 %s56, 1
          %s340 = smul.addr %s339, 128
          %s341 = scalar_lea.vmem [#allocation7], %s340
          %s342 = smul.u32 16, %s41
          %344 = vsyncadd %s338, 0
          %s345 = smul.addr %s342, 8
          %s346 = scalar_lea.hbm %s0, %s345
          %s347 = sshll.u32 %s346, 4
          %s348 = int_to_ptr.hbm [resolvable:$true] %s347
          %s349 = sshll.u32 %s341, 4
          %s350 = int_to_ptr.vmem [resolvable:$true] %s349
          %355 = dma.hbm_to_vmem [thread:$0]  %s348, 2048, %s350, %s338, 128, 128, 8
        $region24: #{tpu_custom_call.1} parent=19 // pred_fallthru
          _
        // Predicated region
        $region25: #{tpu_custom_call.1} parent=19 // pred_check
          %p356 = pneg %p92
        $region26: #{tpu_custom_call.1} parent=19 // pred_check_branch
          %358 = sbr.rel (%p356) target = $region28
        $region27: #{tpu_custom_call.1} parent=19 // pred_region
          %s359 = sand.u32 %s34, 1
          %s360 = scalar_lea.sflag [#allocation11], %s359
          %s361 = sand.u32 %s82, 1
          %s362 = smul.addr %s361, 128
          %s363 = scalar_lea.vmem [#allocation10], %s362
          %s364 = smul.u32 2, %s42
          %366 = vsyncadd %s360, 0
          %s367 = smul.addr %s364, 4
          %s368 = scalar_lea.hbm %s1, %s367
          %s369 = sshll.u32 %s368, 4
          %s370 = int_to_ptr.hbm [resolvable:$true] %s369
          %s371 = sshll.u32 %s363, 4
          %s372 = int_to_ptr.vmem [resolvable:$true] %s371
          %377 = dma.hbm_to_vmem [thread:$0]  %s370, 2048, %s372, %s360, 256, 128, 8
        $region28: #{tpu_custom_call.1} parent=19 // pred_fallthru
          _
        // Predicated region
        $region29: #{tpu_custom_call.1} parent=19 // pred_check
          %p378 = pneg %p118
        $region30: #{tpu_custom_call.1} parent=19 // pred_check_branch
          %380 = sbr.rel (%p378) target = $region32
        $region31: #{tpu_custom_call.1} parent=19 // pred_region
          %s381 = sand.u32 %s34, 1
          %s382 = scalar_lea.sflag [#allocation11], %s381
          %s383 = sand.u32 %s108, 1
          %s384 = smul.addr %s383, 128
          %s385 = scalar_lea.vmem [#allocation12], %s384
          %s386 = smul.u32 32, %s42
          %388 = vsyncadd %s382, 0
          %s389 = smul.addr %s386, 4
          %s390 = scalar_lea.hbm %s2, %s389
          %s391 = sshll.u32 %s390, 4
          %s392 = int_to_ptr.hbm [resolvable:$true] %s391
          %s393 = sshll.u32 %s385, 4
          %s394 = int_to_ptr.vmem [resolvable:$true] %s393
          %399 = dma.hbm_to_vmem [thread:$0]  %s392, 2048, %s394, %s382, 64, 64, 4
        $region32: #{tpu_custom_call.1} parent=19 // pred_fallthru
          _
        // Predicated region
        $region33: #{tpu_custom_call.1} parent=19 // pred_check
          %p400 = pneg %p144
        $region34: #{tpu_custom_call.1} parent=19 // pred_check_branch
          %402 = sbr.rel (%p400) target = $region36
        $region35: #{tpu_custom_call.1} parent=19 // pred_region
          %s403 = sand.u32 %s34, 1
          %s404 = scalar_lea.sflag [#allocation14], %s403
          %s405 = sand.u32 %s134, 1
          %s406 = smul.addr %s405, 2
          %s407 = scalar_lea.vmem [#allocation13], %s406
          %s408 = smul.u32 2, %s42
          %410 = vsyncadd %s404, 0
          %s411 = scalar_lea.hbm %s3, %s408
          %s413 = sshll.u32 %s411, 4
          %s414 = int_to_ptr.hbm [resolvable:$true] %s413
          %s415 = sshll.u32 %s407, 4
          %s416 = int_to_ptr.vmem [resolvable:$true] %s415
          %418 = dma.hbm_to_vmem [thread:$0]  %s414, 32, %s416, %s404
        $region36: #{tpu_custom_call.1} parent=19 // pred_fallthru
          _
        // Predicated region
        $region37: #{tpu_custom_call.1} parent=19 // pred_check
          %p419 = pneg %p191
        $region38: #{tpu_custom_call.1} parent=19 // pred_check_branch
          %421 = sbr.rel (%p419) target = $region40
        $region39: #{tpu_custom_call.1} parent=19 // pred_region
          %s422 = smul.u32 2, %s42
          %p423 = scmp.lt.s32.totalorder %s422, 3
          %s424 = scalar_select %p423, %s422, 3
          %s425 = scalar_lea.vmem %s5, %s424
          %s426 = smul.u32 2, %s42
        $region40: #{tpu_custom_call.1} parent=19 // pred_fallthru
          _
        // Predicated region
        $region41: #{tpu_custom_call.1} parent=19 // pred_check
          %p427 = pneg %p217
        $region42: #{tpu_custom_call.1} parent=19 // pred_check_branch
          %429 = sbr.rel (%p427) target = $region44
        $region43: #{tpu_custom_call.1} parent=19 // pred_region
          %s430 = sand.u32 %s207, 1
          %s431 = scalar_lea.sflag [#allocation17], %s430
          %s432 = sand.u32 %s207, 1
          %s433 = smul.addr %s432, 2
          %s434 = scalar_lea.vmem [#allocation16], %s433
          %s435 = smul.u32 2, %s42
          %437 = vsyncadd %s431, 0
          %s438 = scalar_lea.hbm %s6, %s435
          %s440 = sshll.u32 %s438, 4
          %s441 = int_to_ptr.hbm [resolvable:$true] %s440
          %s442 = sshll.u32 %s434, 4
          %s443 = int_to_ptr.vmem [resolvable:$true] %s442
          %445 = dma.hbm_to_vmem [thread:$0]  %s441, 32, %s443, %s431
        $region44: #{tpu_custom_call.1} parent=19 // pred_fallthru
          _
      $region20: #{tpu_custom_call.1} parent=5 // pred_fallthru
        _
      %p446 = scmp.le.s32.totalorder 1, %s34
      %p447 = scmp.lt.s32.totalorder %s34, 5
      %p448 = pnand %p446, %p447
      %p449 = pneg %p448
      // Predicated region
      $region45: #{tpu_custom_call.1} parent=5 // pred_check
        _
      $region46: #{tpu_custom_call.1} parent=5 // pred_check_branch
        %451 = sbr.rel (%p448) target = $region48
      $region47: #{tpu_custom_call.1} parent=5 // pred_region
        %s452 = ssub.s32 %s34, 1
        %s453 = sand.u32 %s59, 1
        %s454 = scalar_lea.sflag [#allocation8], %s453
        %s455 = sand.u32 %s59, 1
        %s456 = smul.addr %s455, 128
        %s457 = scalar_lea.vmem [#allocation7], %s456
        // Predicated region
        $region49: #{tpu_custom_call.1} parent=47 // pred_check
          %p458 = pneg %p72
        $region50: #{tpu_custom_call.1} parent=47 // pred_check_branch
          %460 = sbr.rel (%p458) target = $region52
        $region51: #{tpu_custom_call.1} parent=47 // pred_region
          %462 = dma.done %s454, 2048
        $region52: #{tpu_custom_call.1} parent=47 // pred_fallthru
          _
        %s463 = sand.u32 %s39, 1
        %s464 = scalar_lea.sflag [#allocation11], %s463
        %s465 = sand.u32 %s85, 1
        %s466 = smul.addr %s465, 128
        %s467 = scalar_lea.vmem [#allocation10], %s466
        // Predicated region
        $region53: #{tpu_custom_call.1} parent=47 // pred_check
          %p468 = pneg %p98
        $region54: #{tpu_custom_call.1} parent=47 // pred_check_branch
          %470 = sbr.rel (%p468) target = $region56
        $region55: #{tpu_custom_call.1} parent=47 // pred_region
          %472 = dma.done %s464, 2048
        $region56: #{tpu_custom_call.1} parent=47 // pred_fallthru
          _
        %s473 = sand.u32 %s39, 1
        %s474 = scalar_lea.sflag [#allocation11], %s473
        %s475 = sand.u32 %s111, 1
        %s476 = smul.addr %s475, 128
        %s477 = scalar_lea.vmem [#allocation12], %s476
        // Predicated region
        $region57: #{tpu_custom_call.1} parent=47 // pred_check
          %p478 = pneg %p124
        $region58: #{tpu_custom_call.1} parent=47 // pred_check_branch
          %480 = sbr.rel (%p478) target = $region60
        $region59: #{tpu_custom_call.1} parent=47 // pred_region
          %482 = dma.done %s474, 2048
        $region60: #{tpu_custom_call.1} parent=47 // pred_fallthru
          _
        %s483 = sand.u32 %s39, 1
        %s484 = scalar_lea.sflag [#allocation14], %s483
        %s485 = sand.u32 %s137, 1
        %s486 = smul.addr %s485, 2
        %s487 = scalar_lea.vmem [#allocation13], %s486
        // Predicated region
        $region61: #{tpu_custom_call.1} parent=47 // pred_check
          %p488 = pneg %p150
        $region62: #{tpu_custom_call.1} parent=47 // pred_check_branch
          %490 = sbr.rel (%p488) target = $region64
        $region63: #{tpu_custom_call.1} parent=47 // pred_region
          %492 = dma.done %s484, 32
        $region64: #{tpu_custom_call.1} parent=47 // pred_fallthru
          _
        // Predicated region
        $region65: #{tpu_custom_call.1} parent=47 // pred_check
          %p493 = pneg %p171
        $region66: #{tpu_custom_call.1} parent=47 // pred_check_branch
          %495 = sbr.rel (%p493) target = $region68
        $region67: #{tpu_custom_call.1} parent=47 // pred_region
          %497 = dma.done [#allocation14], 16
        $region68: #{tpu_custom_call.1} parent=47 // pred_fallthru
          _
        %s498 = sand.u32 %s210, 1
        %s499 = scalar_lea.sflag [#allocation17], %s498
        %s500 = sand.u32 %s210, 1
        %s501 = smul.addr %s500, 2
        %s502 = scalar_lea.vmem [#allocation16], %s501
        // Predicated region
        $region69: #{tpu_custom_call.1} parent=47 // pred_check
          %p503 = pneg %p223
        $region70: #{tpu_custom_call.1} parent=47 // pred_check_branch
          %505 = sbr.rel (%p503) target = $region72
        $region71: #{tpu_custom_call.1} parent=47 // pred_region
          %507 = dma.done %s499, 32
        $region72: #{tpu_custom_call.1} parent=47 // pred_fallthru
          _
        %s508 = sand.u32 %s59, 1
        %s509 = scalar_lea.sflag [#allocation8], %s508
        %s510 = sand.u32 %s59, 1
        %s511 = smul.addr %s510, 128
        %s512 = scalar_lea.vmem [#allocation7], %s511
        %p513 = pneg %p72
        %p514 = pneg %p69
        %s515 = sand.u32 %s39, 1
        %s516 = scalar_lea.sflag [#allocation11], %s515
        %s517 = sand.u32 %s85, 1
        %s518 = smul.addr %s517, 128
        %s519 = scalar_lea.vmem [#allocation10], %s518
        %p520 = pneg %p98
        %p521 = pneg %p95
        %s522 = sand.u32 %s39, 1
        %s523 = scalar_lea.sflag [#allocation11], %s522
        %s524 = sand.u32 %s111, 1
        %s525 = smul.addr %s524, 128
        %s526 = scalar_lea.vmem [#allocation12], %s525
        %p527 = pneg %p124
        %p528 = pneg %p121
        %s529 = sand.u32 %s39, 1
        %s530 = scalar_lea.sflag [#allocation14], %s529
        %s531 = sand.u32 %s137, 1
        %s532 = smul.addr %s531, 2
        %s533 = scalar_lea.vmem [#allocation13], %s532
        %p534 = pneg %p150
        %p535 = pneg %p147
        %p536 = pneg %p171
        %p537 = pneg %p168
        %s538 = smul.u32 2, %s44
        %p539 = scmp.lt.s32.totalorder %s538, 3
        %s540 = scalar_select %p539, %s538, 3
        %s541 = scalar_lea.vmem %s5, %s540
        %p542 = pneg %p197
        %p543 = pneg %p194
        %s544 = sand.u32 %s210, 1
        %s545 = scalar_lea.sflag [#allocation17], %s544
        %s546 = sand.u32 %s210, 1
        %s547 = smul.addr %s546, 2
        %s548 = scalar_lea.vmem [#allocation16], %s547
        %p549 = pneg %p223
        %p550 = pneg %p220
        %p551 = pneg %p249
        %p552 = pneg %p246
        %s553 = sand.u32 %s236, 1
        %s554 = scalar_lea.sflag [#allocation9], %s553
        %s555 = sand.u32 %s236, 1
        %s556 = smul.addr %s555, 128
        %s557 = scalar_lea.vmem [#allocation18], %s556
        %p558 = pneg %p277
        %p559 = pneg %p274
        %s560 = sand.u32 %s39, 1
        %s561 = scalar_lea.sflag [#allocation20], %s560
        %s562 = sand.u32 %s264, 1
        %s563 = smul.addr %s562, 128
        %s564 = scalar_lea.vmem [#allocation19], %s563
        %p565 = pneg %p303
        %p566 = pneg %p300
        %s567 = sand.u32 %s39, 1
        %s568 = scalar_lea.sflag [#allocation20], %s567
        %s569 = sand.u32 %s290, 1
        %s570 = smul.addr %s569, 8
        %s571 = scalar_lea.vmem [#allocation21], %s570
        %s572 = smul.u32 16, %s43
        %s573 = smul.u32 2, %s44
        %s574 = smul.u32 32, %s44
        %s575 = smul.u32 2, %s44
        %s576 = smul.u32 2, %s44
        %p577 = scmp.lt.s32.totalorder %s576, 3
        %s578 = scalar_select %p577, %s576, 3
        %s579 = scalar_lea.vmem %s5, %s578
        %s580 = smul.u32 2, %s44
        %s581 = smul.u32 2, %s44
        %s582 = smul.u32 16, %s43
        %s583 = smul.u32 16, %s43
        %s584 = smul.u32 2, %s44
        %s585 = smul.u32 %s43, 128
        %v586 = vlaneseq
        %v587 = vshrl.u32 %v586, 7
        %v588 = vadd.s32 %v587, 8
        %v589 = vadd.s32 %v587, 16
        %v590 = vadd.s32 %v587, 24
        %v591 = vadd.s32 %v587, 32
        %v592 = vadd.s32 %v587, 40
        %v593 = vadd.s32 %v587, 48
        %v594 = vadd.s32 %v587, 56
        %v595 = vadd.s32 %v587, 64
        %v596 = vadd.s32 %v587, 72
        %v597 = vadd.s32 %v587, 80
        %v598 = vadd.s32 %v587, 88
        %v599 = vadd.s32 %v587, 96
        %v600 = vadd.s32 %v587, 104
        %v601 = vadd.s32 %v587, 112
        %v602 = vadd.s32 %v587, 120
        %v603 = vstv %s585
        %v604 = vadd.s32 %v603, %v587
        %v605 = vadd.s32 %v603, %v588
        %v606 = vadd.s32 %v603, %v589
        %v607 = vadd.s32 %v603, %v590
        %v608 = vadd.s32 %v603, %v591
        %v609 = vadd.s32 %v603, %v592
        %v610 = vadd.s32 %v603, %v593
        %v611 = vadd.s32 %v603, %v594
        %v612 = vadd.s32 %v603, %v595
        %v613 = vadd.s32 %v603, %v596
        %v614 = vadd.s32 %v603, %v597
        %v615 = vadd.s32 %v603, %v598
        %v616 = vadd.s32 %v603, %v599
        %v617 = vadd.s32 %v603, %v600
        %v618 = vadd.s32 %v603, %v601
        %v619 = vadd.s32 %v603, %v602
        %vm620 = vcmp.lt.s32.totalorder %v604, 200
        %vm621 = vcmp.lt.s32.totalorder %v605, 200
        %vm622 = vcmp.lt.s32.totalorder %v606, 200
        %vm623 = vcmp.lt.s32.totalorder %v607, 200
        %vm624 = vcmp.lt.s32.totalorder %v608, 200
        %vm625 = vcmp.lt.s32.totalorder %v609, 200
        %vm626 = vcmp.lt.s32.totalorder %v610, 200
        %vm627 = vcmp.lt.s32.totalorder %v611, 200
        %vm628 = vcmp.lt.s32.totalorder %v612, 200
        %vm629 = vcmp.lt.s32.totalorder %v613, 200
        %vm630 = vcmp.lt.s32.totalorder %v614, 200
        %vm631 = vcmp.lt.s32.totalorder %v615, 200
        %vm632 = vcmp.lt.s32.totalorder %v616, 200
        %vm633 = vcmp.lt.s32.totalorder %v617, 200
        %vm634 = vcmp.lt.s32.totalorder %v618, 200
        %vm635 = vcmp.lt.s32.totalorder %v619, 200
        %p636 = scmp.eq.s32.totalorder %s44, 0
        // Predicated region
        $region73: #{tpu_custom_call.1} parent=47 // pred_check
          %p637 = pneg %p636
        $region74: #{tpu_custom_call.1} parent=47 // pred_check_branch
          %639 = sbr.rel (%p637) target = $region76
        $region75: #{tpu_custom_call.1} parent=47 // pred_region
          %v640 = vld [vmem:[%s457] sm:$0xff]
          %v641 = vld [vmem:[%s457 + $0x8] sm:$0xff]
          %v642 = vld [vmem:[%s457 + $0x10] sm:$0xff]
          %v643 = vld [vmem:[%s457 + $0x18] sm:$0xff]
          %v644 = vld [vmem:[%s457 + $0x20] sm:$0xff]
          %v645 = vld [vmem:[%s457 + $0x28] sm:$0xff]
          %v646 = vld [vmem:[%s457 + $0x30] sm:$0xff]
          %v647 = vld [vmem:[%s457 + $0x38] sm:$0xff]
          %v648 = vld [vmem:[%s457 + $0x40] sm:$0xff]
          %v649 = vld [vmem:[%s457 + $0x48] sm:$0xff]
          %v650 = vld [vmem:[%s457 + $0x50] sm:$0xff]
          %v651 = vld [vmem:[%s457 + $0x58] sm:$0xff]
          %v652 = vld [vmem:[%s457 + $0x60] sm:$0xff]
          %v653 = vld [vmem:[%s457 + $0x68] sm:$0xff]
          %v654 = vld [vmem:[%s457 + $0x70] sm:$0xff]
          %v655 = vld [vmem:[%s457 + $0x78] sm:$0xff]
          %656 = vadd.xlane.f32.xlu0 %v640
          %v657 = vpop.xlane.xlu0 %656
          %658 = vadd.xlane.f32.xlu0 %v641
          %v659 = vpop.xlane.xlu0 %658
          %660 = vadd.xlane.f32.xlu0 %v642
          %v661 = vpop.xlane.xlu0 %660
          %662 = vadd.xlane.f32.xlu0 %v643
          %v663 = vpop.xlane.xlu0 %662
          %664 = vadd.xlane.f32.xlu0 %v644
          %v665 = vpop.xlane.xlu0 %664
          %666 = vadd.xlane.f32.xlu0 %v645
          %v667 = vpop.xlane.xlu0 %666
          %668 = vadd.xlane.f32.xlu0 %v646
          %v669 = vpop.xlane.xlu0 %668
          %670 = vadd.xlane.f32.xlu0 %v647
          %v671 = vpop.xlane.xlu0 %670
          %672 = vadd.xlane.f32.xlu0 %v648
          %v673 = vpop.xlane.xlu0 %672
          %674 = vadd.xlane.f32.xlu0 %v649
          %v675 = vpop.xlane.xlu0 %674
          %676 = vadd.xlane.f32.xlu0 %v650
          %v677 = vpop.xlane.xlu0 %676
          %678 = vadd.xlane.f32.xlu0 %v651
          %v679 = vpop.xlane.xlu0 %678
          %680 = vadd.xlane.f32.xlu0 %v652
          %v681 = vpop.xlane.xlu0 %680
          %682 = vadd.xlane.f32.xlu0 %v653
          %v683 = vpop.xlane.xlu0 %682
          %684 = vadd.xlane.f32.xlu0 %v654
          %v685 = vpop.xlane.xlu0 %684
          %686 = vadd.xlane.f32.xlu0 %v655
          %v687 = vpop.xlane.xlu0 %686
          %v688 = vrcp.pop 128.0
          %v689 = vmul.f32 128.0, %v688
          %v690 = vsub.f32 1.0, %v689
          %v691 = vmul.f32 %v688, %v690
          %v692 = vadd.f32 %v688, %v691
          %vm693 = vweird.f32 %v688
          %v694 = vsel %vm693, %v688, %v692
          %v695 = vmul.f32 %v657, %v694
          %v696 = vmul.f32 %v659, %v694
          %v697 = vmul.f32 %v661, %v694
          %v698 = vmul.f32 %v663, %v694
          %v699 = vmul.f32 %v665, %v694
          %v700 = vmul.f32 %v667, %v694
          %v701 = vmul.f32 %v669, %v694
          %v702 = vmul.f32 %v671, %v694
          %v703 = vmul.f32 %v673, %v694
          %v704 = vmul.f32 %v675, %v694
          %v705 = vmul.f32 %v677, %v694
          %v706 = vmul.f32 %v679, %v694
          %v707 = vmul.f32 %v681, %v694
          %v708 = vmul.f32 %v683, %v694
          %v709 = vmul.f32 %v685, %v694
          %v710 = vmul.f32 %v687, %v694
          %v711 = vsub.f32 %v640, %v695
          %v712 = vsub.f32 %v641, %v696
          %v713 = vsub.f32 %v642, %v697
          %v714 = vsub.f32 %v643, %v698
          %v715 = vsub.f32 %v644, %v699
          %v716 = vsub.f32 %v645, %v700
          %v717 = vsub.f32 %v646, %v701
          %v718 = vsub.f32 %v647, %v702
          %v719 = vsub.f32 %v648, %v703
          %v720 = vsub.f32 %v649, %v704
          %v721 = vsub.f32 %v650, %v705
          %v722 = vsub.f32 %v651, %v706
          %v723 = vsub.f32 %v652, %v707
          %v724 = vsub.f32 %v653, %v708
          %v725 = vsub.f32 %v654, %v709
          %v726 = vsub.f32 %v655, %v710
          %v727 = vmul.f32 %v711, %v711
          %v728 = vmul.f32 %v712, %v712
          %v729 = vmul.f32 %v713, %v713
          %v730 = vmul.f32 %v714, %v714
          %v731 = vmul.f32 %v715, %v715
          %v732 = vmul.f32 %v716, %v716
          %v733 = vmul.f32 %v717, %v717
          %v734 = vmul.f32 %v718, %v718
          %v735 = vmul.f32 %v719, %v719
          %v736 = vmul.f32 %v720, %v720
          %v737 = vmul.f32 %v721, %v721
          %v738 = vmul.f32 %v722, %v722
          %v739 = vmul.f32 %v723, %v723
          %v740 = vmul.f32 %v724, %v724
          %v741 = vmul.f32 %v725, %v725
          %v742 = vmul.f32 %v726, %v726
          %743 = vadd.xlane.f32.xlu0 %v727
          %v744 = vpop.xlane.xlu0 %743
          %745 = vadd.xlane.f32.xlu0 %v728
          %v746 = vpop.xlane.xlu0 %745
          %747 = vadd.xlane.f32.xlu0 %v729
          %v748 = vpop.xlane.xlu0 %747
          %749 = vadd.xlane.f32.xlu0 %v730
          %v750 = vpop.xlane.xlu0 %749
          %751 = vadd.xlane.f32.xlu0 %v731
          %v752 = vpop.xlane.xlu0 %751
          %753 = vadd.xlane.f32.xlu0 %v732
          %v754 = vpop.xlane.xlu0 %753
          %755 = vadd.xlane.f32.xlu0 %v733
          %v756 = vpop.xlane.xlu0 %755
          %757 = vadd.xlane.f32.xlu0 %v734
          %v758 = vpop.xlane.xlu0 %757
          %759 = vadd.xlane.f32.xlu0 %v735
          %v760 = vpop.xlane.xlu0 %759
          %761 = vadd.xlane.f32.xlu0 %v736
          %v762 = vpop.xlane.xlu0 %761
          %763 = vadd.xlane.f32.xlu0 %v737
          %v764 = vpop.xlane.xlu0 %763
          %765 = vadd.xlane.f32.xlu0 %v738
          %v766 = vpop.xlane.xlu0 %765
          %767 = vadd.xlane.f32.xlu0 %v739
          %v768 = vpop.xlane.xlu0 %767
          %769 = vadd.xlane.f32.xlu0 %v740
          %v770 = vpop.xlane.xlu0 %769
          %771 = vadd.xlane.f32.xlu0 %v741
          %v772 = vpop.xlane.xlu0 %771
          %773 = vadd.xlane.f32.xlu0 %v742
          %v774 = vpop.xlane.xlu0 %773
          %v775 = vrcp.pop 127.0
          %v776 = vmul.f32 127.0, %v775
          %v777 = vsub.f32 1.0, %v776
          %v778 = vmul.f32 %v775, %v777
          %v779 = vadd.f32 %v775, %v778
          %vm780 = vweird.f32 %v775
          %v781 = vsel %vm780, %v775, %v779
          %v782 = vmul.f32 %v744, %v781
          %v783 = vmul.f32 %v746, %v781
          %v784 = vmul.f32 %v748, %v781
          %v785 = vmul.f32 %v750, %v781
          %v786 = vmul.f32 %v752, %v781
          %v787 = vmul.f32 %v754, %v781
          %v788 = vmul.f32 %v756, %v781
          %v789 = vmul.f32 %v758, %v781
          %v790 = vmul.f32 %v760, %v781
          %v791 = vmul.f32 %v762, %v781
          %v792 = vmul.f32 %v764, %v781
          %v793 = vmul.f32 %v766, %v781
          %v794 = vmul.f32 %v768, %v781
          %v795 = vmul.f32 %v770, %v781
          %v796 = vmul.f32 %v772, %v781
          %v797 = vmul.f32 %v774, %v781
          %v798 = vrsqrt.pop %v782
          %v799 = vmul.f32 %v798, %v782
          %v800 = vmul.f32 %v799, %v798
          %v801 = vmul.f32 0.5, %v800
          %v802 = vsub.f32 1.5, %v801
          %v803 = vmul.f32 %v798, %v802
          %v804 = vmul.f32 %v782, %v803
          %vm805 = vcmp.eq.f32.partialorder %v782, inf
          %v806 = vsel %vm805, %v782, %v804
          %vm807 = vcmp.eq.f32.partialorder %v782, 0.0
          %v808 = vand.u32 %v782, 2147483648
          %v809 = vsel %vm807, %v808, %v806
          %v810 = vrsqrt.pop %v783
          %v811 = vmul.f32 %v810, %v783
          %v812 = vmul.f32 %v811, %v810
          %v813 = vmul.f32 0.5, %v812
          %v814 = vsub.f32 1.5, %v813
          %v815 = vmul.f32 %v810, %v814
          %v816 = vmul.f32 %v783, %v815
          %vm817 = vcmp.eq.f32.partialorder %v783, inf
          %v818 = vsel %vm817, %v783, %v816
          %vm819 = vcmp.eq.f32.partialorder %v783, 0.0
          %v820 = vand.u32 %v783, 2147483648
          %v821 = vsel %vm819, %v820, %v818
          %v822 = vrsqrt.pop %v784
          %v823 = vmul.f32 %v822, %v784
          %v824 = vmul.f32 %v823, %v822
          %v825 = vmul.f32 0.5, %v824
          %v826 = vsub.f32 1.5, %v825
          %v827 = vmul.f32 %v822, %v826
          %v828 = vmul.f32 %v784, %v827
          %vm829 = vcmp.eq.f32.partialorder %v784, inf
          %v830 = vsel %vm829, %v784, %v828
          %vm831 = vcmp.eq.f32.partialorder %v784, 0.0
          %v832 = vand.u32 %v784, 2147483648
          %v833 = vsel %vm831, %v832, %v830
          %v834 = vrsqrt.pop %v785
          %v835 = vmul.f32 %v834, %v785
          %v836 = vmul.f32 %v835, %v834
          %v837 = vmul.f32 0.5, %v836
          %v838 = vsub.f32 1.5, %v837
          %v839 = vmul.f32 %v834, %v838
          %v840 = vmul.f32 %v785, %v839
          %vm841 = vcmp.eq.f32.partialorder %v785, inf
          %v842 = vsel %vm841, %v785, %v840
          %vm843 = vcmp.eq.f32.partialorder %v785, 0.0
          %v844 = vand.u32 %v785, 2147483648
          %v845 = vsel %vm843, %v844, %v842
          %v846 = vrsqrt.pop %v786
          %v847 = vmul.f32 %v846, %v786
          %v848 = vmul.f32 %v847, %v846
          %v849 = vmul.f32 0.5, %v848
          %v850 = vsub.f32 1.5, %v849
          %v851 = vmul.f32 %v846, %v850
          %v852 = vmul.f32 %v786, %v851
          %vm853 = vcmp.eq.f32.partialorder %v786, inf
          %v854 = vsel %vm853, %v786, %v852
          %vm855 = vcmp.eq.f32.partialorder %v786, 0.0
          %v856 = vand.u32 %v786, 2147483648
          %v857 = vsel %vm855, %v856, %v854
          %v858 = vrsqrt.pop %v787
          %v859 = vmul.f32 %v858, %v787
          %v860 = vmul.f32 %v859, %v858
          %v861 = vmul.f32 0.5, %v860
          %v862 = vsub.f32 1.5, %v861
          %v863 = vmul.f32 %v858, %v862
          %v864 = vmul.f32 %v787, %v863
          %vm865 = vcmp.eq.f32.partialorder %v787, inf
          %v866 = vsel %vm865, %v787, %v864
          %vm867 = vcmp.eq.f32.partialorder %v787, 0.0
          %v868 = vand.u32 %v787, 2147483648
          %v869 = vsel %vm867, %v868, %v866
          %v870 = vrsqrt.pop %v788
          %v871 = vmul.f32 %v870, %v788
          %v872 = vmul.f32 %v871, %v870
          %v873 = vmul.f32 0.5, %v872
          %v874 = vsub.f32 1.5, %v873
          %v875 = vmul.f32 %v870, %v874
          %v876 = vmul.f32 %v788, %v875
          %vm877 = vcmp.eq.f32.partialorder %v788, inf
          %v878 = vsel %vm877, %v788, %v876
          %vm879 = vcmp.eq.f32.partialorder %v788, 0.0
          %v880 = vand.u32 %v788, 2147483648
          %v881 = vsel %vm879, %v880, %v878
          %v882 = vrsqrt.pop %v789
          %v883 = vmul.f32 %v882, %v789
          %v884 = vmul.f32 %v883, %v882
          %v885 = vmul.f32 0.5, %v884
          %v886 = vsub.f32 1.5, %v885
          %v887 = vmul.f32 %v882, %v886
          %v888 = vmul.f32 %v789, %v887
          %vm889 = vcmp.eq.f32.partialorder %v789, inf
          %v890 = vsel %vm889, %v789, %v888
          %vm891 = vcmp.eq.f32.partialorder %v789, 0.0
          %v892 = vand.u32 %v789, 2147483648
          %v893 = vsel %vm891, %v892, %v890
          %v894 = vrsqrt.pop %v790
          %v895 = vmul.f32 %v894, %v790
          %v896 = vmul.f32 %v895, %v894
          %v897 = vmul.f32 0.5, %v896
          %v898 = vsub.f32 1.5, %v897
          %v899 = vmul.f32 %v894, %v898
          %v900 = vmul.f32 %v790, %v899
          %vm901 = vcmp.eq.f32.partialorder %v790, inf
          %v902 = vsel %vm901, %v790, %v900
          %vm903 = vcmp.eq.f32.partialorder %v790, 0.0
          %v904 = vand.u32 %v790, 2147483648
          %v905 = vsel %vm903, %v904, %v902
          %v906 = vrsqrt.pop %v791
          %v907 = vmul.f32 %v906, %v791
          %v908 = vmul.f32 %v907, %v906
          %v909 = vmul.f32 0.5, %v908
          %v910 = vsub.f32 1.5, %v909
          %v911 = vmul.f32 %v906, %v910
          %v912 = vmul.f32 %v791, %v911
          %vm913 = vcmp.eq.f32.partialorder %v791, inf
          %v914 = vsel %vm913, %v791, %v912
          %vm915 = vcmp.eq.f32.partialorder %v791, 0.0
          %v916 = vand.u32 %v791, 2147483648
          %v917 = vsel %vm915, %v916, %v914
          %v918 = vrsqrt.pop %v792
          %v919 = vmul.f32 %v918, %v792
          %v920 = vmul.f32 %v919, %v918
          %v921 = vmul.f32 0.5, %v920
          %v922 = vsub.f32 1.5, %v921
          %v923 = vmul.f32 %v918, %v922
          %v924 = vmul.f32 %v792, %v923
          %vm925 = vcmp.eq.f32.partialorder %v792, inf
          %v926 = vsel %vm925, %v792, %v924
          %vm927 = vcmp.eq.f32.partialorder %v792, 0.0
          %v928 = vand.u32 %v792, 2147483648
          %v929 = vsel %vm927, %v928, %v926
          %v930 = vrsqrt.pop %v793
          %v931 = vmul.f32 %v930, %v793
          %v932 = vmul.f32 %v931, %v930
          %v933 = vmul.f32 0.5, %v932
          %v934 = vsub.f32 1.5, %v933
          %v935 = vmul.f32 %v930, %v934
          %v936 = vmul.f32 %v793, %v935
          %vm937 = vcmp.eq.f32.partialorder %v793, inf
          %v938 = vsel %vm937, %v793, %v936
          %vm939 = vcmp.eq.f32.partialorder %v793, 0.0
          %v940 = vand.u32 %v793, 2147483648
          %v941 = vsel %vm939, %v940, %v938
          %v942 = vrsqrt.pop %v794
          %v943 = vmul.f32 %v942, %v794
          %v944 = vmul.f32 %v943, %v942
          %v945 = vmul.f32 0.5, %v944
          %v946 = vsub.f32 1.5, %v945
          %v947 = vmul.f32 %v942, %v946
          %v948 = vmul.f32 %v794, %v947
          %vm949 = vcmp.eq.f32.partialorder %v794, inf
          %v950 = vsel %vm949, %v794, %v948
          %vm951 = vcmp.eq.f32.partialorder %v794, 0.0
          %v952 = vand.u32 %v794, 2147483648
          %v953 = vsel %vm951, %v952, %v950
          %v954 = vrsqrt.pop %v795
          %v955 = vmul.f32 %v954, %v795
          %v956 = vmul.f32 %v955, %v954
          %v957 = vmul.f32 0.5, %v956
          %v958 = vsub.f32 1.5, %v957
          %v959 = vmul.f32 %v954, %v958
          %v960 = vmul.f32 %v795, %v959
          %vm961 = vcmp.eq.f32.partialorder %v795, inf
          %v962 = vsel %vm961, %v795, %v960
          %vm963 = vcmp.eq.f32.partialorder %v795, 0.0
          %v964 = vand.u32 %v795, 2147483648
          %v965 = vsel %vm963, %v964, %v962
          %v966 = vrsqrt.pop %v796
          %v967 = vmul.f32 %v966, %v796
          %v968 = vmul.f32 %v967, %v966
          %v969 = vmul.f32 0.5, %v968
          %v970 = vsub.f32 1.5, %v969
          %v971 = vmul.f32 %v966, %v970
          %v972 = vmul.f32 %v796, %v971
          %vm973 = vcmp.eq.f32.partialorder %v796, inf
          %v974 = vsel %vm973, %v796, %v972
          %vm975 = vcmp.eq.f32.partialorder %v796, 0.0
          %v976 = vand.u32 %v796, 2147483648
          %v977 = vsel %vm975, %v976, %v974
          %v978 = vrsqrt.pop %v797
          %v979 = vmul.f32 %v978, %v797
          %v980 = vmul.f32 %v979, %v978
          %v981 = vmul.f32 0.5, %v980
          %v982 = vsub.f32 1.5, %v981
          %v983 = vmul.f32 %v978, %v982
          %v984 = vmul.f32 %v797, %v983
          %vm985 = vcmp.eq.f32.partialorder %v797, inf
          %v986 = vsel %vm985, %v797, %v984
          %vm987 = vcmp.eq.f32.partialorder %v797, 0.0
          %v988 = vand.u32 %v797, 2147483648
          %v989 = vsel %vm987, %v988, %v986
          %v990 = vadd.f32 %v809, 1e-05
          %v991 = vadd.f32 %v821, 1e-05
          %v992 = vadd.f32 %v833, 1e-05
          %v993 = vadd.f32 %v845, 1e-05
          %v994 = vadd.f32 %v857, 1e-05
          %v995 = vadd.f32 %v869, 1e-05
          %v996 = vadd.f32 %v881, 1e-05
          %v997 = vadd.f32 %v893, 1e-05
          %v998 = vadd.f32 %v905, 1e-05
          %v999 = vadd.f32 %v917, 1e-05
          %v1000 = vadd.f32 %v929, 1e-05
          %v1001 = vadd.f32 %v941, 1e-05
          %v1002 = vadd.f32 %v953, 1e-05
          %v1003 = vadd.f32 %v965, 1e-05
          %v1004 = vadd.f32 %v977, 1e-05
          %v1005 = vadd.f32 %v989, 1e-05
          %v1006 = vrcp.pop %v990
          %v1007 = vmul.f32 %v990, %v1006
          %v1008 = vsub.f32 1.0, %v1007
          %v1009 = vmul.f32 %v1006, %v1008
          %v1010 = vadd.f32 %v1006, %v1009
          %vm1011 = vweird.f32 %v990
          %vm1012 = vweird.f32 %v1006
          %vm1013 = vmor %vm1011, %vm1012
          %v1014 = vsel %vm1013, %v1006, %v1010
          %v1015 = vand.u32 2147483647, %v990
          %vm1016 = vcmp.eq.f32.partialorder %v1015, 8.507059e+37
          %v1017 = vand.u32 %v990, 2147483648
          %v1018 = vor.u32 1.1754944e-38, %v1017
          %v1019 = vsel %vm1016, %v1018, %v1014
          %v1020 = vmul.f32 %v711, %v1019
          %v1021 = vrcp.pop %v991
          %v1022 = vmul.f32 %v991, %v1021
          %v1023 = vsub.f32 1.0, %v1022
          %v1024 = vmul.f32 %v1021, %v1023
          %v1025 = vadd.f32 %v1021, %v1024
          %vm1026 = vweird.f32 %v991
          %vm1027 = vweird.f32 %v1021
          %vm1028 = vmor %vm1026, %vm1027
          %v1029 = vsel %vm1028, %v1021, %v1025
          %v1030 = vand.u32 2147483647, %v991
          %vm1031 = vcmp.eq.f32.partialorder %v1030, 8.507059e+37
          %v1032 = vand.u32 %v991, 2147483648
          %v1033 = vor.u32 1.1754944e-38, %v1032
          %v1034 = vsel %vm1031, %v1033, %v1029
          %v1035 = vmul.f32 %v712, %v1034
          %v1036 = vrcp.pop %v992
          %v1037 = vmul.f32 %v992, %v1036
          %v1038 = vsub.f32 1.0, %v1037
          %v1039 = vmul.f32 %v1036, %v1038
          %v1040 = vadd.f32 %v1036, %v1039
          %vm1041 = vweird.f32 %v992
          %vm1042 = vweird.f32 %v1036
          %vm1043 = vmor %vm1041, %vm1042
          %v1044 = vsel %vm1043, %v1036, %v1040
          %v1045 = vand.u32 2147483647, %v992
          %vm1046 = vcmp.eq.f32.partialorder %v1045, 8.507059e+37
          %v1047 = vand.u32 %v992, 2147483648
          %v1048 = vor.u32 1.1754944e-38, %v1047
          %v1049 = vsel %vm1046, %v1048, %v1044
          %v1050 = vmul.f32 %v713, %v1049
          %v1051 = vrcp.pop %v993
          %v1052 = vmul.f32 %v993, %v1051
          %v1053 = vsub.f32 1.0, %v1052
          %v1054 = vmul.f32 %v1051, %v1053
          %v1055 = vadd.f32 %v1051, %v1054
          %vm1056 = vweird.f32 %v993
          %vm1057 = vweird.f32 %v1051
          %vm1058 = vmor %vm1056, %vm1057
          %v1059 = vsel %vm1058, %v1051, %v1055
          %v1060 = vand.u32 2147483647, %v993
          %vm1061 = vcmp.eq.f32.partialorder %v1060, 8.507059e+37
          %v1062 = vand.u32 %v993, 2147483648
          %v1063 = vor.u32 1.1754944e-38, %v1062
          %v1064 = vsel %vm1061, %v1063, %v1059
          %v1065 = vmul.f32 %v714, %v1064
          %v1066 = vrcp.pop %v994
          %v1067 = vmul.f32 %v994, %v1066
          %v1068 = vsub.f32 1.0, %v1067
          %v1069 = vmul.f32 %v1066, %v1068
          %v1070 = vadd.f32 %v1066, %v1069
          %vm1071 = vweird.f32 %v994
          %vm1072 = vweird.f32 %v1066
          %vm1073 = vmor %vm1071, %vm1072
          %v1074 = vsel %vm1073, %v1066, %v1070
          %v1075 = vand.u32 2147483647, %v994
          %vm1076 = vcmp.eq.f32.partialorder %v1075, 8.507059e+37
          %v1077 = vand.u32 %v994, 2147483648
          %v1078 = vor.u32 1.1754944e-38, %v1077
          %v1079 = vsel %vm1076, %v1078, %v1074
          %v1080 = vmul.f32 %v715, %v1079
          %v1081 = vrcp.pop %v995
          %v1082 = vmul.f32 %v995, %v1081
          %v1083 = vsub.f32 1.0, %v1082
          %v1084 = vmul.f32 %v1081, %v1083
          %v1085 = vadd.f32 %v1081, %v1084
          %vm1086 = vweird.f32 %v995
          %vm1087 = vweird.f32 %v1081
          %vm1088 = vmor %vm1086, %vm1087
          %v1089 = vsel %vm1088, %v1081, %v1085
          %v1090 = vand.u32 2147483647, %v995
          %vm1091 = vcmp.eq.f32.partialorder %v1090, 8.507059e+37
          %v1092 = vand.u32 %v995, 2147483648
          %v1093 = vor.u32 1.1754944e-38, %v1092
          %v1094 = vsel %vm1091, %v1093, %v1089
          %v1095 = vmul.f32 %v716, %v1094
          %v1096 = vrcp.pop %v996
          %v1097 = vmul.f32 %v996, %v1096
          %v1098 = vsub.f32 1.0, %v1097
          %v1099 = vmul.f32 %v1096, %v1098
          %v1100 = vadd.f32 %v1096, %v1099
          %vm1101 = vweird.f32 %v996
          %vm1102 = vweird.f32 %v1096
          %vm1103 = vmor %vm1101, %vm1102
          %v1104 = vsel %vm1103, %v1096, %v1100
          %v1105 = vand.u32 2147483647, %v996
          %vm1106 = vcmp.eq.f32.partialorder %v1105, 8.507059e+37
          %v1107 = vand.u32 %v996, 2147483648
          %v1108 = vor.u32 1.1754944e-38, %v1107
          %v1109 = vsel %vm1106, %v1108, %v1104
          %v1110 = vmul.f32 %v717, %v1109
          %v1111 = vrcp.pop %v997
          %v1112 = vmul.f32 %v997, %v1111
          %v1113 = vsub.f32 1.0, %v1112
          %v1114 = vmul.f32 %v1111, %v1113
          %v1115 = vadd.f32 %v1111, %v1114
          %vm1116 = vweird.f32 %v997
          %vm1117 = vweird.f32 %v1111
          %vm1118 = vmor %vm1116, %vm1117
          %v1119 = vsel %vm1118, %v1111, %v1115
          %v1120 = vand.u32 2147483647, %v997
          %vm1121 = vcmp.eq.f32.partialorder %v1120, 8.507059e+37
          %v1122 = vand.u32 %v997, 2147483648
          %v1123 = vor.u32 1.1754944e-38, %v1122
          %v1124 = vsel %vm1121, %v1123, %v1119
          %v1125 = vmul.f32 %v718, %v1124
          %v1126 = vrcp.pop %v998
          %v1127 = vmul.f32 %v998, %v1126
          %v1128 = vsub.f32 1.0, %v1127
          %v1129 = vmul.f32 %v1126, %v1128
          %v1130 = vadd.f32 %v1126, %v1129
          %vm1131 = vweird.f32 %v998
          %vm1132 = vweird.f32 %v1126
          %vm1133 = vmor %vm1131, %vm1132
          %v1134 = vsel %vm1133, %v1126, %v1130
          %v1135 = vand.u32 2147483647, %v998
          %vm1136 = vcmp.eq.f32.partialorder %v1135, 8.507059e+37
          %v1137 = vand.u32 %v998, 2147483648
          %v1138 = vor.u32 1.1754944e-38, %v1137
          %v1139 = vsel %vm1136, %v1138, %v1134
          %v1140 = vmul.f32 %v719, %v1139
          %v1141 = vrcp.pop %v999
          %v1142 = vmul.f32 %v999, %v1141
          %v1143 = vsub.f32 1.0, %v1142
          %v1144 = vmul.f32 %v1141, %v1143
          %v1145 = vadd.f32 %v1141, %v1144
          %vm1146 = vweird.f32 %v999
          %vm1147 = vweird.f32 %v1141
          %vm1148 = vmor %vm1146, %vm1147
          %v1149 = vsel %vm1148, %v1141, %v1145
          %v1150 = vand.u32 2147483647, %v999
          %vm1151 = vcmp.eq.f32.partialorder %v1150, 8.507059e+37
          %v1152 = vand.u32 %v999, 2147483648
          %v1153 = vor.u32 1.1754944e-38, %v1152
          %v1154 = vsel %vm1151, %v1153, %v1149
          %v1155 = vmul.f32 %v720, %v1154
          %v1156 = vrcp.pop %v1000
          %v1157 = vmul.f32 %v1000, %v1156
          %v1158 = vsub.f32 1.0, %v1157
          %v1159 = vmul.f32 %v1156, %v1158
          %v1160 = vadd.f32 %v1156, %v1159
          %vm1161 = vweird.f32 %v1000
          %vm1162 = vweird.f32 %v1156
          %vm1163 = vmor %vm1161, %vm1162
          %v1164 = vsel %vm1163, %v1156, %v1160
          %v1165 = vand.u32 2147483647, %v1000
          %vm1166 = vcmp.eq.f32.partialorder %v1165, 8.507059e+37
          %v1167 = vand.u32 %v1000, 2147483648
          %v1168 = vor.u32 1.1754944e-38, %v1167
          %v1169 = vsel %vm1166, %v1168, %v1164
          %v1170 = vmul.f32 %v721, %v1169
          %v1171 = vrcp.pop %v1001
          %v1172 = vmul.f32 %v1001, %v1171
          %v1173 = vsub.f32 1.0, %v1172
          %v1174 = vmul.f32 %v1171, %v1173
          %v1175 = vadd.f32 %v1171, %v1174
          %vm1176 = vweird.f32 %v1001
          %vm1177 = vweird.f32 %v1171
          %vm1178 = vmor %vm1176, %vm1177
          %v1179 = vsel %vm1178, %v1171, %v1175
          %v1180 = vand.u32 2147483647, %v1001
          %vm1181 = vcmp.eq.f32.partialorder %v1180, 8.507059e+37
          %v1182 = vand.u32 %v1001, 2147483648
          %v1183 = vor.u32 1.1754944e-38, %v1182
          %v1184 = vsel %vm1181, %v1183, %v1179
          %v1185 = vmul.f32 %v722, %v1184
          %v1186 = vrcp.pop %v1002
          %v1187 = vmul.f32 %v1002, %v1186
          %v1188 = vsub.f32 1.0, %v1187
          %v1189 = vmul.f32 %v1186, %v1188
          %v1190 = vadd.f32 %v1186, %v1189
          %vm1191 = vweird.f32 %v1002
          %vm1192 = vweird.f32 %v1186
          %vm1193 = vmor %vm1191, %vm1192
          %v1194 = vsel %vm1193, %v1186, %v1190
          %v1195 = vand.u32 2147483647, %v1002
          %vm1196 = vcmp.eq.f32.partialorder %v1195, 8.507059e+37
          %v1197 = vand.u32 %v1002, 2147483648
          %v1198 = vor.u32 1.1754944e-38, %v1197
          %v1199 = vsel %vm1196, %v1198, %v1194
          %v1200 = vmul.f32 %v723, %v1199
          %v1201 = vrcp.pop %v1003
          %v1202 = vmul.f32 %v1003, %v1201
          %v1203 = vsub.f32 1.0, %v1202
          %v1204 = vmul.f32 %v1201, %v1203
          %v1205 = vadd.f32 %v1201, %v1204
          %vm1206 = vweird.f32 %v1003
          %vm1207 = vweird.f32 %v1201
          %vm1208 = vmor %vm1206, %vm1207
          %v1209 = vsel %vm1208, %v1201, %v1205
          %v1210 = vand.u32 2147483647, %v1003
          %vm1211 = vcmp.eq.f32.partialorder %v1210, 8.507059e+37
          %v1212 = vand.u32 %v1003, 2147483648
          %v1213 = vor.u32 1.1754944e-38, %v1212
          %v1214 = vsel %vm1211, %v1213, %v1209
          %v1215 = vmul.f32 %v724, %v1214
          %v1216 = vrcp.pop %v1004
          %v1217 = vmul.f32 %v1004, %v1216
          %v1218 = vsub.f32 1.0, %v1217
          %v1219 = vmul.f32 %v1216, %v1218
          %v1220 = vadd.f32 %v1216, %v1219
          %vm1221 = vweird.f32 %v1004
          %vm1222 = vweird.f32 %v1216
          %vm1223 = vmor %vm1221, %vm1222
          %v1224 = vsel %vm1223, %v1216, %v1220
          %v1225 = vand.u32 2147483647, %v1004
          %vm1226 = vcmp.eq.f32.partialorder %v1225, 8.507059e+37
          %v1227 = vand.u32 %v1004, 2147483648
          %v1228 = vor.u32 1.1754944e-38, %v1227
          %v1229 = vsel %vm1226, %v1228, %v1224
          %v1230 = vmul.f32 %v725, %v1229
          %v1231 = vrcp.pop %v1005
          %v1232 = vmul.f32 %v1005, %v1231
          %v1233 = vsub.f32 1.0, %v1232
          %v1234 = vmul.f32 %v1231, %v1233
          %v1235 = vadd.f32 %v1231, %v1234
          %vm1236 = vweird.f32 %v1005
          %vm1237 = vweird.f32 %v1231
          %vm1238 = vmor %vm1236, %vm1237
          %v1239 = vsel %vm1238, %v1231, %v1235
          %v1240 = vand.u32 2147483647, %v1005
          %vm1241 = vcmp.eq.f32.partialorder %v1240, 8.507059e+37
          %v1242 = vand.u32 %v1005, 2147483648
          %v1243 = vor.u32 1.1754944e-38, %v1242
          %v1244 = vsel %vm1241, %v1243, %v1239
          %v1245 = vmul.f32 %v726, %v1244
          %v1246 = vld [vmem:[#allocation15] sm:$0x1]
          %v1248 = vperm.slane %v1246, 0
          %v1250 = vsub.f32 %v1020, %v1248
          %v1251 = vsub.f32 %v1035, %v1248
          %v1252 = vsub.f32 %v1050, %v1248
          %v1253 = vsub.f32 %v1065, %v1248
          %v1254 = vsub.f32 %v1080, %v1248
          %v1255 = vsub.f32 %v1095, %v1248
          %v1256 = vsub.f32 %v1110, %v1248
          %v1257 = vsub.f32 %v1125, %v1248
          %v1258 = vsub.f32 %v1140, %v1248
          %v1259 = vsub.f32 %v1155, %v1248
          %v1260 = vsub.f32 %v1170, %v1248
          %v1261 = vsub.f32 %v1185, %v1248
          %v1262 = vsub.f32 %v1200, %v1248
          %v1263 = vsub.f32 %v1215, %v1248
          %v1264 = vsub.f32 %v1230, %v1248
          %v1265 = vsub.f32 %v1245, %v1248
          %v1266 = vpack.c.bf16 %v1250, %v1250
          %v1267 = vpack.c.bf16 %v1251, %v1251
          %v1268 = vpack.c.bf16 %v1252, %v1252
          %v1269 = vpack.c.bf16 %v1253, %v1253
          %v1270 = vpack.c.bf16 %v1254, %v1254
          %v1271 = vpack.c.bf16 %v1255, %v1255
          %v1272 = vpack.c.bf16 %v1256, %v1256
          %v1273 = vpack.c.bf16 %v1257, %v1257
          %v1274 = vpack.c.bf16 %v1258, %v1258
          %v1275 = vpack.c.bf16 %v1259, %v1259
          %v1276 = vpack.c.bf16 %v1260, %v1260
          %v1277 = vpack.c.bf16 %v1261, %v1261
          %v1278 = vpack.c.bf16 %v1262, %v1262
          %v1279 = vpack.c.bf16 %v1263, %v1263
          %v1280 = vpack.c.bf16 %v1264, %v1264
          %v1281 = vpack.c.bf16 %v1265, %v1265
          %1282 = vst [vmem:[#allocation2] sm:$0xf] %v1266
          %1283 = vst [vmem:[#allocation2 + $0x4] sm:$0xf] %v1267
          %1284 = vst [vmem:[#allocation2 + $0x8] sm:$0xf] %v1268
          %1285 = vst [vmem:[#allocation2 + $0xc] sm:$0xf] %v1269
          %1286 = vst [vmem:[#allocation2 + $0x10] sm:$0xf] %v1270
          %1287 = vst [vmem:[#allocation2 + $0x14] sm:$0xf] %v1271
          %1288 = vst [vmem:[#allocation2 + $0x18] sm:$0xf] %v1272
          %1289 = vst [vmem:[#allocation2 + $0x1c] sm:$0xf] %v1273
          %1290 = vst [vmem:[#allocation2 + $0x20] sm:$0xf] %v1274
          %1291 = vst [vmem:[#allocation2 + $0x24] sm:$0xf] %v1275
          %1292 = vst [vmem:[#allocation2 + $0x28] sm:$0xf] %v1276
          %1293 = vst [vmem:[#allocation2 + $0x2c] sm:$0xf] %v1277
          %1294 = vst [vmem:[#allocation2 + $0x30] sm:$0xf] %v1278
          %1295 = vst [vmem:[#allocation2 + $0x34] sm:$0xf] %v1279
          %1296 = vst [vmem:[#allocation2 + $0x38] sm:$0xf] %v1280
          %1297 = vst [vmem:[#allocation2 + $0x3c] sm:$0xf] %v1281
          %1298 = vst [vmem:[%s557] sm:$0xff] 0.0
          %1299 = vst [vmem:[%s557 + $0x8] sm:$0xff] 0.0
          %1300 = vst [vmem:[%s557 + $0x10] sm:$0xff] 0.0
          %1301 = vst [vmem:[%s557 + $0x18] sm:$0xff] 0.0
          %1302 = vst [vmem:[%s557 + $0x20] sm:$0xff] 0.0
          %1303 = vst [vmem:[%s557 + $0x28] sm:$0xff] 0.0
          %1304 = vst [vmem:[%s557 + $0x30] sm:$0xff] 0.0
          %1305 = vst [vmem:[%s557 + $0x38] sm:$0xff] 0.0
          %1306 = vst [vmem:[%s557 + $0x40] sm:$0xff] 0.0
          %1307 = vst [vmem:[%s557 + $0x48] sm:$0xff] 0.0
          %1308 = vst [vmem:[%s557 + $0x50] sm:$0xff] 0.0
          %1309 = vst [vmem:[%s557 + $0x58] sm:$0xff] 0.0
          %1310 = vst [vmem:[%s557 + $0x60] sm:$0xff] 0.0
          %1311 = vst [vmem:[%s557 + $0x68] sm:$0xff] 0.0
          %1312 = vst [vmem:[%s557 + $0x70] sm:$0xff] 0.0
          %1313 = vst [vmem:[%s557 + $0x78] sm:$0xff] 0.0
          %v1314 = vlaneseq
          %vm1315 = vcmp.ge.s32.totalorder %v1314, 0
          %vm1316 = vcmp.lt.s32.totalorder %v1314, 256
          %vm1317 = vmand %vm1315, %vm1316
          %1318 = vst.msk [vmem:[#allocation3] sm:$0x3] %vm1317, 0.0
          %1319 = vst.msk [vmem:[#allocation4] sm:$0x3] %vm1317, 0.0
          %1320 = vst.msk [vmem:[#allocation5] sm:$0x3] %vm1317, 0.0
          %1321 = vst.msk [vmem:[#allocation6] sm:$0x3] %vm1317, 0.0
        $region76: #{tpu_custom_call.1} parent=47 // pred_fallthru
          _
        %v1322 = vld [vmem:[#allocation2] sm:$0xf]
        %v1323 = vld [vmem:[#allocation2 + $0x4] sm:$0xf]
        %v1324 = vld [vmem:[#allocation2 + $0x8] sm:$0xf]
        %v1325 = vld [vmem:[#allocation2 + $0xc] sm:$0xf]
        %v1326 = vld [vmem:[#allocation2 + $0x10] sm:$0xf]
        %v1327 = vld [vmem:[#allocation2 + $0x14] sm:$0xf]
        %v1328 = vld [vmem:[#allocation2 + $0x18] sm:$0xf]
        %v1329 = vld [vmem:[#allocation2 + $0x1c] sm:$0xf]
        %v1330 = vld [vmem:[#allocation2 + $0x20] sm:$0xf]
        %v1331 = vld [vmem:[#allocation2 + $0x24] sm:$0xf]
        %v1332 = vld [vmem:[#allocation2 + $0x28] sm:$0xf]
        %v1333 = vld [vmem:[#allocation2 + $0x2c] sm:$0xf]
        %v1334 = vld [vmem:[#allocation2 + $0x30] sm:$0xf]
        %v1335 = vld [vmem:[#allocation2 + $0x34] sm:$0xf]
        %v1336 = vld [vmem:[#allocation2 + $0x38] sm:$0xf]
        %v1337 = vld [vmem:[#allocation2 + $0x3c] sm:$0xf]
        %v1338 = vld [vmem:[%s467] sm:$0xff]
        %v1339 = vld [vmem:[%s467 + $0x8] sm:$0xff]
        %v1340 = vld [vmem:[%s467 + $0x10] sm:$0xff]
        %v1341 = vld [vmem:[%s467 + $0x18] sm:$0xff]
        %v1342 = vld [vmem:[%s467 + $0x20] sm:$0xff]
        %v1343 = vld [vmem:[%s467 + $0x28] sm:$0xff]
        %v1344 = vld [vmem:[%s467 + $0x30] sm:$0xff]
        %v1345 = vld [vmem:[%s467 + $0x38] sm:$0xff]
        %v1346 = vld [vmem:[%s467 + $0x40] sm:$0xff]
        %v1347 = vld [vmem:[%s467 + $0x48] sm:$0xff]
        %v1348 = vld [vmem:[%s467 + $0x50] sm:$0xff]
        %v1349 = vld [vmem:[%s467 + $0x58] sm:$0xff]
        %v1350 = vld [vmem:[%s467 + $0x60] sm:$0xff]
        %v1351 = vld [vmem:[%s467 + $0x68] sm:$0xff]
        %v1352 = vld [vmem:[%s467 + $0x70] sm:$0xff]
        %v1353 = vld [vmem:[%s467 + $0x78] sm:$0xff]
        %v1354 = vld [vmem:[%s487] sm:$0x3]
        %v1356 = vperm.slane %v1354, 0
        %v1357 = vperm.slane %v1354, 1
        %v1376 = vunpack.c.l.b16 %v1322
        %v1377 = vunpack.c.l.b16 %v1323
        %v1378 = vunpack.c.l.b16 %v1324
        %v1379 = vunpack.c.l.b16 %v1325
        %v1380 = vunpack.c.l.b16 %v1326
        %v1381 = vunpack.c.l.b16 %v1327
        %v1382 = vunpack.c.l.b16 %v1328
        %v1383 = vunpack.c.l.b16 %v1329
        %v1384 = vunpack.c.l.b16 %v1330
        %v1385 = vunpack.c.l.b16 %v1331
        %v1386 = vunpack.c.l.b16 %v1332
        %v1387 = vunpack.c.l.b16 %v1333
        %v1388 = vunpack.c.l.b16 %v1334
        %v1389 = vunpack.c.l.b16 %v1335
        %v1390 = vunpack.c.l.b16 %v1336
        %v1391 = vunpack.c.l.b16 %v1337
        %v1392 = vpack.c.b16 %v1377, %v1376
        %v1393 = vpack.c.b16 %v1379, %v1378
        %v1394 = vpack.c.b16 %v1381, %v1380
        %v1395 = vpack.c.b16 %v1383, %v1382
        %v1396 = vpack.c.b16 %v1385, %v1384
        %v1397 = vpack.c.b16 %v1387, %v1386
        %v1398 = vpack.c.b16 %v1389, %v1388
        %v1399 = vpack.c.b16 %v1391, %v1390
        %v1424 = vunpack.c.l.b16 %v1338
        %v1425 = vunpack.c.h.b16 %v1338
        %v1426 = vunpack.c.l.b16 %v1339
        %v1427 = vunpack.c.h.b16 %v1339
        %v1428 = vunpack.c.l.b16 %v1340
        %v1429 = vunpack.c.h.b16 %v1340
        %v1430 = vunpack.c.l.b16 %v1341
        %v1431 = vunpack.c.h.b16 %v1341
        %v1432 = vunpack.c.l.b16 %v1342
        %v1433 = vunpack.c.h.b16 %v1342
        %v1434 = vunpack.c.l.b16 %v1343
        %v1435 = vunpack.c.h.b16 %v1343
        %v1436 = vunpack.c.l.b16 %v1344
        %v1437 = vunpack.c.h.b16 %v1344
        %v1438 = vunpack.c.l.b16 %v1345
        %v1439 = vunpack.c.h.b16 %v1345
        %v1440 = vunpack.c.l.b16 %v1346
        %v1441 = vunpack.c.h.b16 %v1346
        %v1442 = vunpack.c.l.b16 %v1347
        %v1443 = vunpack.c.h.b16 %v1347
        %v1444 = vunpack.c.l.b16 %v1348
        %v1445 = vunpack.c.h.b16 %v1348
        %v1446 = vunpack.c.l.b16 %v1349
        %v1447 = vunpack.c.h.b16 %v1349
        %v1448 = vunpack.c.l.b16 %v1350
        %v1449 = vunpack.c.h.b16 %v1350
        %v1450 = vunpack.c.l.b16 %v1351
        %v1451 = vunpack.c.h.b16 %v1351
        %v1452 = vunpack.c.l.b16 %v1352
        %v1453 = vunpack.c.h.b16 %v1352
        %v1454 = vunpack.c.l.b16 %v1353
        %v1455 = vunpack.c.h.b16 %v1353
        %v1456 = vpack.c.b16 %v1426, %v1424
        %v1457 = vpack.c.b16 %v1427, %v1425
        %v1458 = vpack.c.b16 %v1430, %v1428
        %v1459 = vpack.c.b16 %v1431, %v1429
        %v1460 = vpack.c.b16 %v1434, %v1432
        %v1461 = vpack.c.b16 %v1435, %v1433
        %v1462 = vpack.c.b16 %v1438, %v1436
        %v1463 = vpack.c.b16 %v1439, %v1437
        %v1464 = vpack.c.b16 %v1442, %v1440
        %v1465 = vpack.c.b16 %v1443, %v1441
        %v1466 = vpack.c.b16 %v1446, %v1444
        %v1467 = vpack.c.b16 %v1447, %v1445
        %v1468 = vpack.c.b16 %v1450, %v1448
        %v1469 = vpack.c.b16 %v1451, %v1449
        %v1470 = vpack.c.b16 %v1454, %v1452
        %v1471 = vpack.c.b16 %v1455, %v1453
        %1488 = vmatpush.bf16.msra.mxu0 %v1470
        %1489 = vmatpush.bf16.msra.mxu0 %v1468
        %1490 = vmatpush.bf16.msra.mxu0 %v1466
        %1491 = vmatpush.bf16.msra.mxu0 %v1464
        %1492 = vmatpush.bf16.msra.mxu0 %v1462
        %1493 = vmatpush.bf16.msra.mxu0 %v1460
        %1494 = vmatpush.bf16.msra.mxu0 %v1458
        %1495 = vmatpush.bf16.msra.mxu0 %v1456
        %1496 = vmatmul.bf16.gmra.mxu0 %v1392
        %v1497 = vpop.f32.mrf.mxu0
        %v1498 = vadd.f32 %v1356, %v1497
        %v1499 = vpop.f32.mrf.mxu0
        %v1500 = vadd.f32 %v1356, %v1499
        %1501 = vmatmul.bf16.gmra.mxu0 %v1393
        %v1502 = vpop.f32.mrf.mxu0
        %v1503 = vadd.f32 %v1356, %v1502
        %v1504 = vpop.f32.mrf.mxu0
        %v1505 = vadd.f32 %v1356, %v1504
        %1506 = vmatmul.bf16.gmra.mxu0 %v1394
        %v1507 = vpop.f32.mrf.mxu0
        %v1508 = vadd.f32 %v1356, %v1507
        %v1509 = vpop.f32.mrf.mxu0
        %v1510 = vadd.f32 %v1356, %v1509
        %1511 = vmatmul.bf16.gmra.mxu0 %v1395
        %v1512 = vpop.f32.mrf.mxu0
        %v1513 = vadd.f32 %v1356, %v1512
        %v1514 = vpop.f32.mrf.mxu0
        %v1515 = vadd.f32 %v1356, %v1514
        %1516 = vmatmul.bf16.gmra.mxu0 %v1396
        %v1517 = vpop.f32.mrf.mxu0
        %v1518 = vadd.f32 %v1356, %v1517
        %v1519 = vpop.f32.mrf.mxu0
        %v1520 = vadd.f32 %v1356, %v1519
        %1521 = vmatmul.bf16.gmra.mxu0 %v1397
        %v1522 = vpop.f32.mrf.mxu0
        %v1523 = vadd.f32 %v1356, %v1522
        %v1524 = vpop.f32.mrf.mxu0
        %v1525 = vadd.f32 %v1356, %v1524
        %1526 = vmatmul.bf16.gmra.mxu0 %v1398
        %v1527 = vpop.f32.mrf.mxu0
        %v1528 = vadd.f32 %v1356, %v1527
        %v1529 = vpop.f32.mrf.mxu0
        %v1530 = vadd.f32 %v1356, %v1529
        %1531 = vmatmul.bf16.gmra.mxu0 %v1399
        %v1532 = vpop.f32.mrf.mxu0
        %v1533 = vadd.f32 %v1356, %v1532
        %v1534 = vpop.f32.mrf.mxu0
        %v1535 = vadd.f32 %v1356, %v1534
        %1536 = vdwg.mxu0
        %1537 = vmatpush.bf16.msra.mxu0 %v1471
        %1538 = vmatpush.bf16.msra.mxu0 %v1469
        %1539 = vmatpush.bf16.msra.mxu0 %v1467
        %1540 = vmatpush.bf16.msra.mxu0 %v1465
        %1541 = vmatpush.bf16.msra.mxu0 %v1463
        %1542 = vmatpush.bf16.msra.mxu0 %v1461
        %1543 = vmatpush.bf16.msra.mxu0 %v1459
        %1544 = vmatpush.bf16.msra.mxu0 %v1457
        %1545 = vmatmul.bf16.gmra.mxu0 %v1392
        %v1546 = vpop.f32.mrf.mxu0
        %v1547 = vadd.f32 %v1357, %v1546
        %v1548 = vpop.f32.mrf.mxu0
        %v1549 = vadd.f32 %v1357, %v1548
        %1550 = vmatmul.bf16.gmra.mxu0 %v1393
        %v1551 = vpop.f32.mrf.mxu0
        %v1552 = vadd.f32 %v1357, %v1551
        %v1553 = vpop.f32.mrf.mxu0
        %v1554 = vadd.f32 %v1357, %v1553
        %1555 = vmatmul.bf16.gmra.mxu0 %v1394
        %v1556 = vpop.f32.mrf.mxu0
        %v1557 = vadd.f32 %v1357, %v1556
        %v1558 = vpop.f32.mrf.mxu0
        %v1559 = vadd.f32 %v1357, %v1558
        %1560 = vmatmul.bf16.gmra.mxu0 %v1395
        %v1561 = vpop.f32.mrf.mxu0
        %v1562 = vadd.f32 %v1357, %v1561
        %v1563 = vpop.f32.mrf.mxu0
        %v1564 = vadd.f32 %v1357, %v1563
        %1565 = vmatmul.bf16.gmra.mxu0 %v1396
        %v1566 = vpop.f32.mrf.mxu0
        %v1567 = vadd.f32 %v1357, %v1566
        %v1568 = vpop.f32.mrf.mxu0
        %v1569 = vadd.f32 %v1357, %v1568
        %1570 = vmatmul.bf16.gmra.mxu0 %v1397
        %v1571 = vpop.f32.mrf.mxu0
        %v1572 = vadd.f32 %v1357, %v1571
        %v1573 = vpop.f32.mrf.mxu0
        %v1574 = vadd.f32 %v1357, %v1573
        %1575 = vmatmul.bf16.gmra.mxu0 %v1398
        %v1576 = vpop.f32.mrf.mxu0
        %v1577 = vadd.f32 %v1357, %v1576
        %v1578 = vpop.f32.mrf.mxu0
        %v1579 = vadd.f32 %v1357, %v1578
        %1580 = vmatmul.bf16.gmra.mxu0 %v1399
        %v1581 = vpop.f32.mrf.mxu0
        %v1582 = vadd.f32 %v1357, %v1581
        %v1583 = vpop.f32.mrf.mxu0
        %v1584 = vadd.f32 %v1357, %v1583
        %1585 = vdwg.mxu0
        %v1586 = vld [vmem:[%s579] sm:$0x3]
        %v1588 = vperm.slane %v1586, 0
        %v1589 = vperm.slane %v1586, 1
        %vm1592 = vcmp.gt.f32.partialorder %v1498, %v1588
        %vm1593 = vcmp.gt.f32.partialorder %v1547, %v1589
        %vm1594 = vcmp.gt.f32.partialorder %v1500, %v1588
        %vm1595 = vcmp.gt.f32.partialorder %v1549, %v1589
        %vm1596 = vcmp.gt.f32.partialorder %v1503, %v1588
        %vm1597 = vcmp.gt.f32.partialorder %v1552, %v1589
        %vm1598 = vcmp.gt.f32.partialorder %v1505, %v1588
        %vm1599 = vcmp.gt.f32.partialorder %v1554, %v1589
        %vm1600 = vcmp.gt.f32.partialorder %v1508, %v1588
        %vm1601 = vcmp.gt.f32.partialorder %v1557, %v1589
        %vm1602 = vcmp.gt.f32.partialorder %v1510, %v1588
        %vm1603 = vcmp.gt.f32.partialorder %v1559, %v1589
        %vm1604 = vcmp.gt.f32.partialorder %v1513, %v1588
        %vm1605 = vcmp.gt.f32.partialorder %v1562, %v1589
        %vm1606 = vcmp.gt.f32.partialorder %v1515, %v1588
        %vm1607 = vcmp.gt.f32.partialorder %v1564, %v1589
        %vm1608 = vcmp.gt.f32.partialorder %v1518, %v1588
        %vm1609 = vcmp.gt.f32.partialorder %v1567, %v1589
        %vm1610 = vcmp.gt.f32.partialorder %v1520, %v1588
        %vm1611 = vcmp.gt.f32.partialorder %v1569, %v1589
        %vm1612 = vcmp.gt.f32.partialorder %v1523, %v1588
        %vm1613 = vcmp.gt.f32.partialorder %v1572, %v1589
        %vm1614 = vcmp.gt.f32.partialorder %v1525, %v1588
        %vm1615 = vcmp.gt.f32.partialorder %v1574, %v1589
        %vm1616 = vcmp.gt.f32.partialorder %v1528, %v1588
        %vm1617 = vcmp.gt.f32.partialorder %v1577, %v1589
        %vm1618 = vcmp.gt.f32.partialorder %v1530, %v1588
        %vm1619 = vcmp.gt.f32.partialorder %v1579, %v1589
        %vm1620 = vcmp.gt.f32.partialorder %v1533, %v1588
        %vm1621 = vcmp.gt.f32.partialorder %v1582, %v1589
        %vm1622 = vcmp.gt.f32.partialorder %v1535, %v1588
        %vm1623 = vcmp.gt.f32.partialorder %v1584, %v1589
        %v1624 = vsel %vm620, 1, 0
        %v1625 = vsel %vm621, 1, 0
        %v1626 = vsel %vm622, 1, 0
        %v1627 = vsel %vm623, 1, 0
        %v1628 = vsel %vm624, 1, 0
        %v1629 = vsel %vm625, 1, 0
        %v1630 = vsel %vm626, 1, 0
        %v1631 = vsel %vm627, 1, 0
        %v1632 = vsel %vm628, 1, 0
        %v1633 = vsel %vm629, 1, 0
        %v1634 = vsel %vm630, 1, 0
        %v1635 = vsel %vm631, 1, 0
        %v1636 = vsel %vm632, 1, 0
        %v1637 = vsel %vm633, 1, 0
        %v1638 = vsel %vm634, 1, 0
        %v1639 = vsel %vm635, 1, 0
        %vm1640 = vcmp.eq.s32.totalorder %v1624, 1
        %vm1641 = vcmp.eq.s32.totalorder %v1625, 1
        %vm1642 = vcmp.eq.s32.totalorder %v1626, 1
        %vm1643 = vcmp.eq.s32.totalorder %v1627, 1
        %vm1644 = vcmp.eq.s32.totalorder %v1628, 1
        %vm1645 = vcmp.eq.s32.totalorder %v1629, 1
        %vm1646 = vcmp.eq.s32.totalorder %v1630, 1
        %vm1647 = vcmp.eq.s32.totalorder %v1631, 1
        %vm1648 = vcmp.eq.s32.totalorder %v1632, 1
        %vm1649 = vcmp.eq.s32.totalorder %v1633, 1
        %vm1650 = vcmp.eq.s32.totalorder %v1634, 1
        %vm1651 = vcmp.eq.s32.totalorder %v1635, 1
        %vm1652 = vcmp.eq.s32.totalorder %v1636, 1
        %vm1653 = vcmp.eq.s32.totalorder %v1637, 1
        %vm1654 = vcmp.eq.s32.totalorder %v1638, 1
        %vm1655 = vcmp.eq.s32.totalorder %v1639, 1
        %vm1656 = vmand %vm1592, %vm1640
        %vm1657 = vmand %vm1593, %vm1640
        %vm1658 = vmand %vm1594, %vm1641
        %vm1659 = vmand %vm1595, %vm1641
        %vm1660 = vmand %vm1596, %vm1642
        %vm1661 = vmand %vm1597, %vm1642
        %vm1662 = vmand %vm1598, %vm1643
        %vm1663 = vmand %vm1599, %vm1643
        %vm1664 = vmand %vm1600, %vm1644
        %vm1665 = vmand %vm1601, %vm1644
        %vm1666 = vmand %vm1602, %vm1645
        %vm1667 = vmand %vm1603, %vm1645
        %vm1668 = vmand %vm1604, %vm1646
        %vm1669 = vmand %vm1605, %vm1646
        %vm1670 = vmand %vm1606, %vm1647
        %vm1671 = vmand %vm1607, %vm1647
        %vm1672 = vmand %vm1608, %vm1648
        %vm1673 = vmand %vm1609, %vm1648
        %vm1674 = vmand %vm1610, %vm1649
        %vm1675 = vmand %vm1611, %vm1649
        %vm1676 = vmand %vm1612, %vm1650
        %vm1677 = vmand %vm1613, %vm1650
        %vm1678 = vmand %vm1614, %vm1651
        %vm1679 = vmand %vm1615, %vm1651
        %vm1680 = vmand %vm1616, %vm1652
        %vm1681 = vmand %vm1617, %vm1652
        %vm1682 = vmand %vm1618, %vm1653
        %vm1683 = vmand %vm1619, %vm1653
        %vm1684 = vmand %vm1620, %vm1654
        %vm1685 = vmand %vm1621, %vm1654
        %vm1686 = vmand %vm1622, %vm1655
        %vm1687 = vmand %vm1623, %vm1655
        %v1688 = vsel %vm1656, %v1498, 0.0
        %v1689 = vsel %vm1657, %v1547, 0.0
        %v1690 = vsel %vm1658, %v1500, 0.0
        %v1691 = vsel %vm1659, %v1549, 0.0
        %v1692 = vsel %vm1660, %v1503, 0.0
        %v1693 = vsel %vm1661, %v1552, 0.0
        %v1694 = vsel %vm1662, %v1505, 0.0
        %v1695 = vsel %vm1663, %v1554, 0.0
        %v1696 = vsel %vm1664, %v1508, 0.0
        %v1697 = vsel %vm1665, %v1557, 0.0
        %v1698 = vsel %vm1666, %v1510, 0.0
        %v1699 = vsel %vm1667, %v1559, 0.0
        %v1700 = vsel %vm1668, %v1513, 0.0
        %v1701 = vsel %vm1669, %v1562, 0.0
        %v1702 = vsel %vm1670, %v1515, 0.0
        %v1703 = vsel %vm1671, %v1564, 0.0
        %v1704 = vsel %vm1672, %v1518, 0.0
        %v1705 = vsel %vm1673, %v1567, 0.0
        %v1706 = vsel %vm1674, %v1520, 0.0
        %v1707 = vsel %vm1675, %v1569, 0.0
        %v1708 = vsel %vm1676, %v1523, 0.0
        %v1709 = vsel %vm1677, %v1572, 0.0
        %v1710 = vsel %vm1678, %v1525, 0.0
        %v1711 = vsel %vm1679, %v1574, 0.0
        %v1712 = vsel %vm1680, %v1528, 0.0
        %v1713 = vsel %vm1681, %v1577, 0.0
        %v1714 = vsel %vm1682, %v1530, 0.0
        %v1715 = vsel %vm1683, %v1579, 0.0
        %v1716 = vsel %vm1684, %v1533, 0.0
        %v1717 = vsel %vm1685, %v1582, 0.0
        %v1718 = vsel %vm1686, %v1535, 0.0
        %v1719 = vsel %vm1687, %v1584, 0.0
        %v1720 = vpack.c.bf16 %v1689, %v1688
        %v1721 = vpack.c.bf16 %v1691, %v1690
        %v1722 = vpack.c.bf16 %v1693, %v1692
        %v1723 = vpack.c.bf16 %v1695, %v1694
        %v1724 = vpack.c.bf16 %v1697, %v1696
        %v1725 = vpack.c.bf16 %v1699, %v1698
        %v1726 = vpack.c.bf16 %v1701, %v1700
        %v1727 = vpack.c.bf16 %v1703, %v1702
        %v1728 = vpack.c.bf16 %v1705, %v1704
        %v1729 = vpack.c.bf16 %v1707, %v1706
        %v1730 = vpack.c.bf16 %v1709, %v1708
        %v1731 = vpack.c.bf16 %v1711, %v1710
        %v1732 = vpack.c.bf16 %v1713, %v1712
        %v1733 = vpack.c.bf16 %v1715, %v1714
        %v1734 = vpack.c.bf16 %v1717, %v1716
        %v1735 = vpack.c.bf16 %v1719, %v1718
        %1736 = vst [vmem:[%s564] sm:$0xff] %v1720
        %1737 = vst [vmem:[%s564 + $0x8] sm:$0xff] %v1721
        %1738 = vst [vmem:[%s564 + $0x10] sm:$0xff] %v1722
        %1739 = vst [vmem:[%s564 + $0x18] sm:$0xff] %v1723
        %1740 = vst [vmem:[%s564 + $0x20] sm:$0xff] %v1724
        %1741 = vst [vmem:[%s564 + $0x28] sm:$0xff] %v1725
        %1742 = vst [vmem:[%s564 + $0x30] sm:$0xff] %v1726
        %1743 = vst [vmem:[%s564 + $0x38] sm:$0xff] %v1727
        %1744 = vst [vmem:[%s564 + $0x40] sm:$0xff] %v1728
        %1745 = vst [vmem:[%s564 + $0x48] sm:$0xff] %v1729
        %1746 = vst [vmem:[%s564 + $0x50] sm:$0xff] %v1730
        %1747 = vst [vmem:[%s564 + $0x58] sm:$0xff] %v1731
        %1748 = vst [vmem:[%s564 + $0x60] sm:$0xff] %v1732
        %1749 = vst [vmem:[%s564 + $0x68] sm:$0xff] %v1733
        %1750 = vst [vmem:[%s564 + $0x70] sm:$0xff] %v1734
        %1751 = vst [vmem:[%s564 + $0x78] sm:$0xff] %v1735
        %v1752 = vld [vmem:[%s557] sm:$0xff]
        %v1753 = vld [vmem:[%s557 + $0x8] sm:$0xff]
        %v1754 = vld [vmem:[%s557 + $0x10] sm:$0xff]
        %v1755 = vld [vmem:[%s557 + $0x18] sm:$0xff]
        %v1756 = vld [vmem:[%s557 + $0x20] sm:$0xff]
        %v1757 = vld [vmem:[%s557 + $0x28] sm:$0xff]
        %v1758 = vld [vmem:[%s557 + $0x30] sm:$0xff]
        %v1759 = vld [vmem:[%s557 + $0x38] sm:$0xff]
        %v1760 = vld [vmem:[%s557 + $0x40] sm:$0xff]
        %v1761 = vld [vmem:[%s557 + $0x48] sm:$0xff]
        %v1762 = vld [vmem:[%s557 + $0x50] sm:$0xff]
        %v1763 = vld [vmem:[%s557 + $0x58] sm:$0xff]
        %v1764 = vld [vmem:[%s557 + $0x60] sm:$0xff]
        %v1765 = vld [vmem:[%s557 + $0x68] sm:$0xff]
        %v1766 = vld [vmem:[%s557 + $0x70] sm:$0xff]
        %v1767 = vld [vmem:[%s557 + $0x78] sm:$0xff]
        %v1768 = vld [vmem:[%s477] sm:$0xf]
        %v1769 = vld [vmem:[%s477 + $0x4] sm:$0xf]
        %v1770 = vld [vmem:[%s477 + $0x8] sm:$0xf]
        %v1771 = vld [vmem:[%s477 + $0xc] sm:$0xf]
        %v1772 = vld [vmem:[%s477 + $0x10] sm:$0xf]
        %v1773 = vld [vmem:[%s477 + $0x14] sm:$0xf]
        %v1774 = vld [vmem:[%s477 + $0x18] sm:$0xf]
        %v1775 = vld [vmem:[%s477 + $0x1c] sm:$0xf]
        %v1776 = vld [vmem:[%s477 + $0x20] sm:$0xf]
        %v1777 = vld [vmem:[%s477 + $0x24] sm:$0xf]
        %v1778 = vld [vmem:[%s477 + $0x28] sm:$0xf]
        %v1779 = vld [vmem:[%s477 + $0x2c] sm:$0xf]
        %v1780 = vld [vmem:[%s477 + $0x30] sm:$0xf]
        %v1781 = vld [vmem:[%s477 + $0x34] sm:$0xf]
        %v1782 = vld [vmem:[%s477 + $0x38] sm:$0xf]
        %v1783 = vld [vmem:[%s477 + $0x3c] sm:$0xf]
        %v1784 = vld [vmem:[%s477 + $0x40] sm:$0xf]
        %v1785 = vld [vmem:[%s477 + $0x44] sm:$0xf]
        %v1786 = vld [vmem:[%s477 + $0x48] sm:$0xf]
        %v1787 = vld [vmem:[%s477 + $0x4c] sm:$0xf]
        %v1788 = vld [vmem:[%s477 + $0x50] sm:$0xf]
        %v1789 = vld [vmem:[%s477 + $0x54] sm:$0xf]
        %v1790 = vld [vmem:[%s477 + $0x58] sm:$0xf]
        %v1791 = vld [vmem:[%s477 + $0x5c] sm:$0xf]
        %v1792 = vld [vmem:[%s477 + $0x60] sm:$0xf]
        %v1793 = vld [vmem:[%s477 + $0x64] sm:$0xf]
        %v1794 = vld [vmem:[%s477 + $0x68] sm:$0xf]
        %v1795 = vld [vmem:[%s477 + $0x6c] sm:$0xf]
        %v1796 = vld [vmem:[%s477 + $0x70] sm:$0xf]
        %v1797 = vld [vmem:[%s477 + $0x74] sm:$0xf]
        %v1798 = vld [vmem:[%s477 + $0x78] sm:$0xf]
        %v1799 = vld [vmem:[%s477 + $0x7c] sm:$0xf]
        %v1816 = vunpack.c.l.b16 %v1720
        %v1817 = vunpack.c.h.b16 %v1720
        %v1818 = vunpack.c.l.b16 %v1721
        %v1819 = vunpack.c.h.b16 %v1721
        %v1820 = vunpack.c.l.b16 %v1722
        %v1821 = vunpack.c.h.b16 %v1722
        %v1822 = vunpack.c.l.b16 %v1723
        %v1823 = vunpack.c.h.b16 %v1723
        %v1824 = vunpack.c.l.b16 %v1724
        %v1825 = vunpack.c.h.b16 %v1724
        %v1826 = vunpack.c.l.b16 %v1725
        %v1827 = vunpack.c.h.b16 %v1725
        %v1828 = vunpack.c.l.b16 %v1726
        %v1829 = vunpack.c.h.b16 %v1726
        %v1830 = vunpack.c.l.b16 %v1727
        %v1831 = vunpack.c.h.b16 %v1727
        %v1832 = vunpack.c.l.b16 %v1728
        %v1833 = vunpack.c.h.b16 %v1728
        %v1834 = vunpack.c.l.b16 %v1729
        %v1835 = vunpack.c.h.b16 %v1729
        %v1836 = vunpack.c.l.b16 %v1730
        %v1837 = vunpack.c.h.b16 %v1730
        %v1838 = vunpack.c.l.b16 %v1731
        %v1839 = vunpack.c.h.b16 %v1731
        %v1840 = vunpack.c.l.b16 %v1732
        %v1841 = vunpack.c.h.b16 %v1732
        %v1842 = vunpack.c.l.b16 %v1733
        %v1843 = vunpack.c.h.b16 %v1733
        %v1844 = vunpack.c.l.b16 %v1734
        %v1845 = vunpack.c.h.b16 %v1734
        %v1846 = vunpack.c.l.b16 %v1735
        %v1847 = vunpack.c.h.b16 %v1735
        %v1848 = vpack.c.b16 %v1818, %v1816
        %v1849 = vpack.c.b16 %v1819, %v1817
        %v1850 = vpack.c.b16 %v1822, %v1820
        %v1851 = vpack.c.b16 %v1823, %v1821
        %v1852 = vpack.c.b16 %v1826, %v1824
        %v1853 = vpack.c.b16 %v1827, %v1825
        %v1854 = vpack.c.b16 %v1830, %v1828
        %v1855 = vpack.c.b16 %v1831, %v1829
        %v1856 = vpack.c.b16 %v1834, %v1832
        %v1857 = vpack.c.b16 %v1835, %v1833
        %v1858 = vpack.c.b16 %v1838, %v1836
        %v1859 = vpack.c.b16 %v1839, %v1837
        %v1860 = vpack.c.b16 %v1842, %v1840
        %v1861 = vpack.c.b16 %v1843, %v1841
        %v1862 = vpack.c.b16 %v1846, %v1844
        %v1863 = vpack.c.b16 %v1847, %v1845
        %v1912 = vunpack.c.l.b16 %v1768
        %v1913 = vunpack.c.l.b16 %v1769
        %v1914 = vunpack.c.l.b16 %v1770
        %v1915 = vunpack.c.l.b16 %v1771
        %v1916 = vunpack.c.l.b16 %v1772
        %v1917 = vunpack.c.l.b16 %v1773
        %v1918 = vunpack.c.l.b16 %v1774
        %v1919 = vunpack.c.l.b16 %v1775
        %v1920 = vunpack.c.l.b16 %v1776
        %v1921 = vunpack.c.l.b16 %v1777
        %v1922 = vunpack.c.l.b16 %v1778
        %v1923 = vunpack.c.l.b16 %v1779
        %v1924 = vunpack.c.l.b16 %v1780
        %v1925 = vunpack.c.l.b16 %v1781
        %v1926 = vunpack.c.l.b16 %v1782
        %v1927 = vunpack.c.l.b16 %v1783
        %v1928 = vunpack.c.l.b16 %v1784
        %v1929 = vunpack.c.l.b16 %v1785
        %v1930 = vunpack.c.l.b16 %v1786
        %v1931 = vunpack.c.l.b16 %v1787
        %v1932 = vunpack.c.l.b16 %v1788
        %v1933 = vunpack.c.l.b16 %v1789
        %v1934 = vunpack.c.l.b16 %v1790
        %v1935 = vunpack.c.l.b16 %v1791
        %v1936 = vunpack.c.l.b16 %v1792
        %v1937 = vunpack.c.l.b16 %v1793
        %v1938 = vunpack.c.l.b16 %v1794
        %v1939 = vunpack.c.l.b16 %v1795
        %v1940 = vunpack.c.l.b16 %v1796
        %v1941 = vunpack.c.l.b16 %v1797
        %v1942 = vunpack.c.l.b16 %v1798
        %v1943 = vunpack.c.l.b16 %v1799
        %v1944 = vpack.c.b16 %v1913, %v1912
        %v1945 = vpack.c.b16 %v1915, %v1914
        %v1946 = vpack.c.b16 %v1917, %v1916
        %v1947 = vpack.c.b16 %v1919, %v1918
        %v1948 = vpack.c.b16 %v1921, %v1920
        %v1949 = vpack.c.b16 %v1923, %v1922
        %v1950 = vpack.c.b16 %v1925, %v1924
        %v1951 = vpack.c.b16 %v1927, %v1926
        %v1952 = vpack.c.b16 %v1929, %v1928
        %v1953 = vpack.c.b16 %v1931, %v1930
        %v1954 = vpack.c.b16 %v1933, %v1932
        %v1955 = vpack.c.b16 %v1935, %v1934
        %v1956 = vpack.c.b16 %v1937, %v1936
        %v1957 = vpack.c.b16 %v1939, %v1938
        %v1958 = vpack.c.b16 %v1941, %v1940
        %v1959 = vpack.c.b16 %v1943, %v1942
        %1976 = vmatpush.bf16.msra.mxu0 %v1951
        %1977 = vmatpush.bf16.msra.mxu0 %v1950
        %1978 = vmatpush.bf16.msra.mxu0 %v1949
        %1979 = vmatpush.bf16.msra.mxu0 %v1948
        %1980 = vmatpush.bf16.msra.mxu0 %v1947
        %1981 = vmatpush.bf16.msra.mxu0 %v1946
        %1982 = vmatpush.bf16.msra.mxu0 %v1945
        %1983 = vmatpush.bf16.msra.mxu0 %v1944
        %1984 = vmatmul.bf16.gmra.mxu0 %v1848
        %v1985 = vpop.f32.mrf.mxu0
        %v1986 = vadd.f32 0.0, %v1985
        %v1987 = vpop.f32.mrf.mxu0
        %v1988 = vadd.f32 0.0, %v1987
        %1989 = vmatmul.bf16.gmra.mxu0 %v1850
        %v1990 = vpop.f32.mrf.mxu0
        %v1991 = vadd.f32 0.0, %v1990
        %v1992 = vpop.f32.mrf.mxu0
        %v1993 = vadd.f32 0.0, %v1992
        %1994 = vmatmul.bf16.gmra.mxu0 %v1852
        %v1995 = vpop.f32.mrf.mxu0
        %v1996 = vadd.f32 0.0, %v1995
        %v1997 = vpop.f32.mrf.mxu0
        %v1998 = vadd.f32 0.0, %v1997
        %1999 = vmatmul.bf16.gmra.mxu0 %v1854
        %v2000 = vpop.f32.mrf.mxu0
        %v2001 = vadd.f32 0.0, %v2000
        %v2002 = vpop.f32.mrf.mxu0
        %v2003 = vadd.f32 0.0, %v2002
        %2004 = vmatmul.bf16.gmra.mxu0 %v1856
        %v2005 = vpop.f32.mrf.mxu0
        %v2006 = vadd.f32 0.0, %v2005
        %v2007 = vpop.f32.mrf.mxu0
        %v2008 = vadd.f32 0.0, %v2007
        %2009 = vmatmul.bf16.gmra.mxu0 %v1858
        %v2010 = vpop.f32.mrf.mxu0
        %v2011 = vadd.f32 0.0, %v2010
        %v2012 = vpop.f32.mrf.mxu0
        %v2013 = vadd.f32 0.0, %v2012
        %2014 = vmatmul.bf16.gmra.mxu0 %v1860
        %v2015 = vpop.f32.mrf.mxu0
        %v2016 = vadd.f32 0.0, %v2015
        %v2017 = vpop.f32.mrf.mxu0
        %v2018 = vadd.f32 0.0, %v2017
        %2019 = vmatmul.bf16.gmra.mxu0 %v1862
        %v2020 = vpop.f32.mrf.mxu0
        %v2021 = vadd.f32 0.0, %v2020
        %v2022 = vpop.f32.mrf.mxu0
        %v2023 = vadd.f32 0.0, %v2022
        %2024 = vdwg.mxu0
        %2025 = vmatpush.bf16.msra.mxu0 %v1959
        %2026 = vmatpush.bf16.msra.mxu0 %v1958
        %2027 = vmatpush.bf16.msra.mxu0 %v1957
        %2028 = vmatpush.bf16.msra.mxu0 %v1956
        %2029 = vmatpush.bf16.msra.mxu0 %v1955
        %2030 = vmatpush.bf16.msra.mxu0 %v1954
        %2031 = vmatpush.bf16.msra.mxu0 %v1953
        %2032 = vmatpush.bf16.msra.mxu0 %v1952
        %2033 = vmatmul.bf16.gmra.mxu0 %v1849
        %v2034 = vpop.f32.mrf.mxu0
        %v2035 = vadd.f32 %v1986, %v2034
        %v2036 = vpop.f32.mrf.mxu0
        %v2037 = vadd.f32 %v1988, %v2036
        %2038 = vmatmul.bf16.gmra.mxu0 %v1851
        %v2039 = vpop.f32.mrf.mxu0
        %v2040 = vadd.f32 %v1991, %v2039
        %v2041 = vpop.f32.mrf.mxu0
        %v2042 = vadd.f32 %v1993, %v2041
        %2043 = vmatmul.bf16.gmra.mxu0 %v1853
        %v2044 = vpop.f32.mrf.mxu0
        %v2045 = vadd.f32 %v1996, %v2044
        %v2046 = vpop.f32.mrf.mxu0
        %v2047 = vadd.f32 %v1998, %v2046
        %2048 = vmatmul.bf16.gmra.mxu0 %v1855
        %v2049 = vpop.f32.mrf.mxu0
        %v2050 = vadd.f32 %v2001, %v2049
        %v2051 = vpop.f32.mrf.mxu0
        %v2052 = vadd.f32 %v2003, %v2051
        %2053 = vmatmul.bf16.gmra.mxu0 %v1857
        %v2054 = vpop.f32.mrf.mxu0
        %v2055 = vadd.f32 %v2006, %v2054
        %v2056 = vpop.f32.mrf.mxu0
        %v2057 = vadd.f32 %v2008, %v2056
        %2058 = vmatmul.bf16.gmra.mxu0 %v1859
        %v2059 = vpop.f32.mrf.mxu0
        %v2060 = vadd.f32 %v2011, %v2059
        %v2061 = vpop.f32.mrf.mxu0
        %v2062 = vadd.f32 %v2013, %v2061
        %2063 = vmatmul.bf16.gmra.mxu0 %v1861
        %v2064 = vpop.f32.mrf.mxu0
        %v2065 = vadd.f32 %v2016, %v2064
        %v2066 = vpop.f32.mrf.mxu0
        %v2067 = vadd.f32 %v2018, %v2066
        %2068 = vmatmul.bf16.gmra.mxu0 %v1863
        %v2069 = vpop.f32.mrf.mxu0
        %v2070 = vadd.f32 %v2021, %v2069
        %v2071 = vpop.f32.mrf.mxu0
        %v2072 = vadd.f32 %v2023, %v2071
        %2073 = vdwg.mxu0
        %v2074 = vadd.f32 %v1752, %v2035
        %v2075 = vadd.f32 %v1753, %v2037
        %v2076 = vadd.f32 %v1754, %v2040
        %v2077 = vadd.f32 %v1755, %v2042
        %v2078 = vadd.f32 %v1756, %v2045
        %v2079 = vadd.f32 %v1757, %v2047
        %v2080 = vadd.f32 %v1758, %v2050
        %v2081 = vadd.f32 %v1759, %v2052
        %v2082 = vadd.f32 %v1760, %v2055
        %v2083 = vadd.f32 %v1761, %v2057
        %v2084 = vadd.f32 %v1762, %v2060
        %v2085 = vadd.f32 %v1763, %v2062
        %v2086 = vadd.f32 %v1764, %v2065
        %v2087 = vadd.f32 %v1765, %v2067
        %v2088 = vadd.f32 %v1766, %v2070
        %v2089 = vadd.f32 %v1767, %v2072
        %2090 = vst [vmem:[%s557] sm:$0xff] %v2074
        %2091 = vst [vmem:[%s557 + $0x8] sm:$0xff] %v2075
        %2092 = vst [vmem:[%s557 + $0x10] sm:$0xff] %v2076
        %2093 = vst [vmem:[%s557 + $0x18] sm:$0xff] %v2077
        %2094 = vst [vmem:[%s557 + $0x20] sm:$0xff] %v2078
        %2095 = vst [vmem:[%s557 + $0x28] sm:$0xff] %v2079
        %2096 = vst [vmem:[%s557 + $0x30] sm:$0xff] %v2080
        %2097 = vst [vmem:[%s557 + $0x38] sm:$0xff] %v2081
        %2098 = vst [vmem:[%s557 + $0x40] sm:$0xff] %v2082
        %2099 = vst [vmem:[%s557 + $0x48] sm:$0xff] %v2083
        %2100 = vst [vmem:[%s557 + $0x50] sm:$0xff] %v2084
        %2101 = vst [vmem:[%s557 + $0x58] sm:$0xff] %v2085
        %2102 = vst [vmem:[%s557 + $0x60] sm:$0xff] %v2086
        %2103 = vst [vmem:[%s557 + $0x68] sm:$0xff] %v2087
        %2104 = vst [vmem:[%s557 + $0x70] sm:$0xff] %v2088
        %2105 = vst [vmem:[%s557 + $0x78] sm:$0xff] %v2089
        %v2106 = vld [vmem:[%s502] sm:$0x3]
        %v2107 = vld [vmem:[#allocation3] sm:$0x3]
        %v2108 = vmul.f32 %v1688, 4.0
        %v2109 = vmul.f32 %v1689, 4.0
        %v2110 = vmul.f32 %v1690, 4.0
        %v2111 = vmul.f32 %v1691, 4.0
        %v2112 = vmul.f32 %v1692, 4.0
        %v2113 = vmul.f32 %v1693, 4.0
        %v2114 = vmul.f32 %v1694, 4.0
        %v2115 = vmul.f32 %v1695, 4.0
        %v2116 = vmul.f32 %v1696, 4.0
        %v2117 = vmul.f32 %v1697, 4.0
        %v2118 = vmul.f32 %v1698, 4.0
        %v2119 = vmul.f32 %v1699, 4.0
        %v2120 = vmul.f32 %v1700, 4.0
        %v2121 = vmul.f32 %v1701, 4.0
        %v2122 = vmul.f32 %v1702, 4.0
        %v2123 = vmul.f32 %v1703, 4.0
        %v2124 = vmul.f32 %v1704, 4.0
        %v2125 = vmul.f32 %v1705, 4.0
        %v2126 = vmul.f32 %v1706, 4.0
        %v2127 = vmul.f32 %v1707, 4.0
        %v2128 = vmul.f32 %v1708, 4.0
        %v2129 = vmul.f32 %v1709, 4.0
        %v2130 = vmul.f32 %v1710, 4.0
        %v2131 = vmul.f32 %v1711, 4.0
        %v2132 = vmul.f32 %v1712, 4.0
        %v2133 = vmul.f32 %v1713, 4.0
        %v2134 = vmul.f32 %v1714, 4.0
        %v2135 = vmul.f32 %v1715, 4.0
        %v2136 = vmul.f32 %v1716, 4.0
        %v2137 = vmul.f32 %v1717, 4.0
        %v2138 = vmul.f32 %v1718, 4.0
        %v2139 = vmul.f32 %v1719, 4.0
        %v2141 = vperm.slane %v2106, 0
        %v2142 = vperm.slane %v2106, 1
        %v2145 = vmul.f32 %v2108, %v2141
        %v2146 = vmul.f32 %v2109, %v2142
        %v2147 = vmul.f32 %v2110, %v2141
        %v2148 = vmul.f32 %v2111, %v2142
        %v2149 = vmul.f32 %v2112, %v2141
        %v2150 = vmul.f32 %v2113, %v2142
        %v2151 = vmul.f32 %v2114, %v2141
        %v2152 = vmul.f32 %v2115, %v2142
        %v2153 = vmul.f32 %v2116, %v2141
        %v2154 = vmul.f32 %v2117, %v2142
        %v2155 = vmul.f32 %v2118, %v2141
        %v2156 = vmul.f32 %v2119, %v2142
        %v2157 = vmul.f32 %v2120, %v2141
        %v2158 = vmul.f32 %v2121, %v2142
        %v2159 = vmul.f32 %v2122, %v2141
        %v2160 = vmul.f32 %v2123, %v2142
        %v2161 = vmul.f32 %v2124, %v2141
        %v2162 = vmul.f32 %v2125, %v2142
        %v2163 = vmul.f32 %v2126, %v2141
        %v2164 = vmul.f32 %v2127, %v2142
        %v2165 = vmul.f32 %v2128, %v2141
        %v2166 = vmul.f32 %v2129, %v2142
        %v2167 = vmul.f32 %v2130, %v2141
        %v2168 = vmul.f32 %v2131, %v2142
        %v2169 = vmul.f32 %v2132, %v2141
        %v2170 = vmul.f32 %v2133, %v2142
        %v2171 = vmul.f32 %v2134, %v2141
        %v2172 = vmul.f32 %v2135, %v2142
        %v2173 = vmul.f32 %v2136, %v2141
        %v2174 = vmul.f32 %v2137, %v2142
        %v2175 = vmul.f32 %v2138, %v2141
        %v2176 = vmul.f32 %v2139, %v2142
        %v2177 = vtanh.pop %v2145
        %v2178 = vtanh.pop %v2146
        %v2179 = vtanh.pop %v2147
        %v2180 = vtanh.pop %v2148
        %v2181 = vtanh.pop %v2149
        %v2182 = vtanh.pop %v2150
        %v2183 = vtanh.pop %v2151
        %v2184 = vtanh.pop %v2152
        %v2185 = vtanh.pop %v2153
        %v2186 = vtanh.pop %v2154
        %v2187 = vtanh.pop %v2155
        %v2188 = vtanh.pop %v2156
        %v2189 = vtanh.pop %v2157
        %v2190 = vtanh.pop %v2158
        %v2191 = vtanh.pop %v2159
        %v2192 = vtanh.pop %v2160
        %v2193 = vtanh.pop %v2161
        %v2194 = vtanh.pop %v2162
        %v2195 = vtanh.pop %v2163
        %v2196 = vtanh.pop %v2164
        %v2197 = vtanh.pop %v2165
        %v2198 = vtanh.pop %v2166
        %v2199 = vtanh.pop %v2167
        %v2200 = vtanh.pop %v2168
        %v2201 = vtanh.pop %v2169
        %v2202 = vtanh.pop %v2170
        %v2203 = vtanh.pop %v2171
        %v2204 = vtanh.pop %v2172
        %v2205 = vtanh.pop %v2173
        %v2206 = vtanh.pop %v2174
        %v2207 = vtanh.pop %v2175
        %v2208 = vtanh.pop %v2176
        %v2209 = vadd.f32 %v2177, %v2179
        %v2210 = vadd.f32 %v2209, %v2181
        %v2211 = vadd.f32 %v2210, %v2183
        %v2212 = vadd.f32 %v2211, %v2185
        %v2213 = vadd.f32 %v2212, %v2187
        %v2214 = vadd.f32 %v2213, %v2189
        %v2215 = vadd.f32 %v2214, %v2191
        %v2216 = vadd.f32 %v2215, %v2193
        %v2217 = vadd.f32 %v2216, %v2195
        %v2218 = vadd.f32 %v2217, %v2197
        %v2219 = vadd.f32 %v2218, %v2199
        %v2220 = vadd.f32 %v2219, %v2201
        %v2221 = vadd.f32 %v2220, %v2203
        %v2222 = vadd.f32 %v2221, %v2205
        %v2223 = vadd.f32 %v2222, %v2207
        %v2224 = vrot.slane %v2223, 4
        %v2225 = vadd.f32 %v2223, %v2224
        %v2226 = vrot.slane %v2225, 2
        %v2227 = vadd.f32 %v2225, %v2226
        %v2228 = vrot.slane %v2227, 1
        %v2229 = vadd.f32 %v2227, %v2228
        %v2230 = vadd.f32 %v2178, %v2180
        %v2231 = vadd.f32 %v2230, %v2182
        %v2232 = vadd.f32 %v2231, %v2184
        %v2233 = vadd.f32 %v2232, %v2186
        %v2234 = vadd.f32 %v2233, %v2188
        %v2235 = vadd.f32 %v2234, %v2190
        %v2236 = vadd.f32 %v2235, %v2192
        %v2237 = vadd.f32 %v2236, %v2194
        %v2238 = vadd.f32 %v2237, %v2196
        %v2239 = vadd.f32 %v2238, %v2198
        %v2240 = vadd.f32 %v2239, %v2200
        %v2241 = vadd.f32 %v2240, %v2202
        %v2242 = vadd.f32 %v2241, %v2204
        %v2243 = vadd.f32 %v2242, %v2206
        %v2244 = vadd.f32 %v2243, %v2208
        %v2245 = vrot.slane %v2244, 4
        %v2246 = vadd.f32 %v2244, %v2245
        %v2247 = vrot.slane %v2246, 2
        %v2248 = vadd.f32 %v2246, %v2247
        %v2249 = vrot.slane %v2248, 1
        %v2250 = vadd.f32 %v2248, %v2249
        %v2253 = vrot.slane %v2250, 7
        %vm2254 = vcmask 1040384
        %v2255 = vsel %vm2254, %v2229, %v2253
        %v2257 = vadd.f32 %v2107, %v2255
        %v2258 = vlaneseq
        %vm2259 = vcmp.ge.s32.totalorder %v2258, 0
        %vm2260 = vcmp.lt.s32.totalorder %v2258, 256
        %vm2261 = vmand %vm2259, %vm2260
        %2262 = vst.msk [vmem:[#allocation3] sm:$0x3] %vm2261, %v2257
        %v2263 = vld [vmem:[#allocation4] sm:$0x3]
        %v2264 = vsub.f32 %v1588, %v1498
        %v2265 = vsub.f32 %v1589, %v1547
        %v2266 = vsub.f32 %v1588, %v1500
        %v2267 = vsub.f32 %v1589, %v1549
        %v2268 = vsub.f32 %v1588, %v1503
        %v2269 = vsub.f32 %v1589, %v1552
        %v2270 = vsub.f32 %v1588, %v1505
        %v2271 = vsub.f32 %v1589, %v1554
        %v2272 = vsub.f32 %v1588, %v1508
        %v2273 = vsub.f32 %v1589, %v1557
        %v2274 = vsub.f32 %v1588, %v1510
        %v2275 = vsub.f32 %v1589, %v1559
        %v2276 = vsub.f32 %v1588, %v1513
        %v2277 = vsub.f32 %v1589, %v1562
        %v2278 = vsub.f32 %v1588, %v1515
        %v2279 = vsub.f32 %v1589, %v1564
        %v2280 = vsub.f32 %v1588, %v1518
        %v2281 = vsub.f32 %v1589, %v1567
        %v2282 = vsub.f32 %v1588, %v1520
        %v2283 = vsub.f32 %v1589, %v1569
        %v2284 = vsub.f32 %v1588, %v1523
        %v2285 = vsub.f32 %v1589, %v1572
        %v2286 = vsub.f32 %v1588, %v1525
        %v2287 = vsub.f32 %v1589, %v1574
        %v2288 = vsub.f32 %v1588, %v1528
        %v2289 = vsub.f32 %v1589, %v1577
        %v2290 = vsub.f32 %v1588, %v1530
        %v2291 = vsub.f32 %v1589, %v1579
        %v2292 = vsub.f32 %v1588, %v1533
        %v2293 = vsub.f32 %v1589, %v1582
        %v2294 = vsub.f32 %v1588, %v1535
        %v2295 = vsub.f32 %v1589, %v1584
        %v2296 = vmax.f32 %v2264, 0.0
        %v2297 = vmax.f32 %v2265, 0.0
        %v2298 = vmax.f32 %v2266, 0.0
        %v2299 = vmax.f32 %v2267, 0.0
        %v2300 = vmax.f32 %v2268, 0.0
        %v2301 = vmax.f32 %v2269, 0.0
        %v2302 = vmax.f32 %v2270, 0.0
        %v2303 = vmax.f32 %v2271, 0.0
        %v2304 = vmax.f32 %v2272, 0.0
        %v2305 = vmax.f32 %v2273, 0.0
        %v2306 = vmax.f32 %v2274, 0.0
        %v2307 = vmax.f32 %v2275, 0.0
        %v2308 = vmax.f32 %v2276, 0.0
        %v2309 = vmax.f32 %v2277, 0.0
        %v2310 = vmax.f32 %v2278, 0.0
        %v2311 = vmax.f32 %v2279, 0.0
        %v2312 = vmax.f32 %v2280, 0.0
        %v2313 = vmax.f32 %v2281, 0.0
        %v2314 = vmax.f32 %v2282, 0.0
        %v2315 = vmax.f32 %v2283, 0.0
        %v2316 = vmax.f32 %v2284, 0.0
        %v2317 = vmax.f32 %v2285, 0.0
        %v2318 = vmax.f32 %v2286, 0.0
        %v2319 = vmax.f32 %v2287, 0.0
        %v2320 = vmax.f32 %v2288, 0.0
        %v2321 = vmax.f32 %v2289, 0.0
        %v2322 = vmax.f32 %v2290, 0.0
        %v2323 = vmax.f32 %v2291, 0.0
        %v2324 = vmax.f32 %v2292, 0.0
        %v2325 = vmax.f32 %v2293, 0.0
        %v2326 = vmax.f32 %v2294, 0.0
        %v2327 = vmax.f32 %v2295, 0.0
        %v2328 = vsel %vm1640, %v2296, 0.0
        %v2329 = vsel %vm1640, %v2297, 0.0
        %v2330 = vsel %vm1641, %v2298, 0.0
        %v2331 = vsel %vm1641, %v2299, 0.0
        %v2332 = vsel %vm1642, %v2300, 0.0
        %v2333 = vsel %vm1642, %v2301, 0.0
        %v2334 = vsel %vm1643, %v2302, 0.0
        %v2335 = vsel %vm1643, %v2303, 0.0
        %v2336 = vsel %vm1644, %v2304, 0.0
        %v2337 = vsel %vm1644, %v2305, 0.0
        %v2338 = vsel %vm1645, %v2306, 0.0
        %v2339 = vsel %vm1645, %v2307, 0.0
        %v2340 = vsel %vm1646, %v2308, 0.0
        %v2341 = vsel %vm1646, %v2309, 0.0
        %v2342 = vsel %vm1647, %v2310, 0.0
        %v2343 = vsel %vm1647, %v2311, 0.0
        %v2344 = vsel %vm1648, %v2312, 0.0
        %v2345 = vsel %vm1648, %v2313, 0.0
        %v2346 = vsel %vm1649, %v2314, 0.0
        %v2347 = vsel %vm1649, %v2315, 0.0
        %v2348 = vsel %vm1650, %v2316, 0.0
        %v2349 = vsel %vm1650, %v2317, 0.0
        %v2350 = vsel %vm1651, %v2318, 0.0
        %v2351 = vsel %vm1651, %v2319, 0.0
        %v2352 = vsel %vm1652, %v2320, 0.0
        %v2353 = vsel %vm1652, %v2321, 0.0
        %v2354 = vsel %vm1653, %v2322, 0.0
        %v2355 = vsel %vm1653, %v2323, 0.0
        %v2356 = vsel %vm1654, %v2324, 0.0
        %v2357 = vsel %vm1654, %v2325, 0.0
        %v2358 = vsel %vm1655, %v2326, 0.0
        %v2359 = vsel %vm1655, %v2327, 0.0
        %v2360 = vadd.f32 %v2328, %v2330
        %v2361 = vadd.f32 %v2360, %v2332
        %v2362 = vadd.f32 %v2361, %v2334
        %v2363 = vadd.f32 %v2362, %v2336
        %v2364 = vadd.f32 %v2363, %v2338
        %v2365 = vadd.f32 %v2364, %v2340
        %v2366 = vadd.f32 %v2365, %v2342
        %v2367 = vadd.f32 %v2366, %v2344
        %v2368 = vadd.f32 %v2367, %v2346
        %v2369 = vadd.f32 %v2368, %v2348
        %v2370 = vadd.f32 %v2369, %v2350
        %v2371 = vadd.f32 %v2370, %v2352
        %v2372 = vadd.f32 %v2371, %v2354
        %v2373 = vadd.f32 %v2372, %v2356
        %v2374 = vadd.f32 %v2373, %v2358
        %v2375 = vrot.slane %v2374, 4
        %v2376 = vadd.f32 %v2374, %v2375
        %v2377 = vrot.slane %v2376, 2
        %v2378 = vadd.f32 %v2376, %v2377
        %v2379 = vrot.slane %v2378, 1
        %v2380 = vadd.f32 %v2378, %v2379
        %v2381 = vadd.f32 %v2329, %v2331
        %v2382 = vadd.f32 %v2381, %v2333
        %v2383 = vadd.f32 %v2382, %v2335
        %v2384 = vadd.f32 %v2383, %v2337
        %v2385 = vadd.f32 %v2384, %v2339
        %v2386 = vadd.f32 %v2385, %v2341
        %v2387 = vadd.f32 %v2386, %v2343
        %v2388 = vadd.f32 %v2387, %v2345
        %v2389 = vadd.f32 %v2388, %v2347
        %v2390 = vadd.f32 %v2389, %v2349
        %v2391 = vadd.f32 %v2390, %v2351
        %v2392 = vadd.f32 %v2391, %v2353
        %v2393 = vadd.f32 %v2392, %v2355
        %v2394 = vadd.f32 %v2393, %v2357
        %v2395 = vadd.f32 %v2394, %v2359
        %v2396 = vrot.slane %v2395, 4
        %v2397 = vadd.f32 %v2395, %v2396
        %v2398 = vrot.slane %v2397, 2
        %v2399 = vadd.f32 %v2397, %v2398
        %v2400 = vrot.slane %v2399, 1
        %v2401 = vadd.f32 %v2399, %v2400
        %v2402 = vmul.f32 %v2380, %v2141
        %v2403 = vmul.f32 %v2401, %v2142
        %v2406 = vrot.slane %v2403, 7
        %v2407 = vsel %vm2254, %v2402, %v2406
        %v2409 = vadd.f32 %v2263, %v2407
        %2410 = vst.msk [vmem:[#allocation4] sm:$0x3] %vm2261, %v2409
        %v2411 = vld [vmem:[#allocation5] sm:$0x3]
        %v2412 = vsel %vm1656, 1, 0
        %v2413 = vsel %vm1657, 1, 0
        %v2414 = vsel %vm1658, 1, 0
        %v2415 = vsel %vm1659, 1, 0
        %v2416 = vsel %vm1660, 1, 0
        %v2417 = vsel %vm1661, 1, 0
        %v2418 = vsel %vm1662, 1, 0
        %v2419 = vsel %vm1663, 1, 0
        %v2420 = vsel %vm1664, 1, 0
        %v2421 = vsel %vm1665, 1, 0
        %v2422 = vsel %vm1666, 1, 0
        %v2423 = vsel %vm1667, 1, 0
        %v2424 = vsel %vm1668, 1, 0
        %v2425 = vsel %vm1669, 1, 0
        %v2426 = vsel %vm1670, 1, 0
        %v2427 = vsel %vm1671, 1, 0
        %v2428 = vsel %vm1672, 1, 0
        %v2429 = vsel %vm1673, 1, 0
        %v2430 = vsel %vm1674, 1, 0
        %v2431 = vsel %vm1675, 1, 0
        %v2432 = vsel %vm1676, 1, 0
        %v2433 = vsel %vm1677, 1, 0
        %v2434 = vsel %vm1678, 1, 0
        %v2435 = vsel %vm1679, 1, 0
        %v2436 = vsel %vm1680, 1, 0
        %v2437 = vsel %vm1681, 1, 0
        %v2438 = vsel %vm1682, 1, 0
        %v2439 = vsel %vm1683, 1, 0
        %v2440 = vsel %vm1684, 1, 0
        %v2441 = vsel %vm1685, 1, 0
        %v2442 = vsel %vm1686, 1, 0
        %v2443 = vsel %vm1687, 1, 0
        %v2444 = vcvt.s32.f32 %v2412
        %v2445 = vcvt.s32.f32 %v2413
        %v2446 = vcvt.s32.f32 %v2414
        %v2447 = vcvt.s32.f32 %v2415
        %v2448 = vcvt.s32.f32 %v2416
        %v2449 = vcvt.s32.f32 %v2417
        %v2450 = vcvt.s32.f32 %v2418
        %v2451 = vcvt.s32.f32 %v2419
        %v2452 = vcvt.s32.f32 %v2420
        %v2453 = vcvt.s32.f32 %v2421
        %v2454 = vcvt.s32.f32 %v2422
        %v2455 = vcvt.s32.f32 %v2423
        %v2456 = vcvt.s32.f32 %v2424
        %v2457 = vcvt.s32.f32 %v2425
        %v2458 = vcvt.s32.f32 %v2426
        %v2459 = vcvt.s32.f32 %v2427
        %v2460 = vcvt.s32.f32 %v2428
        %v2461 = vcvt.s32.f32 %v2429
        %v2462 = vcvt.s32.f32 %v2430
        %v2463 = vcvt.s32.f32 %v2431
        %v2464 = vcvt.s32.f32 %v2432
        %v2465 = vcvt.s32.f32 %v2433
        %v2466 = vcvt.s32.f32 %v2434
        %v2467 = vcvt.s32.f32 %v2435
        %v2468 = vcvt.s32.f32 %v2436
        %v2469 = vcvt.s32.f32 %v2437
        %v2470 = vcvt.s32.f32 %v2438
        %v2471 = vcvt.s32.f32 %v2439
        %v2472 = vcvt.s32.f32 %v2440
        %v2473 = vcvt.s32.f32 %v2441
        %v2474 = vcvt.s32.f32 %v2442
        %v2475 = vcvt.s32.f32 %v2443
        %v2476 = vadd.f32 %v2444, %v2446
        %v2477 = vadd.f32 %v2476, %v2448
        %v2478 = vadd.f32 %v2477, %v2450
        %v2479 = vadd.f32 %v2478, %v2452
        %v2480 = vadd.f32 %v2479, %v2454
        %v2481 = vadd.f32 %v2480, %v2456
        %v2482 = vadd.f32 %v2481, %v2458
        %v2483 = vadd.f32 %v2482, %v2460
        %v2484 = vadd.f32 %v2483, %v2462
        %v2485 = vadd.f32 %v2484, %v2464
        %v2486 = vadd.f32 %v2485, %v2466
        %v2487 = vadd.f32 %v2486, %v2468
        %v2488 = vadd.f32 %v2487, %v2470
        %v2489 = vadd.f32 %v2488, %v2472
        %v2490 = vadd.f32 %v2489, %v2474
        %v2491 = vrot.slane %v2490, 4
        %v2492 = vadd.f32 %v2490, %v2491
        %v2493 = vrot.slane %v2492, 2
        %v2494 = vadd.f32 %v2492, %v2493
        %v2495 = vrot.slane %v2494, 1
        %v2496 = vadd.f32 %v2494, %v2495
        %v2497 = vadd.f32 %v2445, %v2447
        %v2498 = vadd.f32 %v2497, %v2449
        %v2499 = vadd.f32 %v2498, %v2451
        %v2500 = vadd.f32 %v2499, %v2453
        %v2501 = vadd.f32 %v2500, %v2455
        %v2502 = vadd.f32 %v2501, %v2457
        %v2503 = vadd.f32 %v2502, %v2459
        %v2504 = vadd.f32 %v2503, %v2461
        %v2505 = vadd.f32 %v2504, %v2463
        %v2506 = vadd.f32 %v2505, %v2465
        %v2507 = vadd.f32 %v2506, %v2467
        %v2508 = vadd.f32 %v2507, %v2469
        %v2509 = vadd.f32 %v2508, %v2471
        %v2510 = vadd.f32 %v2509, %v2473
        %v2511 = vadd.f32 %v2510, %v2475
        %v2512 = vrot.slane %v2511, 4
        %v2513 = vadd.f32 %v2511, %v2512
        %v2514 = vrot.slane %v2513, 2
        %v2515 = vadd.f32 %v2513, %v2514
        %v2516 = vrot.slane %v2515, 1
        %v2517 = vadd.f32 %v2515, %v2516
        %v2520 = vrot.slane %v2517, 7
        %v2521 = vsel %vm2254, %v2496, %v2520
        %v2523 = vadd.f32 %v2411, %v2521
        %2524 = vst.msk [vmem:[#allocation5] sm:$0x3] %vm2261, %v2523
        %v2525 = vld [vmem:[#allocation6] sm:$0x3]
        %v2526 = vadd.f32 %v1688, %v1690
        %v2527 = vadd.f32 %v2526, %v1692
        %v2528 = vadd.f32 %v2527, %v1694
        %v2529 = vadd.f32 %v2528, %v1696
        %v2530 = vadd.f32 %v2529, %v1698
        %v2531 = vadd.f32 %v2530, %v1700
        %v2532 = vadd.f32 %v2531, %v1702
        %v2533 = vadd.f32 %v2532, %v1704
        %v2534 = vadd.f32 %v2533, %v1706
        %v2535 = vadd.f32 %v2534, %v1708
        %v2536 = vadd.f32 %v2535, %v1710
        %v2537 = vadd.f32 %v2536, %v1712
        %v2538 = vadd.f32 %v2537, %v1714
        %v2539 = vadd.f32 %v2538, %v1716
        %v2540 = vadd.f32 %v2539, %v1718
        %v2541 = vrot.slane %v2540, 4
        %v2542 = vadd.f32 %v2540, %v2541
        %v2543 = vrot.slane %v2542, 2
        %v2544 = vadd.f32 %v2542, %v2543
        %v2545 = vrot.slane %v2544, 1
        %v2546 = vadd.f32 %v2544, %v2545
        %v2547 = vadd.f32 %v1689, %v1691
        %v2548 = vadd.f32 %v2547, %v1693
        %v2549 = vadd.f32 %v2548, %v1695
        %v2550 = vadd.f32 %v2549, %v1697
        %v2551 = vadd.f32 %v2550, %v1699
        %v2552 = vadd.f32 %v2551, %v1701
        %v2553 = vadd.f32 %v2552, %v1703
        %v2554 = vadd.f32 %v2553, %v1705
        %v2555 = vadd.f32 %v2554, %v1707
        %v2556 = vadd.f32 %v2555, %v1709
        %v2557 = vadd.f32 %v2556, %v1711
        %v2558 = vadd.f32 %v2557, %v1713
        %v2559 = vadd.f32 %v2558, %v1715
        %v2560 = vadd.f32 %v2559, %v1717
        %v2561 = vadd.f32 %v2560, %v1719
        %v2562 = vrot.slane %v2561, 4
        %v2563 = vadd.f32 %v2561, %v2562
        %v2564 = vrot.slane %v2563, 2
        %v2565 = vadd.f32 %v2563, %v2564
        %v2566 = vrot.slane %v2565, 1
        %v2567 = vadd.f32 %v2565, %v2566
        %v2570 = vrot.slane %v2567, 7
        %v2571 = vsel %vm2254, %v2546, %v2570
        %v2573 = vadd.f32 %v2525, %v2571
        %2574 = vst.msk [vmem:[#allocation6] sm:$0x3] %vm2261, %v2573
        %p2575 = scmp.eq.s32.totalorder %s44, 1
        // Predicated region
        $region77: #{tpu_custom_call.1} parent=47 // pred_check
          %p2576 = pneg %p2575
        $region78: #{tpu_custom_call.1} parent=47 // pred_check_branch
          %2578 = sbr.rel (%p2576) target = $region80
        $region79: #{tpu_custom_call.1} parent=47 // pred_region
          %v2579 = vld [vmem:[%s557] sm:$0xff]
          %v2580 = vld [vmem:[%s557 + $0x8] sm:$0xff]
          %v2581 = vld [vmem:[%s557 + $0x10] sm:$0xff]
          %v2582 = vld [vmem:[%s557 + $0x18] sm:$0xff]
          %v2583 = vld [vmem:[%s557 + $0x20] sm:$0xff]
          %v2584 = vld [vmem:[%s557 + $0x28] sm:$0xff]
          %v2585 = vld [vmem:[%s557 + $0x30] sm:$0xff]
          %v2586 = vld [vmem:[%s557 + $0x38] sm:$0xff]
          %v2587 = vld [vmem:[%s557 + $0x40] sm:$0xff]
          %v2588 = vld [vmem:[%s557 + $0x48] sm:$0xff]
          %v2589 = vld [vmem:[%s557 + $0x50] sm:$0xff]
          %v2590 = vld [vmem:[%s557 + $0x58] sm:$0xff]
          %v2591 = vld [vmem:[%s557 + $0x60] sm:$0xff]
          %v2592 = vld [vmem:[%s557 + $0x68] sm:$0xff]
          %v2593 = vld [vmem:[%s557 + $0x70] sm:$0xff]
          %v2594 = vld [vmem:[%s557 + $0x78] sm:$0xff]
          %v2595 = vld [vmem:[#allocation15] sm:$0x1]
          %v2597 = vperm.slane %v2595, 0
          %v2599 = vadd.f32 %v2579, %v2597
          %v2600 = vadd.f32 %v2580, %v2597
          %v2601 = vadd.f32 %v2581, %v2597
          %v2602 = vadd.f32 %v2582, %v2597
          %v2603 = vadd.f32 %v2583, %v2597
          %v2604 = vadd.f32 %v2584, %v2597
          %v2605 = vadd.f32 %v2585, %v2597
          %v2606 = vadd.f32 %v2586, %v2597
          %v2607 = vadd.f32 %v2587, %v2597
          %v2608 = vadd.f32 %v2588, %v2597
          %v2609 = vadd.f32 %v2589, %v2597
          %v2610 = vadd.f32 %v2590, %v2597
          %v2611 = vadd.f32 %v2591, %v2597
          %v2612 = vadd.f32 %v2592, %v2597
          %v2613 = vadd.f32 %v2593, %v2597
          %v2614 = vadd.f32 %v2594, %v2597
          %2615 = vst [vmem:[%s557] sm:$0xff] %v2599
          %2616 = vst [vmem:[%s557 + $0x8] sm:$0xff] %v2600
          %2617 = vst [vmem:[%s557 + $0x10] sm:$0xff] %v2601
          %2618 = vst [vmem:[%s557 + $0x18] sm:$0xff] %v2602
          %2619 = vst [vmem:[%s557 + $0x20] sm:$0xff] %v2603
          %2620 = vst [vmem:[%s557 + $0x28] sm:$0xff] %v2604
          %2621 = vst [vmem:[%s557 + $0x30] sm:$0xff] %v2605
          %2622 = vst [vmem:[%s557 + $0x38] sm:$0xff] %v2606
          %2623 = vst [vmem:[%s557 + $0x40] sm:$0xff] %v2607
          %2624 = vst [vmem:[%s557 + $0x48] sm:$0xff] %v2608
          %2625 = vst [vmem:[%s557 + $0x50] sm:$0xff] %v2609
          %2626 = vst [vmem:[%s557 + $0x58] sm:$0xff] %v2610
          %2627 = vst [vmem:[%s557 + $0x60] sm:$0xff] %v2611
          %2628 = vst [vmem:[%s557 + $0x68] sm:$0xff] %v2612
          %2629 = vst [vmem:[%s557 + $0x70] sm:$0xff] %v2613
          %2630 = vst [vmem:[%s557 + $0x78] sm:$0xff] %v2614
          %v2631 = vld [vmem:[%s457] sm:$0xff]
          %v2632 = vld [vmem:[%s457 + $0x8] sm:$0xff]
          %v2633 = vld [vmem:[%s457 + $0x10] sm:$0xff]
          %v2634 = vld [vmem:[%s457 + $0x18] sm:$0xff]
          %v2635 = vld [vmem:[%s457 + $0x20] sm:$0xff]
          %v2636 = vld [vmem:[%s457 + $0x28] sm:$0xff]
          %v2637 = vld [vmem:[%s457 + $0x30] sm:$0xff]
          %v2638 = vld [vmem:[%s457 + $0x38] sm:$0xff]
          %v2639 = vld [vmem:[%s457 + $0x40] sm:$0xff]
          %v2640 = vld [vmem:[%s457 + $0x48] sm:$0xff]
          %v2641 = vld [vmem:[%s457 + $0x50] sm:$0xff]
          %v2642 = vld [vmem:[%s457 + $0x58] sm:$0xff]
          %v2643 = vld [vmem:[%s457 + $0x60] sm:$0xff]
          %v2644 = vld [vmem:[%s457 + $0x68] sm:$0xff]
          %v2645 = vld [vmem:[%s457 + $0x70] sm:$0xff]
          %v2646 = vld [vmem:[%s457 + $0x78] sm:$0xff]
          %2647 = vadd.xlane.f32.xlu0 %v2631
          %v2648 = vpop.xlane.xlu0 %2647
          %2649 = vadd.xlane.f32.xlu0 %v2632
          %v2650 = vpop.xlane.xlu0 %2649
          %2651 = vadd.xlane.f32.xlu0 %v2633
          %v2652 = vpop.xlane.xlu0 %2651
          %2653 = vadd.xlane.f32.xlu0 %v2634
          %v2654 = vpop.xlane.xlu0 %2653
          %2655 = vadd.xlane.f32.xlu0 %v2635
          %v2656 = vpop.xlane.xlu0 %2655
          %2657 = vadd.xlane.f32.xlu0 %v2636
          %v2658 = vpop.xlane.xlu0 %2657
          %2659 = vadd.xlane.f32.xlu0 %v2637
          %v2660 = vpop.xlane.xlu0 %2659
          %2661 = vadd.xlane.f32.xlu0 %v2638
          %v2662 = vpop.xlane.xlu0 %2661
          %2663 = vadd.xlane.f32.xlu0 %v2639
          %v2664 = vpop.xlane.xlu0 %2663
          %2665 = vadd.xlane.f32.xlu0 %v2640
          %v2666 = vpop.xlane.xlu0 %2665
          %2667 = vadd.xlane.f32.xlu0 %v2641
          %v2668 = vpop.xlane.xlu0 %2667
          %2669 = vadd.xlane.f32.xlu0 %v2642
          %v2670 = vpop.xlane.xlu0 %2669
          %2671 = vadd.xlane.f32.xlu0 %v2643
          %v2672 = vpop.xlane.xlu0 %2671
          %2673 = vadd.xlane.f32.xlu0 %v2644
          %v2674 = vpop.xlane.xlu0 %2673
          %2675 = vadd.xlane.f32.xlu0 %v2645
          %v2676 = vpop.xlane.xlu0 %2675
          %2677 = vadd.xlane.f32.xlu0 %v2646
          %v2678 = vpop.xlane.xlu0 %2677
          %v2679 = vrcp.pop 128.0
          %v2680 = vmul.f32 128.0, %v2679
          %v2681 = vsub.f32 1.0, %v2680
          %v2682 = vmul.f32 %v2679, %v2681
          %v2683 = vadd.f32 %v2679, %v2682
          %vm2684 = vweird.f32 %v2679
          %v2685 = vsel %vm2684, %v2679, %v2683
          %v2686 = vmul.f32 %v2648, %v2685
          %v2687 = vmul.f32 %v2650, %v2685
          %v2688 = vmul.f32 %v2652, %v2685
          %v2689 = vmul.f32 %v2654, %v2685
          %v2690 = vmul.f32 %v2656, %v2685
          %v2691 = vmul.f32 %v2658, %v2685
          %v2692 = vmul.f32 %v2660, %v2685
          %v2693 = vmul.f32 %v2662, %v2685
          %v2694 = vmul.f32 %v2664, %v2685
          %v2695 = vmul.f32 %v2666, %v2685
          %v2696 = vmul.f32 %v2668, %v2685
          %v2697 = vmul.f32 %v2670, %v2685
          %v2698 = vmul.f32 %v2672, %v2685
          %v2699 = vmul.f32 %v2674, %v2685
          %v2700 = vmul.f32 %v2676, %v2685
          %v2701 = vmul.f32 %v2678, %v2685
          %v2702 = vsub.f32 %v2631, %v2686
          %v2703 = vsub.f32 %v2632, %v2687
          %v2704 = vsub.f32 %v2633, %v2688
          %v2705 = vsub.f32 %v2634, %v2689
          %v2706 = vsub.f32 %v2635, %v2690
          %v2707 = vsub.f32 %v2636, %v2691
          %v2708 = vsub.f32 %v2637, %v2692
          %v2709 = vsub.f32 %v2638, %v2693
          %v2710 = vsub.f32 %v2639, %v2694
          %v2711 = vsub.f32 %v2640, %v2695
          %v2712 = vsub.f32 %v2641, %v2696
          %v2713 = vsub.f32 %v2642, %v2697
          %v2714 = vsub.f32 %v2643, %v2698
          %v2715 = vsub.f32 %v2644, %v2699
          %v2716 = vsub.f32 %v2645, %v2700
          %v2717 = vsub.f32 %v2646, %v2701
          %v2718 = vmul.f32 %v2702, %v2702
          %v2719 = vmul.f32 %v2703, %v2703
          %v2720 = vmul.f32 %v2704, %v2704
          %v2721 = vmul.f32 %v2705, %v2705
          %v2722 = vmul.f32 %v2706, %v2706
          %v2723 = vmul.f32 %v2707, %v2707
          %v2724 = vmul.f32 %v2708, %v2708
          %v2725 = vmul.f32 %v2709, %v2709
          %v2726 = vmul.f32 %v2710, %v2710
          %v2727 = vmul.f32 %v2711, %v2711
          %v2728 = vmul.f32 %v2712, %v2712
          %v2729 = vmul.f32 %v2713, %v2713
          %v2730 = vmul.f32 %v2714, %v2714
          %v2731 = vmul.f32 %v2715, %v2715
          %v2732 = vmul.f32 %v2716, %v2716
          %v2733 = vmul.f32 %v2717, %v2717
          %2734 = vadd.xlane.f32.xlu0 %v2718
          %v2735 = vpop.xlane.xlu0 %2734
          %2736 = vadd.xlane.f32.xlu0 %v2719
          %v2737 = vpop.xlane.xlu0 %2736
          %2738 = vadd.xlane.f32.xlu0 %v2720
          %v2739 = vpop.xlane.xlu0 %2738
          %2740 = vadd.xlane.f32.xlu0 %v2721
          %v2741 = vpop.xlane.xlu0 %2740
          %2742 = vadd.xlane.f32.xlu0 %v2722
          %v2743 = vpop.xlane.xlu0 %2742
          %2744 = vadd.xlane.f32.xlu0 %v2723
          %v2745 = vpop.xlane.xlu0 %2744
          %2746 = vadd.xlane.f32.xlu0 %v2724
          %v2747 = vpop.xlane.xlu0 %2746
          %2748 = vadd.xlane.f32.xlu0 %v2725
          %v2749 = vpop.xlane.xlu0 %2748
          %2750 = vadd.xlane.f32.xlu0 %v2726
          %v2751 = vpop.xlane.xlu0 %2750
          %2752 = vadd.xlane.f32.xlu0 %v2727
          %v2753 = vpop.xlane.xlu0 %2752
          %2754 = vadd.xlane.f32.xlu0 %v2728
          %v2755 = vpop.xlane.xlu0 %2754
          %2756 = vadd.xlane.f32.xlu0 %v2729
          %v2757 = vpop.xlane.xlu0 %2756
          %2758 = vadd.xlane.f32.xlu0 %v2730
          %v2759 = vpop.xlane.xlu0 %2758
          %2760 = vadd.xlane.f32.xlu0 %v2731
          %v2761 = vpop.xlane.xlu0 %2760
          %2762 = vadd.xlane.f32.xlu0 %v2732
          %v2763 = vpop.xlane.xlu0 %2762
          %2764 = vadd.xlane.f32.xlu0 %v2733
          %v2765 = vpop.xlane.xlu0 %2764
          %v2766 = vrcp.pop 127.0
          %v2767 = vmul.f32 127.0, %v2766
          %v2768 = vsub.f32 1.0, %v2767
          %v2769 = vmul.f32 %v2766, %v2768
          %v2770 = vadd.f32 %v2766, %v2769
          %vm2771 = vweird.f32 %v2766
          %v2772 = vsel %vm2771, %v2766, %v2770
          %v2773 = vmul.f32 %v2735, %v2772
          %v2774 = vmul.f32 %v2737, %v2772
          %v2775 = vmul.f32 %v2739, %v2772
          %v2776 = vmul.f32 %v2741, %v2772
          %v2777 = vmul.f32 %v2743, %v2772
          %v2778 = vmul.f32 %v2745, %v2772
          %v2779 = vmul.f32 %v2747, %v2772
          %v2780 = vmul.f32 %v2749, %v2772
          %v2781 = vmul.f32 %v2751, %v2772
          %v2782 = vmul.f32 %v2753, %v2772
          %v2783 = vmul.f32 %v2755, %v2772
          %v2784 = vmul.f32 %v2757, %v2772
          %v2785 = vmul.f32 %v2759, %v2772
          %v2786 = vmul.f32 %v2761, %v2772
          %v2787 = vmul.f32 %v2763, %v2772
          %v2788 = vmul.f32 %v2765, %v2772
          %v2789 = vrsqrt.pop %v2773
          %v2790 = vmul.f32 %v2789, %v2773
          %v2791 = vmul.f32 %v2790, %v2789
          %v2792 = vmul.f32 0.5, %v2791
          %v2793 = vsub.f32 1.5, %v2792
          %v2794 = vmul.f32 %v2789, %v2793
          %v2795 = vmul.f32 %v2773, %v2794
          %vm2796 = vcmp.eq.f32.partialorder %v2773, inf
          %v2797 = vsel %vm2796, %v2773, %v2795
          %vm2798 = vcmp.eq.f32.partialorder %v2773, 0.0
          %v2799 = vand.u32 %v2773, 2147483648
          %v2800 = vsel %vm2798, %v2799, %v2797
          %v2801 = vrsqrt.pop %v2774
          %v2802 = vmul.f32 %v2801, %v2774
          %v2803 = vmul.f32 %v2802, %v2801
          %v2804 = vmul.f32 0.5, %v2803
          %v2805 = vsub.f32 1.5, %v2804
          %v2806 = vmul.f32 %v2801, %v2805
          %v2807 = vmul.f32 %v2774, %v2806
          %vm2808 = vcmp.eq.f32.partialorder %v2774, inf
          %v2809 = vsel %vm2808, %v2774, %v2807
          %vm2810 = vcmp.eq.f32.partialorder %v2774, 0.0
          %v2811 = vand.u32 %v2774, 2147483648
          %v2812 = vsel %vm2810, %v2811, %v2809
          %v2813 = vrsqrt.pop %v2775
          %v2814 = vmul.f32 %v2813, %v2775
          %v2815 = vmul.f32 %v2814, %v2813
          %v2816 = vmul.f32 0.5, %v2815
          %v2817 = vsub.f32 1.5, %v2816
          %v2818 = vmul.f32 %v2813, %v2817
          %v2819 = vmul.f32 %v2775, %v2818
          %vm2820 = vcmp.eq.f32.partialorder %v2775, inf
          %v2821 = vsel %vm2820, %v2775, %v2819
          %vm2822 = vcmp.eq.f32.partialorder %v2775, 0.0
          %v2823 = vand.u32 %v2775, 2147483648
          %v2824 = vsel %vm2822, %v2823, %v2821
          %v2825 = vrsqrt.pop %v2776
          %v2826 = vmul.f32 %v2825, %v2776
          %v2827 = vmul.f32 %v2826, %v2825
          %v2828 = vmul.f32 0.5, %v2827
          %v2829 = vsub.f32 1.5, %v2828
          %v2830 = vmul.f32 %v2825, %v2829
          %v2831 = vmul.f32 %v2776, %v2830
          %vm2832 = vcmp.eq.f32.partialorder %v2776, inf
          %v2833 = vsel %vm2832, %v2776, %v2831
          %vm2834 = vcmp.eq.f32.partialorder %v2776, 0.0
          %v2835 = vand.u32 %v2776, 2147483648
          %v2836 = vsel %vm2834, %v2835, %v2833
          %v2837 = vrsqrt.pop %v2777
          %v2838 = vmul.f32 %v2837, %v2777
          %v2839 = vmul.f32 %v2838, %v2837
          %v2840 = vmul.f32 0.5, %v2839
          %v2841 = vsub.f32 1.5, %v2840
          %v2842 = vmul.f32 %v2837, %v2841
          %v2843 = vmul.f32 %v2777, %v2842
          %vm2844 = vcmp.eq.f32.partialorder %v2777, inf
          %v2845 = vsel %vm2844, %v2777, %v2843
          %vm2846 = vcmp.eq.f32.partialorder %v2777, 0.0
          %v2847 = vand.u32 %v2777, 2147483648
          %v2848 = vsel %vm2846, %v2847, %v2845
          %v2849 = vrsqrt.pop %v2778
          %v2850 = vmul.f32 %v2849, %v2778
          %v2851 = vmul.f32 %v2850, %v2849
          %v2852 = vmul.f32 0.5, %v2851
          %v2853 = vsub.f32 1.5, %v2852
          %v2854 = vmul.f32 %v2849, %v2853
          %v2855 = vmul.f32 %v2778, %v2854
          %vm2856 = vcmp.eq.f32.partialorder %v2778, inf
          %v2857 = vsel %vm2856, %v2778, %v2855
          %vm2858 = vcmp.eq.f32.partialorder %v2778, 0.0
          %v2859 = vand.u32 %v2778, 2147483648
          %v2860 = vsel %vm2858, %v2859, %v2857
          %v2861 = vrsqrt.pop %v2779
          %v2862 = vmul.f32 %v2861, %v2779
          %v2863 = vmul.f32 %v2862, %v2861
          %v2864 = vmul.f32 0.5, %v2863
          %v2865 = vsub.f32 1.5, %v2864
          %v2866 = vmul.f32 %v2861, %v2865
          %v2867 = vmul.f32 %v2779, %v2866
          %vm2868 = vcmp.eq.f32.partialorder %v2779, inf
          %v2869 = vsel %vm2868, %v2779, %v2867
          %vm2870 = vcmp.eq.f32.partialorder %v2779, 0.0
          %v2871 = vand.u32 %v2779, 2147483648
          %v2872 = vsel %vm2870, %v2871, %v2869
          %v2873 = vrsqrt.pop %v2780
          %v2874 = vmul.f32 %v2873, %v2780
          %v2875 = vmul.f32 %v2874, %v2873
          %v2876 = vmul.f32 0.5, %v2875
          %v2877 = vsub.f32 1.5, %v2876
          %v2878 = vmul.f32 %v2873, %v2877
          %v2879 = vmul.f32 %v2780, %v2878
          %vm2880 = vcmp.eq.f32.partialorder %v2780, inf
          %v2881 = vsel %vm2880, %v2780, %v2879
          %vm2882 = vcmp.eq.f32.partialorder %v2780, 0.0
          %v2883 = vand.u32 %v2780, 2147483648
          %v2884 = vsel %vm2882, %v2883, %v2881
          %v2885 = vrsqrt.pop %v2781
          %v2886 = vmul.f32 %v2885, %v2781
          %v2887 = vmul.f32 %v2886, %v2885
          %v2888 = vmul.f32 0.5, %v2887
          %v2889 = vsub.f32 1.5, %v2888
          %v2890 = vmul.f32 %v2885, %v2889
          %v2891 = vmul.f32 %v2781, %v2890
          %vm2892 = vcmp.eq.f32.partialorder %v2781, inf
          %v2893 = vsel %vm2892, %v2781, %v2891
          %vm2894 = vcmp.eq.f32.partialorder %v2781, 0.0
          %v2895 = vand.u32 %v2781, 2147483648
          %v2896 = vsel %vm2894, %v2895, %v2893
          %v2897 = vrsqrt.pop %v2782
          %v2898 = vmul.f32 %v2897, %v2782
          %v2899 = vmul.f32 %v2898, %v2897
          %v2900 = vmul.f32 0.5, %v2899
          %v2901 = vsub.f32 1.5, %v2900
          %v2902 = vmul.f32 %v2897, %v2901
          %v2903 = vmul.f32 %v2782, %v2902
          %vm2904 = vcmp.eq.f32.partialorder %v2782, inf
          %v2905 = vsel %vm2904, %v2782, %v2903
          %vm2906 = vcmp.eq.f32.partialorder %v2782, 0.0
          %v2907 = vand.u32 %v2782, 2147483648
          %v2908 = vsel %vm2906, %v2907, %v2905
          %v2909 = vrsqrt.pop %v2783
          %v2910 = vmul.f32 %v2909, %v2783
          %v2911 = vmul.f32 %v2910, %v2909
          %v2912 = vmul.f32 0.5, %v2911
          %v2913 = vsub.f32 1.5, %v2912
          %v2914 = vmul.f32 %v2909, %v2913
          %v2915 = vmul.f32 %v2783, %v2914
          %vm2916 = vcmp.eq.f32.partialorder %v2783, inf
          %v2917 = vsel %vm2916, %v2783, %v2915
          %vm2918 = vcmp.eq.f32.partialorder %v2783, 0.0
          %v2919 = vand.u32 %v2783, 2147483648
          %v2920 = vsel %vm2918, %v2919, %v2917
          %v2921 = vrsqrt.pop %v2784
          %v2922 = vmul.f32 %v2921, %v2784
          %v2923 = vmul.f32 %v2922, %v2921
          %v2924 = vmul.f32 0.5, %v2923
          %v2925 = vsub.f32 1.5, %v2924
          %v2926 = vmul.f32 %v2921, %v2925
          %v2927 = vmul.f32 %v2784, %v2926
          %vm2928 = vcmp.eq.f32.partialorder %v2784, inf
          %v2929 = vsel %vm2928, %v2784, %v2927
          %vm2930 = vcmp.eq.f32.partialorder %v2784, 0.0
          %v2931 = vand.u32 %v2784, 2147483648
          %v2932 = vsel %vm2930, %v2931, %v2929
          %v2933 = vrsqrt.pop %v2785
          %v2934 = vmul.f32 %v2933, %v2785
          %v2935 = vmul.f32 %v2934, %v2933
          %v2936 = vmul.f32 0.5, %v2935
          %v2937 = vsub.f32 1.5, %v2936
          %v2938 = vmul.f32 %v2933, %v2937
          %v2939 = vmul.f32 %v2785, %v2938
          %vm2940 = vcmp.eq.f32.partialorder %v2785, inf
          %v2941 = vsel %vm2940, %v2785, %v2939
          %vm2942 = vcmp.eq.f32.partialorder %v2785, 0.0
          %v2943 = vand.u32 %v2785, 2147483648
          %v2944 = vsel %vm2942, %v2943, %v2941
          %v2945 = vrsqrt.pop %v2786
          %v2946 = vmul.f32 %v2945, %v2786
          %v2947 = vmul.f32 %v2946, %v2945
          %v2948 = vmul.f32 0.5, %v2947
          %v2949 = vsub.f32 1.5, %v2948
          %v2950 = vmul.f32 %v2945, %v2949
          %v2951 = vmul.f32 %v2786, %v2950
          %vm2952 = vcmp.eq.f32.partialorder %v2786, inf
          %v2953 = vsel %vm2952, %v2786, %v2951
          %vm2954 = vcmp.eq.f32.partialorder %v2786, 0.0
          %v2955 = vand.u32 %v2786, 2147483648
          %v2956 = vsel %vm2954, %v2955, %v2953
          %v2957 = vrsqrt.pop %v2787
          %v2958 = vmul.f32 %v2957, %v2787
          %v2959 = vmul.f32 %v2958, %v2957
          %v2960 = vmul.f32 0.5, %v2959
          %v2961 = vsub.f32 1.5, %v2960
          %v2962 = vmul.f32 %v2957, %v2961
          %v2963 = vmul.f32 %v2787, %v2962
          %vm2964 = vcmp.eq.f32.partialorder %v2787, inf
          %v2965 = vsel %vm2964, %v2787, %v2963
          %vm2966 = vcmp.eq.f32.partialorder %v2787, 0.0
          %v2967 = vand.u32 %v2787, 2147483648
          %v2968 = vsel %vm2966, %v2967, %v2965
          %v2969 = vrsqrt.pop %v2788
          %v2970 = vmul.f32 %v2969, %v2788
          %v2971 = vmul.f32 %v2970, %v2969
          %v2972 = vmul.f32 0.5, %v2971
          %v2973 = vsub.f32 1.5, %v2972
          %v2974 = vmul.f32 %v2969, %v2973
          %v2975 = vmul.f32 %v2788, %v2974
          %vm2976 = vcmp.eq.f32.partialorder %v2788, inf
          %v2977 = vsel %vm2976, %v2788, %v2975
          %vm2978 = vcmp.eq.f32.partialorder %v2788, 0.0
          %v2979 = vand.u32 %v2788, 2147483648
          %v2980 = vsel %vm2978, %v2979, %v2977
          %v2981 = vadd.f32 %v2800, 1e-05
          %v2982 = vadd.f32 %v2812, 1e-05
          %v2983 = vadd.f32 %v2824, 1e-05
          %v2984 = vadd.f32 %v2836, 1e-05
          %v2985 = vadd.f32 %v2848, 1e-05
          %v2986 = vadd.f32 %v2860, 1e-05
          %v2987 = vadd.f32 %v2872, 1e-05
          %v2988 = vadd.f32 %v2884, 1e-05
          %v2989 = vadd.f32 %v2896, 1e-05
          %v2990 = vadd.f32 %v2908, 1e-05
          %v2991 = vadd.f32 %v2920, 1e-05
          %v2992 = vadd.f32 %v2932, 1e-05
          %v2993 = vadd.f32 %v2944, 1e-05
          %v2994 = vadd.f32 %v2956, 1e-05
          %v2995 = vadd.f32 %v2968, 1e-05
          %v2996 = vadd.f32 %v2980, 1e-05
          %v2997 = vrcp.pop %v2981
          %v2998 = vmul.f32 %v2981, %v2997
          %v2999 = vsub.f32 1.0, %v2998
          %v3000 = vmul.f32 %v2997, %v2999
          %v3001 = vadd.f32 %v2997, %v3000
          %vm3002 = vweird.f32 %v2981
          %vm3003 = vweird.f32 %v2997
          %vm3004 = vmor %vm3002, %vm3003
          %v3005 = vsel %vm3004, %v2997, %v3001
          %v3006 = vand.u32 2147483647, %v2981
          %vm3007 = vcmp.eq.f32.partialorder %v3006, 8.507059e+37
          %v3008 = vand.u32 %v2981, 2147483648
          %v3009 = vor.u32 1.1754944e-38, %v3008
          %v3010 = vsel %vm3007, %v3009, %v3005
          %v3011 = vmul.f32 %v2702, %v3010
          %v3012 = vrcp.pop %v2982
          %v3013 = vmul.f32 %v2982, %v3012
          %v3014 = vsub.f32 1.0, %v3013
          %v3015 = vmul.f32 %v3012, %v3014
          %v3016 = vadd.f32 %v3012, %v3015
          %vm3017 = vweird.f32 %v2982
          %vm3018 = vweird.f32 %v3012
          %vm3019 = vmor %vm3017, %vm3018
          %v3020 = vsel %vm3019, %v3012, %v3016
          %v3021 = vand.u32 2147483647, %v2982
          %vm3022 = vcmp.eq.f32.partialorder %v3021, 8.507059e+37
          %v3023 = vand.u32 %v2982, 2147483648
          %v3024 = vor.u32 1.1754944e-38, %v3023
          %v3025 = vsel %vm3022, %v3024, %v3020
          %v3026 = vmul.f32 %v2703, %v3025
          %v3027 = vrcp.pop %v2983
          %v3028 = vmul.f32 %v2983, %v3027
          %v3029 = vsub.f32 1.0, %v3028
          %v3030 = vmul.f32 %v3027, %v3029
          %v3031 = vadd.f32 %v3027, %v3030
          %vm3032 = vweird.f32 %v2983
          %vm3033 = vweird.f32 %v3027
          %vm3034 = vmor %vm3032, %vm3033
          %v3035 = vsel %vm3034, %v3027, %v3031
          %v3036 = vand.u32 2147483647, %v2983
          %vm3037 = vcmp.eq.f32.partialorder %v3036, 8.507059e+37
          %v3038 = vand.u32 %v2983, 2147483648
          %v3039 = vor.u32 1.1754944e-38, %v3038
          %v3040 = vsel %vm3037, %v3039, %v3035
          %v3041 = vmul.f32 %v2704, %v3040
          %v3042 = vrcp.pop %v2984
          %v3043 = vmul.f32 %v2984, %v3042
          %v3044 = vsub.f32 1.0, %v3043
          %v3045 = vmul.f32 %v3042, %v3044
          %v3046 = vadd.f32 %v3042, %v3045
          %vm3047 = vweird.f32 %v2984
          %vm3048 = vweird.f32 %v3042
          %vm3049 = vmor %vm3047, %vm3048
          %v3050 = vsel %vm3049, %v3042, %v3046
          %v3051 = vand.u32 2147483647, %v2984
          %vm3052 = vcmp.eq.f32.partialorder %v3051, 8.507059e+37
          %v3053 = vand.u32 %v2984, 2147483648
          %v3054 = vor.u32 1.1754944e-38, %v3053
          %v3055 = vsel %vm3052, %v3054, %v3050
          %v3056 = vmul.f32 %v2705, %v3055
          %v3057 = vrcp.pop %v2985
          %v3058 = vmul.f32 %v2985, %v3057
          %v3059 = vsub.f32 1.0, %v3058
          %v3060 = vmul.f32 %v3057, %v3059
          %v3061 = vadd.f32 %v3057, %v3060
          %vm3062 = vweird.f32 %v2985
          %vm3063 = vweird.f32 %v3057
          %vm3064 = vmor %vm3062, %vm3063
          %v3065 = vsel %vm3064, %v3057, %v3061
          %v3066 = vand.u32 2147483647, %v2985
          %vm3067 = vcmp.eq.f32.partialorder %v3066, 8.507059e+37
          %v3068 = vand.u32 %v2985, 2147483648
          %v3069 = vor.u32 1.1754944e-38, %v3068
          %v3070 = vsel %vm3067, %v3069, %v3065
          %v3071 = vmul.f32 %v2706, %v3070
          %v3072 = vrcp.pop %v2986
          %v3073 = vmul.f32 %v2986, %v3072
          %v3074 = vsub.f32 1.0, %v3073
          %v3075 = vmul.f32 %v3072, %v3074
          %v3076 = vadd.f32 %v3072, %v3075
          %vm3077 = vweird.f32 %v2986
          %vm3078 = vweird.f32 %v3072
          %vm3079 = vmor %vm3077, %vm3078
          %v3080 = vsel %vm3079, %v3072, %v3076
          %v3081 = vand.u32 2147483647, %v2986
          %vm3082 = vcmp.eq.f32.partialorder %v3081, 8.507059e+37
          %v3083 = vand.u32 %v2986, 2147483648
          %v3084 = vor.u32 1.1754944e-38, %v3083
          %v3085 = vsel %vm3082, %v3084, %v3080
          %v3086 = vmul.f32 %v2707, %v3085
          %v3087 = vrcp.pop %v2987
          %v3088 = vmul.f32 %v2987, %v3087
          %v3089 = vsub.f32 1.0, %v3088
          %v3090 = vmul.f32 %v3087, %v3089
          %v3091 = vadd.f32 %v3087, %v3090
          %vm3092 = vweird.f32 %v2987
          %vm3093 = vweird.f32 %v3087
          %vm3094 = vmor %vm3092, %vm3093
          %v3095 = vsel %vm3094, %v3087, %v3091
          %v3096 = vand.u32 2147483647, %v2987
          %vm3097 = vcmp.eq.f32.partialorder %v3096, 8.507059e+37
          %v3098 = vand.u32 %v2987, 2147483648
          %v3099 = vor.u32 1.1754944e-38, %v3098
          %v3100 = vsel %vm3097, %v3099, %v3095
          %v3101 = vmul.f32 %v2708, %v3100
          %v3102 = vrcp.pop %v2988
          %v3103 = vmul.f32 %v2988, %v3102
          %v3104 = vsub.f32 1.0, %v3103
          %v3105 = vmul.f32 %v3102, %v3104
          %v3106 = vadd.f32 %v3102, %v3105
          %vm3107 = vweird.f32 %v2988
          %vm3108 = vweird.f32 %v3102
          %vm3109 = vmor %vm3107, %vm3108
          %v3110 = vsel %vm3109, %v3102, %v3106
          %v3111 = vand.u32 2147483647, %v2988
          %vm3112 = vcmp.eq.f32.partialorder %v3111, 8.507059e+37
          %v3113 = vand.u32 %v2988, 2147483648
          %v3114 = vor.u32 1.1754944e-38, %v3113
          %v3115 = vsel %vm3112, %v3114, %v3110
          %v3116 = vmul.f32 %v2709, %v3115
          %v3117 = vrcp.pop %v2989
          %v3118 = vmul.f32 %v2989, %v3117
          %v3119 = vsub.f32 1.0, %v3118
          %v3120 = vmul.f32 %v3117, %v3119
          %v3121 = vadd.f32 %v3117, %v3120
          %vm3122 = vweird.f32 %v2989
          %vm3123 = vweird.f32 %v3117
          %vm3124 = vmor %vm3122, %vm3123
          %v3125 = vsel %vm3124, %v3117, %v3121
          %v3126 = vand.u32 2147483647, %v2989
          %vm3127 = vcmp.eq.f32.partialorder %v3126, 8.507059e+37
          %v3128 = vand.u32 %v2989, 2147483648
          %v3129 = vor.u32 1.1754944e-38, %v3128
          %v3130 = vsel %vm3127, %v3129, %v3125
          %v3131 = vmul.f32 %v2710, %v3130
          %v3132 = vrcp.pop %v2990
          %v3133 = vmul.f32 %v2990, %v3132
          %v3134 = vsub.f32 1.0, %v3133
          %v3135 = vmul.f32 %v3132, %v3134
          %v3136 = vadd.f32 %v3132, %v3135
          %vm3137 = vweird.f32 %v2990
          %vm3138 = vweird.f32 %v3132
          %vm3139 = vmor %vm3137, %vm3138
          %v3140 = vsel %vm3139, %v3132, %v3136
          %v3141 = vand.u32 2147483647, %v2990
          %vm3142 = vcmp.eq.f32.partialorder %v3141, 8.507059e+37
          %v3143 = vand.u32 %v2990, 2147483648
          %v3144 = vor.u32 1.1754944e-38, %v3143
          %v3145 = vsel %vm3142, %v3144, %v3140
          %v3146 = vmul.f32 %v2711, %v3145
          %v3147 = vrcp.pop %v2991
          %v3148 = vmul.f32 %v2991, %v3147
          %v3149 = vsub.f32 1.0, %v3148
          %v3150 = vmul.f32 %v3147, %v3149
          %v3151 = vadd.f32 %v3147, %v3150
          %vm3152 = vweird.f32 %v2991
          %vm3153 = vweird.f32 %v3147
          %vm3154 = vmor %vm3152, %vm3153
          %v3155 = vsel %vm3154, %v3147, %v3151
          %v3156 = vand.u32 2147483647, %v2991
          %vm3157 = vcmp.eq.f32.partialorder %v3156, 8.507059e+37
          %v3158 = vand.u32 %v2991, 2147483648
          %v3159 = vor.u32 1.1754944e-38, %v3158
          %v3160 = vsel %vm3157, %v3159, %v3155
          %v3161 = vmul.f32 %v2712, %v3160
          %v3162 = vrcp.pop %v2992
          %v3163 = vmul.f32 %v2992, %v3162
          %v3164 = vsub.f32 1.0, %v3163
          %v3165 = vmul.f32 %v3162, %v3164
          %v3166 = vadd.f32 %v3162, %v3165
          %vm3167 = vweird.f32 %v2992
          %vm3168 = vweird.f32 %v3162
          %vm3169 = vmor %vm3167, %vm3168
          %v3170 = vsel %vm3169, %v3162, %v3166
          %v3171 = vand.u32 2147483647, %v2992
          %vm3172 = vcmp.eq.f32.partialorder %v3171, 8.507059e+37
          %v3173 = vand.u32 %v2992, 2147483648
          %v3174 = vor.u32 1.1754944e-38, %v3173
          %v3175 = vsel %vm3172, %v3174, %v3170
          %v3176 = vmul.f32 %v2713, %v3175
          %v3177 = vrcp.pop %v2993
          %v3178 = vmul.f32 %v2993, %v3177
          %v3179 = vsub.f32 1.0, %v3178
          %v3180 = vmul.f32 %v3177, %v3179
          %v3181 = vadd.f32 %v3177, %v3180
          %vm3182 = vweird.f32 %v2993
          %vm3183 = vweird.f32 %v3177
          %vm3184 = vmor %vm3182, %vm3183
          %v3185 = vsel %vm3184, %v3177, %v3181
          %v3186 = vand.u32 2147483647, %v2993
          %vm3187 = vcmp.eq.f32.partialorder %v3186, 8.507059e+37
          %v3188 = vand.u32 %v2993, 2147483648
          %v3189 = vor.u32 1.1754944e-38, %v3188
          %v3190 = vsel %vm3187, %v3189, %v3185
          %v3191 = vmul.f32 %v2714, %v3190
          %v3192 = vrcp.pop %v2994
          %v3193 = vmul.f32 %v2994, %v3192
          %v3194 = vsub.f32 1.0, %v3193
          %v3195 = vmul.f32 %v3192, %v3194
          %v3196 = vadd.f32 %v3192, %v3195
          %vm3197 = vweird.f32 %v2994
          %vm3198 = vweird.f32 %v3192
          %vm3199 = vmor %vm3197, %vm3198
          %v3200 = vsel %vm3199, %v3192, %v3196
          %v3201 = vand.u32 2147483647, %v2994
          %vm3202 = vcmp.eq.f32.partialorder %v3201, 8.507059e+37
          %v3203 = vand.u32 %v2994, 2147483648
          %v3204 = vor.u32 1.1754944e-38, %v3203
          %v3205 = vsel %vm3202, %v3204, %v3200
          %v3206 = vmul.f32 %v2715, %v3205
          %v3207 = vrcp.pop %v2995
          %v3208 = vmul.f32 %v2995, %v3207
          %v3209 = vsub.f32 1.0, %v3208
          %v3210 = vmul.f32 %v3207, %v3209
          %v3211 = vadd.f32 %v3207, %v3210
          %vm3212 = vweird.f32 %v2995
          %vm3213 = vweird.f32 %v3207
          %vm3214 = vmor %vm3212, %vm3213
          %v3215 = vsel %vm3214, %v3207, %v3211
          %v3216 = vand.u32 2147483647, %v2995
          %vm3217 = vcmp.eq.f32.partialorder %v3216, 8.507059e+37
          %v3218 = vand.u32 %v2995, 2147483648
          %v3219 = vor.u32 1.1754944e-38, %v3218
          %v3220 = vsel %vm3217, %v3219, %v3215
          %v3221 = vmul.f32 %v2716, %v3220
          %v3222 = vrcp.pop %v2996
          %v3223 = vmul.f32 %v2996, %v3222
          %v3224 = vsub.f32 1.0, %v3223
          %v3225 = vmul.f32 %v3222, %v3224
          %v3226 = vadd.f32 %v3222, %v3225
          %vm3227 = vweird.f32 %v2996
          %vm3228 = vweird.f32 %v3222
          %vm3229 = vmor %vm3227, %vm3228
          %v3230 = vsel %vm3229, %v3222, %v3226
          %v3231 = vand.u32 2147483647, %v2996
          %vm3232 = vcmp.eq.f32.partialorder %v3231, 8.507059e+37
          %v3233 = vand.u32 %v2996, 2147483648
          %v3234 = vor.u32 1.1754944e-38, %v3233
          %v3235 = vsel %vm3232, %v3234, %v3230
          %v3236 = vmul.f32 %v2717, %v3235
          %v3237 = vcvt.s32.f32 %v1624
          %v3238 = vcvt.s32.f32 %v1625
          %v3239 = vcvt.s32.f32 %v1626
          %v3240 = vcvt.s32.f32 %v1627
          %v3241 = vcvt.s32.f32 %v1628
          %v3242 = vcvt.s32.f32 %v1629
          %v3243 = vcvt.s32.f32 %v1630
          %v3244 = vcvt.s32.f32 %v1631
          %v3245 = vcvt.s32.f32 %v1632
          %v3246 = vcvt.s32.f32 %v1633
          %v3247 = vcvt.s32.f32 %v1634
          %v3248 = vcvt.s32.f32 %v1635
          %v3249 = vcvt.s32.f32 %v1636
          %v3250 = vcvt.s32.f32 %v1637
          %v3251 = vcvt.s32.f32 %v1638
          %v3252 = vcvt.s32.f32 %v1639
          %v3253 = vsub.f32 %v2599, %v3011
          %v3254 = vsub.f32 %v2600, %v3026
          %v3255 = vsub.f32 %v2601, %v3041
          %v3256 = vsub.f32 %v2602, %v3056
          %v3257 = vsub.f32 %v2603, %v3071
          %v3258 = vsub.f32 %v2604, %v3086
          %v3259 = vsub.f32 %v2605, %v3101
          %v3260 = vsub.f32 %v2606, %v3116
          %v3261 = vsub.f32 %v2607, %v3131
          %v3262 = vsub.f32 %v2608, %v3146
          %v3263 = vsub.f32 %v2609, %v3161
          %v3264 = vsub.f32 %v2610, %v3176
          %v3265 = vsub.f32 %v2611, %v3191
          %v3266 = vsub.f32 %v2612, %v3206
          %v3267 = vsub.f32 %v2613, %v3221
          %v3268 = vsub.f32 %v2614, %v3236
          %v3269 = vmul.f32 %v3253, %v3237
          %v3270 = vmul.f32 %v3254, %v3238
          %v3271 = vmul.f32 %v3255, %v3239
          %v3272 = vmul.f32 %v3256, %v3240
          %v3273 = vmul.f32 %v3257, %v3241
          %v3274 = vmul.f32 %v3258, %v3242
          %v3275 = vmul.f32 %v3259, %v3243
          %v3276 = vmul.f32 %v3260, %v3244
          %v3277 = vmul.f32 %v3261, %v3245
          %v3278 = vmul.f32 %v3262, %v3246
          %v3279 = vmul.f32 %v3263, %v3247
          %v3280 = vmul.f32 %v3264, %v3248
          %v3281 = vmul.f32 %v3265, %v3249
          %v3282 = vmul.f32 %v3266, %v3250
          %v3283 = vmul.f32 %v3267, %v3251
          %v3284 = vmul.f32 %v3268, %v3252
          %v3285 = vmul.f32 %v3269, %v3269
          %v3286 = vmul.f32 %v3270, %v3270
          %v3287 = vmul.f32 %v3271, %v3271
          %v3288 = vmul.f32 %v3272, %v3272
          %v3289 = vmul.f32 %v3273, %v3273
          %v3290 = vmul.f32 %v3274, %v3274
          %v3291 = vmul.f32 %v3275, %v3275
          %v3292 = vmul.f32 %v3276, %v3276
          %v3293 = vmul.f32 %v3277, %v3277
          %v3294 = vmul.f32 %v3278, %v3278
          %v3295 = vmul.f32 %v3279, %v3279
          %v3296 = vmul.f32 %v3280, %v3280
          %v3297 = vmul.f32 %v3281, %v3281
          %v3298 = vmul.f32 %v3282, %v3282
          %v3299 = vmul.f32 %v3283, %v3283
          %v3300 = vmul.f32 %v3284, %v3284
          %v3301 = vadd.f32 %v3285, %v3286
          %v3302 = vadd.f32 %v3301, %v3287
          %v3303 = vadd.f32 %v3302, %v3288
          %v3304 = vadd.f32 %v3303, %v3289
          %v3305 = vadd.f32 %v3304, %v3290
          %v3306 = vadd.f32 %v3305, %v3291
          %v3307 = vadd.f32 %v3306, %v3292
          %v3308 = vadd.f32 %v3307, %v3293
          %v3309 = vadd.f32 %v3308, %v3294
          %v3310 = vadd.f32 %v3309, %v3295
          %v3311 = vadd.f32 %v3310, %v3296
          %v3312 = vadd.f32 %v3311, %v3297
          %v3313 = vadd.f32 %v3312, %v3298
          %v3314 = vadd.f32 %v3313, %v3299
          %v3315 = vadd.f32 %v3314, %v3300
          %3316 = vadd.xlane.f32.xlu0 %v3315
          %v3317 = vpop.xlane.xlu0 %3316
          %v3318 = vrot.slane %v3317, 4
          %v3319 = vadd.f32 %v3317, %v3318
          %v3320 = vrot.slane %v3319, 2
          %v3321 = vadd.f32 %v3319, %v3320
          %v3322 = vrot.slane %v3321, 1
          %v3323 = vadd.f32 %v3321, %v3322
          %s3324 = vtos %v3323
          %v3325 = vmul.f32 %v3011, %v3237
          %v3326 = vmul.f32 %v3026, %v3238
          %v3327 = vmul.f32 %v3041, %v3239
          %v3328 = vmul.f32 %v3056, %v3240
          %v3329 = vmul.f32 %v3071, %v3241
          %v3330 = vmul.f32 %v3086, %v3242
          %v3331 = vmul.f32 %v3101, %v3243
          %v3332 = vmul.f32 %v3116, %v3244
          %v3333 = vmul.f32 %v3131, %v3245
          %v3334 = vmul.f32 %v3146, %v3246
          %v3335 = vmul.f32 %v3161, %v3247
          %v3336 = vmul.f32 %v3176, %v3248
          %v3337 = vmul.f32 %v3191, %v3249
          %v3338 = vmul.f32 %v3206, %v3250
          %v3339 = vmul.f32 %v3221, %v3251
          %v3340 = vmul.f32 %v3236, %v3252
          %v3341 = vmul.f32 %v3325, %v3325
          %v3342 = vmul.f32 %v3326, %v3326
          %v3343 = vmul.f32 %v3327, %v3327
          %v3344 = vmul.f32 %v3328, %v3328
          %v3345 = vmul.f32 %v3329, %v3329
          %v3346 = vmul.f32 %v3330, %v3330
          %v3347 = vmul.f32 %v3331, %v3331
          %v3348 = vmul.f32 %v3332, %v3332
          %v3349 = vmul.f32 %v3333, %v3333
          %v3350 = vmul.f32 %v3334, %v3334
          %v3351 = vmul.f32 %v3335, %v3335
          %v3352 = vmul.f32 %v3336, %v3336
          %v3353 = vmul.f32 %v3337, %v3337
          %v3354 = vmul.f32 %v3338, %v3338
          %v3355 = vmul.f32 %v3339, %v3339
          %v3356 = vmul.f32 %v3340, %v3340
          %v3357 = vadd.f32 %v3341, %v3342
          %v3358 = vadd.f32 %v3357, %v3343
          %v3359 = vadd.f32 %v3358, %v3344
          %v3360 = vadd.f32 %v3359, %v3345
          %v3361 = vadd.f32 %v3360, %v3346
          %v3362 = vadd.f32 %v3361, %v3347
          %v3363 = vadd.f32 %v3362, %v3348
          %v3364 = vadd.f32 %v3363, %v3349
          %v3365 = vadd.f32 %v3364, %v3350
          %v3366 = vadd.f32 %v3365, %v3351
          %v3367 = vadd.f32 %v3366, %v3352
          %v3368 = vadd.f32 %v3367, %v3353
          %v3369 = vadd.f32 %v3368, %v3354
          %v3370 = vadd.f32 %v3369, %v3355
          %v3371 = vadd.f32 %v3370, %v3356
          %3372 = vadd.xlane.f32.xlu0 %v3371
          %v3373 = vpop.xlane.xlu0 %3372
          %v3374 = vrot.slane %v3373, 4
          %v3375 = vadd.f32 %v3373, %v3374
          %v3376 = vrot.slane %v3375, 2
          %v3377 = vadd.f32 %v3375, %v3376
          %v3378 = vrot.slane %v3377, 1
          %v3379 = vadd.f32 %v3377, %v3378
          %s3380 = vtos %v3379
          %v3381 = vlaneseq
          %v3382 = vand.u32 %v3381, 127
          %v3383 = vld [vmem:[#allocation3] sm:$0x3]
          %v3385 = vperm.slane %v3383, 0
          %v3386 = vperm.slane %v3383, 1
          %v3389 = vsel %vm2254, %v3385, 0.0
          %v3390 = vsel %vm2254, %v3386, 0.0
          %v3391 = vadd.f32 %v3389, %v3390
          %3392 = vadd.xlane.f32.xlu0 %v3391
          %v3393 = vpop.xlane.xlu0 %3392
          %v3394 = vrot.slane %v3393, 4
          %v3395 = vadd.f32 %v3393, %v3394
          %v3396 = vrot.slane %v3395, 2
          %v3397 = vadd.f32 %v3395, %v3396
          %v3398 = vrot.slane %v3397, 1
          %v3399 = vadd.f32 %v3397, %v3398
          %s3400 = vtos %v3399
          %v3401 = vld [vmem:[#allocation4] sm:$0x3]
          %v3403 = vperm.slane %v3401, 0
          %v3404 = vperm.slane %v3401, 1
          %v3407 = vsel %vm2254, %v3403, 0.0
          %v3408 = vsel %vm2254, %v3404, 0.0
          %v3409 = vadd.f32 %v3407, %v3408
          %3410 = vadd.xlane.f32.xlu0 %v3409
          %v3411 = vpop.xlane.xlu0 %3410
          %v3412 = vrot.slane %v3411, 4
          %v3413 = vadd.f32 %v3411, %v3412
          %v3414 = vrot.slane %v3413, 2
          %v3415 = vadd.f32 %v3413, %v3414
          %v3416 = vrot.slane %v3415, 1
          %v3417 = vadd.f32 %v3415, %v3416
          %s3418 = vtos %v3417
          %v3419 = vld [vmem:[#allocation5] sm:$0x3]
          %v3421 = vperm.slane %v3419, 0
          %v3422 = vperm.slane %v3419, 1
          %v3425 = vsel %vm2254, %v3421, 0.0
          %v3426 = vsel %vm2254, %v3422, 0.0
          %v3427 = vadd.f32 %v3425, %v3426
          %3428 = vadd.xlane.f32.xlu0 %v3427
          %v3429 = vpop.xlane.xlu0 %3428
          %v3430 = vrot.slane %v3429, 4
          %v3431 = vadd.f32 %v3429, %v3430
          %v3432 = vrot.slane %v3431, 2
          %v3433 = vadd.f32 %v3431, %v3432
          %v3434 = vrot.slane %v3433, 1
          %v3435 = vadd.f32 %v3433, %v3434
          %s3436 = vtos %v3435
          %v3437 = vld [vmem:[#allocation6] sm:$0x3]
          %v3439 = vperm.slane %v3437, 0
          %v3440 = vperm.slane %v3437, 1
          %v3443 = vsel %vm2254, %v3439, 0.0
          %v3444 = vsel %vm2254, %v3440, 0.0
          %v3445 = vadd.f32 %v3443, %v3444
          %3446 = vadd.xlane.f32.xlu0 %v3445
          %v3447 = vpop.xlane.xlu0 %3446
          %v3448 = vrot.slane %v3447, 4
          %v3449 = vadd.f32 %v3447, %v3448
          %v3450 = vrot.slane %v3449, 2
          %v3451 = vadd.f32 %v3449, %v3450
          %v3452 = vrot.slane %v3451, 1
          %v3453 = vadd.f32 %v3451, %v3452
          %s3454 = vtos %v3453
          %vm3455 = vcmp.eq.s32.totalorder %v3382, 0
          %v3456 = vstv %s3324
          %v3457 = vsel %vm3455, %v3456, 0.0
          %vm3458 = vcmp.eq.s32.totalorder %v3382, 1
          %v3459 = vstv %s3380
          %v3460 = vsel %vm3458, %v3459, %v3457
          %vm3461 = vcmp.eq.s32.totalorder %v3382, 2
          %v3462 = vstv %s3400
          %v3463 = vsel %vm3461, %v3462, %v3460
          %vm3464 = vcmp.eq.s32.totalorder %v3382, 3
          %v3465 = vstv %s3418
          %v3466 = vsel %vm3464, %v3465, %v3463
          %vm3467 = vcmp.eq.s32.totalorder %v3382, 4
          %v3468 = vstv %s3436
          %v3469 = vsel %vm3467, %v3468, %v3466
          %vm3470 = vcmp.eq.s32.totalorder %v3382, 5
          %v3471 = vstv %s3454
          %v3472 = vsel %vm3470, %v3471, %v3469
          %3473 = vst [vmem:[%s571] sm:$0xff] %v3472
        $region80: #{tpu_custom_call.1} parent=47 // pred_fallthru
          _
        %s3474 = sand.u32 %s236, 1
        %s3475 = scalar_lea.sflag [#allocation9], %s3474
        %s3476 = sand.u32 %s236, 1
        %s3477 = smul.addr %s3476, 128
        %s3478 = scalar_lea.vmem [#allocation18], %s3477
        %s3479 = sand.u32 %s39, 1
        %s3480 = scalar_lea.sflag [#allocation20], %s3479
        %s3481 = sand.u32 %s264, 1
        %s3482 = smul.addr %s3481, 128
        %s3483 = scalar_lea.vmem [#allocation19], %s3482
        %s3484 = sand.u32 %s39, 1
        %s3485 = scalar_lea.sflag [#allocation20], %s3484
        %s3486 = sand.u32 %s290, 1
        %s3487 = smul.addr %s3486, 8
        %s3488 = scalar_lea.vmem [#allocation21], %s3487
        // Predicated region
        $region81: #{tpu_custom_call.1} parent=47 // pred_check
          %p3489 = pneg %p246
        $region82: #{tpu_custom_call.1} parent=47 // pred_check_branch
          %3491 = sbr.rel (%p3489) target = $region84
        $region83: #{tpu_custom_call.1} parent=47 // pred_region
          %s3492 = smul.u32 16, %s43
          %3494 = vsyncadd %s3475, 0
          %s3495 = smul.addr %s3492, 8
          %s3496 = scalar_lea.hbm %s7, %s3495
          %s3497 = sshll.u32 %s3478, 4
          %s3498 = int_to_ptr.vmem [resolvable:$true] %s3497
          %s3499 = sshll.u32 %s3496, 4
          %s3500 = int_to_ptr.hbm [resolvable:$true] %s3499
          %3505 = dma.vmem_to_hbm [thread:$0]  %s3498, 2048, %s3500, %s3475, 128, 128, 8
        $region84: #{tpu_custom_call.1} parent=47 // pred_fallthru
          _
        // Predicated region
        $region85: #{tpu_custom_call.1} parent=47 // pred_check
          %p3506 = pneg %p274
        $region86: #{tpu_custom_call.1} parent=47 // pred_check_branch
          %3508 = sbr.rel (%p3506) target = $region88
        $region87: #{tpu_custom_call.1} parent=47 // pred_region
          %s3509 = smul.u32 16, %s43
          %s3510 = smul.u32 2, %s44
          %3512 = vsyncadd %s3480, 0
          %s3513 = smul.addr %s3509, 4
          %s3514 = sadd.s32 %s3510, %s3513
          %s3515 = smul.addr %s3514, 4
          %s3516 = scalar_lea.hbm %s8, %s3515
          %s3517 = sshll.u32 %s3483, 4
          %s3518 = int_to_ptr.vmem [resolvable:$true] %s3517
          %s3519 = sshll.u32 %s3516, 4
          %s3520 = int_to_ptr.hbm [resolvable:$true] %s3519
          %3525 = dma.vmem_to_hbm [thread:$0]  %s3518, 2048, %s3520, %s3480, 128, 256, 8
        $region88: #{tpu_custom_call.1} parent=47 // pred_fallthru
          _
        // Predicated region
        $region89: #{tpu_custom_call.1} parent=47 // pred_check
          %p3526 = pneg %p300
        $region90: #{tpu_custom_call.1} parent=47 // pred_check_branch
          %3528 = sbr.rel (%p3526) target = $region92
        $region91: #{tpu_custom_call.1} parent=47 // pred_region
          %3530 = vsyncadd %s3485, 0
          %s3531 = smul.addr %s43, 8
          %s3532 = scalar_lea.hbm %s9, %s3531
          %s3534 = sshll.u32 %s3488, 4
          %s3535 = int_to_ptr.vmem [resolvable:$true] %s3534
          %s3536 = sshll.u32 %s3532, 4
          %s3537 = int_to_ptr.hbm [resolvable:$true] %s3536
          %3539 = dma.vmem_to_hbm [thread:$0]  %s3535, 128, %s3537, %s3485
        $region92: #{tpu_custom_call.1} parent=47 // pred_fallthru
          _
      $region48: #{tpu_custom_call.1} parent=5 // pred_fallthru
        _
      %p3540 = scmp.le.s32.totalorder 2, %s34
      // Predicated region
      $region93: #{tpu_custom_call.1} parent=5 // pred_check
        %p3541 = pneg %p3540
      $region94: #{tpu_custom_call.1} parent=5 // pred_check_branch
        %3543 = sbr.rel (%p3541) target = $region96
      $region95: #{tpu_custom_call.1} parent=5 // pred_region
        %s3544 = ssub.s32 %s34, 2
        // Predicated region
        $region97: #{tpu_custom_call.1} parent=95 // pred_check
          %p3545 = pneg %p252
        $region98: #{tpu_custom_call.1} parent=95 // pred_check_branch
          %3547 = sbr.rel (%p3545) target = $region100
        $region99: #{tpu_custom_call.1} parent=95 // pred_region
          %s3548 = sand.u32 %s237, 1
          %s3549 = scalar_lea.sflag [#allocation9], %s3548
          %s3550 = sand.u32 %s237, 1
          %s3551 = smul.addr %s3550, 128
          %s3552 = scalar_lea.vmem [#allocation18], %s3551
          %3554 = dma.done %s3549, 2048
        $region100: #{tpu_custom_call.1} parent=95 // pred_fallthru
          _
        // Predicated region
        $region101: #{tpu_custom_call.1} parent=95 // pred_check
          %p3555 = pneg %p280
        $region102: #{tpu_custom_call.1} parent=95 // pred_check_branch
          %3557 = sbr.rel (%p3555) target = $region104
        $region103: #{tpu_custom_call.1} parent=95 // pred_region
          %s3558 = sand.u32 %s40, 1
          %s3559 = scalar_lea.sflag [#allocation20], %s3558
          %s3560 = sand.u32 %s265, 1
          %s3561 = smul.addr %s3560, 128
          %s3562 = scalar_lea.vmem [#allocation19], %s3561
          %3564 = dma.done %s3559, 2048
        $region104: #{tpu_custom_call.1} parent=95 // pred_fallthru
          _
        // Predicated region
        $region105: #{tpu_custom_call.1} parent=95 // pred_check
          %p3565 = pneg %p306
        $region106: #{tpu_custom_call.1} parent=95 // pred_check_branch
          %3567 = sbr.rel (%p3565) target = $region108
        $region107: #{tpu_custom_call.1} parent=95 // pred_region
          %s3568 = sand.u32 %s40, 1
          %s3569 = scalar_lea.sflag [#allocation20], %s3568
          %s3570 = sand.u32 %s291, 1
          %s3571 = smul.addr %s3570, 8
          %s3572 = scalar_lea.vmem [#allocation21], %s3571
          %3574 = dma.done %s3569, 128
        $region108: #{tpu_custom_call.1} parent=95 // pred_fallthru
          _
      $region96: #{tpu_custom_call.1} parent=5 // pred_fallthru
        _
    $region6: #{tpu_custom_call.1} parent=1 // loop_footer
      %s38 = sadd.s32 1, %s34
    $region7: #{tpu_custom_call.1} parent=1 // loop_footer_branch
      %33 = sbr.rel target = $region3
    $region8: #{tpu_custom_call.1} parent=1 // loop_exit
      _
    %3575 = vsyncpa [#allocation8], 1
    %s3576 = scalar_lea.sflag [#allocation8], 1
    %3577 = vsyncpa %s3576, 1
    %3578 = vsyncpa [#allocation11], 1
    %s3579 = scalar_lea.sflag [#allocation11], 1
    %3580 = vsyncpa %s3579, 1
    %3581 = vsyncpa [#allocation14], 1
    %s3582 = scalar_lea.sflag [#allocation14], 1
    %3583 = vsyncpa %s3582, 1
    %3584 = vsyncpa [#allocation17], 1
    %s3585 = scalar_lea.sflag [#allocation17], 1
    %3586 = vsyncpa %s3585, 1
    %3587 = vsyncpa [#allocation9], 1
    %s3588 = scalar_lea.sflag [#allocation9], 1
    %3589 = vsyncpa %s3588, 1
    %3590 = vsyncpa [#allocation20], 1
    %s3591 = scalar_lea.sflag [#allocation20], 1
    %3592 = vsyncpa %s3591, 1

</llo_original>
